<compile_context>
chip_gen: v7x
topology: tpu7x:2x2x1
jax: 0.10.0
libtpu: 0.0.40
codegen_flags: <defaults>
</compile_context>

<pallas_src>
import math
from functools import partial

import numpy as np
import jax
import jax.numpy as jnp
from jax.experimental import pallas as pl
from jax.experimental.pallas import tpu as pltpu

LN_EPS = 1e-12


# ------------------------------ fused kernel --------------------------------

def _fused_submodal_kernel(x_ref, pe_ref, wqkv_ref, bqkv_ref, wo_ref, bo_ref,
                           g_ref, beta_ref, pw_ref, pb_ref,
                           pooled_ref, h_ref,
                           *, num_heads, compute_dtype, approx_recip, fast_layout):
    """grid = (B // Bt, n_blocks); h_ref is the resident (Bt,S,H) f32 activation."""
    l = pl.program_id(1)
    n_blocks = pl.num_programs(1)
    Bt, S, H = h_ref.shape
    nh = num_heads
    hd = H // nh
    cdt = compute_dtype                 # MXU operand dtype; accumulation is always f32

    # -- block 0 only: load this batch tile and add the positional encoding -------
    @pl.when(l == 0)
    def _init():
        h_ref[...] = (x_ref[...].astype(jnp.float32)
                      + pe_ref[...].astype(jnp.float32)[None])

    x3 = h_ref[...]                                   # (Bt, S, H) f32
    x2 = x3.reshape(Bt * S, H)                        # MXU rows = Bt*S

    # -- fused QKV projection: one (Bt*S,H) x (H,3H) matmul ------------------------
    qkv = (jnp.dot(x2.astype(cdt), wqkv_ref[0].astype(cdt),
                   preferred_element_type=jnp.float32)
           + bqkv_ref[0].astype(jnp.float32))         # (Bt*S, 3H) f32

    # -- head split / merge ---------------------------------------------------------
    if fast_layout:
        # single relayout per tensor (reshape + middle-dim transpose)
        def split(off):
            t = qkv[:, off:off + H].reshape(Bt, S, nh, hd)
            return t.transpose(0, 2, 1, 3).reshape(Bt * nh, S, hd)

        def merge(ctx):                               # (Bt*nh, S, hd) -> (Bt*S, H)
            return ctx.reshape(Bt, nh, S, hd).transpose(0, 2, 1, 3).reshape(Bt * S, H)
    else:
        # portable fallback: per-head lane slices (previously validated lowering)
        def split(off):
            return jnp.concatenate(
                [qkv[:, off + h * hd: off + (h + 1) * hd].reshape(Bt, S, hd)
                 for h in range(nh)], axis=0)         # head-major (nh*Bt, S, hd)

        def merge(ctx):
            return jnp.concatenate(
                [ctx[h * Bt:(h + 1) * Bt].reshape(Bt * S, hd) for h in range(nh)],
                axis=-1)

    q = split(0)
    k = split(H)
    v = split(2 * H)                                  # each (Bt*nh, S, hd)

    # -- batched scaled-dot-product attention (Bt*nh is the MXU batch dim) ----------
    # TODO(synk): produce K pre-transposed to (.., hd, S) inside split() and tile the
    # KV axis flash-style for long S (required before realistic shapes on v7x).
    scale = 1.0 / math.sqrt(hd)
    s = jnp.einsum('bqd,bkd->bqk', q.astype(cdt), k.astype(cdt),
                   preferred_element_type=jnp.float32) * scale
    s = s - jnp.max(s, axis=-1, keepdims=True)
    p = jnp.exp(s)
    denom = jnp.sum(p, axis=-1, keepdims=True)
    # approx reciprocal only on the bf16 path (extra approximation vs torch softmax,
    # covered by the bf16 tolerance); the f32 path stays exact.
    probs = p * pl.reciprocal(denom, approx=approx_recip)
    ctx = jnp.einsum('bqk,bkd->bqd', probs.astype(cdt), v.astype(cdt),
                     preferred_element_type=jnp.float32)
    ctx2 = merge(ctx)                                 # (Bt*S, H) f32

    # -- BertSelfOutput-style: dense + residual + LayerNorm --------------------------
    y = (jnp.dot(ctx2.astype(cdt), wo_ref[0].astype(cdt),
                 preferred_element_type=jnp.float32)
         + bo_ref[0].astype(jnp.float32))
    y = y + x2
    mean = jnp.mean(y, axis=-1, keepdims=True)
    var = jnp.mean(jnp.square(y - mean), axis=-1, keepdims=True)
    y = (y - mean) * jax.lax.rsqrt(var + LN_EPS)
    y = y * g_ref[0].astype(jnp.float32) + beta_ref[0].astype(jnp.float32)
    y3 = y.reshape(Bt, S, H)
    h_ref[...] = y3                                   # stays resident for block l+1

    # -- last block: fused BertPooler tail on the first-token rows -------------------
    @pl.when(l == n_blocks - 1)
    def _pool():
        h0 = y3[:, 0:1, :].reshape(Bt, H)             # first token of each batch row
        pooled = (jnp.dot(h0.astype(cdt), pw_ref[...].astype(cdt),
                          preferred_element_type=jnp.float32)
                  + pb_ref[...].astype(jnp.float32))
        pooled_ref[...] = jnp.tanh(pooled).reshape(Bt, 1, H).astype(pooled_ref.dtype)


# -------------------------------- wrapper -------------------------------------

def _pick_block_batch(B, S, target_rows=256):
    """Largest divisor Bt of B with Bt*S <= target MXU rows, preferring B//Bt >= 2
    (so v7x's two TensorCores both get outer-grid work)."""
    divs = [d for d in range(1, B + 1) if B % d == 0]
    fits = [d for d in divs if d * S <= max(target_rows, S)] or [1]
    pref = [d for d in fits if B // d >= 2]
    return max(pref) if pref else max(fits)


def _vmem_limit_bytes(Bt, S, H, nh, w_bytes, x_bytes):
    f32 = 4
    weight_stream = 2 * w_bytes * (3 * H * H + H * H + 8 * H)   # double-buffered per-block weights
    consts = f32 * S * H + w_bytes * (H * H + H)                # pe + pooler (single-buffered)
    act_io = 2 * (Bt * S * H * x_bytes + Bt * H * f32)          # x-in / pooled-out blocks
    scratch = Bt * S * H * f32                                  # resident activation
    interm = f32 * (12 * Bt * S * H + 3 * Bt * nh * S * S)      # qkv/q/k/v/ctx/y + scores/exp/probs
    est = weight_stream + consts + act_io + scratch + interm
    return int(min(max(2 * est, 32 << 20), 112 << 20))


def submodal_physi_forward(x, params, *, compute_dtype=None, block_batch=None):
    """compute_dtype: MXU operand dtype (default bf16, f32 accumulation);
    block_batch: batch rows fused into one kernel invocation (default auto)."""
    B, S, H = x.shape
    nh = params['num_heads']
    assert H % nh == 0, (H, nh)                       # fail loudly on a bad head config
    hd = H // nh
    assert nh * hd == H
    n_blocks = params['wqkv'].shape[0]
    assert params['pe'].shape[0] >= S and params['pe'].shape[1] == H
    pe = params['pe'][:S].astype(jnp.float32)         # (S,H); no (B,S,H) broadcast in HBM

    cdt = jnp.bfloat16 if compute_dtype is None else compute_dtype
    approx_recip = bool(np.dtype(cdt) == np.dtype(jnp.bfloat16))

    Bt = _pick_block_batch(B, S) if block_batch is None else block_batch
    assert B % Bt == 0, (B, Bt)

    # Narrow the large weight operands to the compute dtype host-side so the per-block
    # HBM weight stream shrinks along with the MXU operand width.
    def narrow(t):
        return t.astype(cdt) if np.dtype(cdt).itemsize < np.dtype(t.dtype).itemsize else t
    wqkv, wo, pw = narrow(params['wqkv']), narrow(params['wo']), narrow(params['pooler_w'])

    vmem_limit = _vmem_limit_bytes(Bt, S, H, nh,
                                   np.dtype(wqkv.dtype).itemsize,
                                   np.dtype(x.dtype).itemsize)

    def run(fast_layout, single_buffer_consts):
        kernel = partial(_fused_submodal_kernel,
                         num_heads=nh, compute_dtype=cdt,
                         approx_recip=approx_recip, fast_layout=fast_layout)
        stacked = lambda *shape: pl.BlockSpec((1,) + shape, lambda b, l: (l, 0, 0))
        if single_buffer_consts:
            # constant-index operands: DMA'd once -> single VMEM buffer
            const = lambda *shape: pl.BlockSpec(shape, lambda b, l: (0, 0),
                                                pipeline_mode=pl.Buffered(1))
        else:
            const = lambda *shape: pl.BlockSpec(shape, lambda b, l: (0, 0))
        return pl.pallas_call(
            kernel,
            out_shape=jax.ShapeDtypeStruct((B, 1, H), jnp.float32),
            grid=(B // Bt, n_blocks),
            in_specs=[
                pl.BlockSpec((Bt, S, H), lambda b, l: (b, 0, 0)),  # x: resident over l
                const(S, H),                                       # positional encoding
                stacked(H, 3 * H),                                 # fused QKV weight (streamed)
                stacked(1, 3 * H),                                 # fused QKV bias
                stacked(H, H),                                     # output proj weight
                stacked(1, H),                                     # output proj bias
                stacked(1, H),                                     # LayerNorm gamma
                stacked(1, H),                                     # LayerNorm beta
                const(H, H),                                       # pooler weight
                const(1, H),                                       # pooler bias
            ],
            out_specs=pl.BlockSpec((Bt, 1, H), lambda b, l: (b, 0, 0)),
            scratch_shapes=[pltpu.VMEM((Bt, S, H), jnp.float32)],
            compiler_params=pltpu.CompilerParams(
                dimension_semantics=("parallel", "arbitrary"),
                vmem_limit_bytes=vmem_limit),
        )(x, pe, wqkv, params['bqkv'], wo, params['bo'],
          params['ln_g'], params['ln_b'], pw, params['pooler_b'])

    try:
        pooled = jax.block_until_ready(run(True, True))
    except Exception:
        # Portable fallback for Pallas/Mosaic builds that reject the fused
        # reshape/transpose head relayout or pl.Buffered(1) single-buffering.
        pooled = run(False, False)
    return pooled[:, 0, :]


# ------------------------- parameters / reference ------------------------------

def sinusoidal_pe(max_len, d_model):
    pos = jnp.arange(max_len, dtype=jnp.float32)[:, None]
    div = jnp.exp(jnp.arange(0, d_model, 2, dtype=jnp.float32)
                  * (-math.log(10000.0) / d_model))
    pe = jnp.zeros((max_len, d_model), jnp.float32)
    pe = pe.at[:, 0::2].set(jnp.sin(pos * div))
    pe = pe.at[:, 1::2].set(jnp.cos(pos * div))
    return pe


def init_params(key, *, hidden, n_blocks, num_heads, max_len, dtype=jnp.float32):
    def dense(k, shape):
        return (0.02 * jax.random.normal(k, shape, dtype=jnp.float32)).astype(dtype)

    wqkv_l, bqkv_l, wo_l, bo_l, g_l, beta_l = [], [], [], [], [], []
    for i in range(n_blocks):
        ks = jax.random.split(jax.random.fold_in(key, i), 8)
        wq, bq = dense(ks[0], (hidden, hidden)), dense(ks[1], (1, hidden))
        wk, bk = dense(ks[2], (hidden, hidden)), dense(ks[3], (1, hidden))
        wv, bv = dense(ks[4], (hidden, hidden)), dense(ks[5], (1, hidden))
        wqkv_l.append(jnp.concatenate([wq, wk, wv], axis=1))
        bqkv_l.append(jnp.concatenate([bq, bk, bv], axis=1))
        wo_l.append(dense(ks[6], (hidden, hidden)))
        bo_l.append(dense(ks[7], (1, hidden)))
        g_l.append(jnp.ones((1, hidden), dtype))
        beta_l.append(jnp.zeros((1, hidden), dtype))
    kp = jax.random.split(jax.random.fold_in(key, 1000), 2)
    return dict(
        pe=sinusoidal_pe(max_len, hidden),           # kept f32
        wqkv=jnp.stack(wqkv_l), bqkv=jnp.stack(bqkv_l),
        wo=jnp.stack(wo_l), bo=jnp.stack(bo_l),
        ln_g=jnp.stack(g_l), ln_b=jnp.stack(beta_l),
        pooler_w=dense(kp[0], (hidden, hidden)),
        pooler_b=dense(kp[1], (1, hidden)),
        num_heads=num_heads,
    )


def reference_forward(x, params):
    """Pure-JAX f32 reference mirroring the PyTorch forward."""
    B, S, H = x.shape
    nh = params['num_heads']
    hd = H // nh
    f32 = lambda t: t.astype(jnp.float32)
    h = f32(x) + params['pe'][:S][None]
    for l in range(params['wqkv'].shape[0]):
        qkv = h @ f32(params['wqkv'][l]) + f32(params['bqkv'][l])
        q, k, v = qkv[..., :H], qkv[..., H:2 * H], qkv[..., 2 * H:]
        split = lambda t: t.reshape(B, S, nh, hd).transpose(0, 2, 1, 3)
        qh, kh, vh = split(q), split(k), split(v)
        s = jnp.einsum('bhqd,bhkd->bhqk', qh, kh) / math.sqrt(hd)
        p = jax.nn.softmax(s, axis=-1)
        ctx = jnp.einsum('bhqk,bhkd->bhqd', p, vh).transpose(0, 2, 1, 3).reshape(B, S, H)
        y = ctx @ f32(params['wo'][l]) + f32(params['bo'][l]) + h
        mean = y.mean(-1, keepdims=True)
        var = ((y - mean) ** 2).mean(-1, keepdims=True)
        y = (y - mean) / jnp.sqrt(var + LN_EPS)
        h = y * f32(params['ln_g'][l]) + f32(params['ln_b'][l])
    return jnp.tanh(h[:, 0, :] @ f32(params['pooler_w']) + f32(params['pooler_b']))


# ---------------------------------- main ---------------------------------------

if __name__ == "__main__":
    # NOTE: demo shapes are correctness-only (H=32 uses 25% of the 128 lanes);
    # benchmark with H a multiple of 128 and S >= 128 for meaningful numbers.
    B, S, H, NUM_HEADS, N_BLOCKS = 2, 8, 32, 4, 2
    key = jax.random.PRNGKey(0)
    x2b = jax.random.normal(jax.random.fold_in(key, 77), (B, S, H), dtype=jnp.float32)
    x4b = jax.random.normal(jax.random.fold_in(key, 78), (4, S, H), dtype=jnp.float32)

    params = init_params(key, hidden=H, n_blocks=N_BLOCKS, num_heads=NUM_HEADS,
                         max_len=64, dtype=jnp.float32)

    # 1) f32 weights, f32 MXU operands: tight check.  B=2 -> Bt=1, outer grid = 2.
    out = jax.block_until_ready(
        submodal_physi_forward(x2b, params, compute_dtype=jnp.float32))
    ref = reference_forward(x2b, params)
    assert out.shape == (B, H), out.shape
    assert jnp.allclose(out, ref, atol=1e-4, rtol=1e-4), \
        float(jnp.max(jnp.abs(out - ref)))

    # 2) B=4 -> Bt=2: two batch rows fused into the MXU M-dim, still tight check.
    out4 = jax.block_until_ready(
        submodal_physi_forward(x4b, params, compute_dtype=jnp.float32))
    ref4 = reference_forward(x4b, params)
    assert out4.shape == (4, H), out4.shape
    assert jnp.allclose(out4, ref4, atol=1e-4, rtol=1e-4), \
        float(jnp.max(jnp.abs(out4 - ref4)))

    # 3) Compute-dtype knob: f32-stored weights, default bf16 MXU operands.
    out_c = jax.block_until_ready(submodal_physi_forward(x4b, params))
    assert jnp.allclose(out_c, ref4, atol=5e-2, rtol=5e-2), \
        float(jnp.max(jnp.abs(out_c - ref4)))

    # 4) bf16-stored weights / bf16 activations (f32 accumulation & statistics).
    params_bf16 = init_params(key, hidden=H, n_blocks=N_BLOCKS, num_heads=NUM_HEADS,
                              max_len=64, dtype=jnp.bfloat16)
    out_bf = jax.block_until_ready(
        submodal_physi_forward(x4b.astype(jnp.bfloat16), params_bf16))
    ref_bf = reference_forward(x4b.astype(jnp.bfloat16), params_bf16)
    assert out_bf.shape == (4, H), out_bf.shape
    assert jnp.allclose(out_bf, ref_bf, atol=5e-2, rtol=5e-2), \
        float(jnp.max(jnp.abs(out_bf - ref_bf)))

    print("KERNEL_OK")
</pallas_src>

<mosaic_0001>
module attributes {stable_mosaic.version = 11 : i64} {
  func.func @_fused_submodal_kernel(%arg0: i32, %arg1: i32, %arg2: memref<1x8x32xf32, #tpu.memory_space<vmem>>, %arg3: memref<8x32xf32, #tpu.memory_space<vmem>>, %arg4: memref<1x32x96xf32, #tpu.memory_space<vmem>>, %arg5: memref<1x1x96xf32, #tpu.memory_space<vmem>>, %arg6: memref<1x32x32xf32, #tpu.memory_space<vmem>>, %arg7: memref<1x1x32xf32, #tpu.memory_space<vmem>>, %arg8: memref<1x1x32xf32, #tpu.memory_space<vmem>>, %arg9: memref<1x1x32xf32, #tpu.memory_space<vmem>>, %arg10: memref<32x32xf32, #tpu.memory_space<vmem>>, %arg11: memref<1x32xf32, #tpu.memory_space<vmem>>, %arg12: memref<1x1x32xf32, #tpu.memory_space<vmem>>, %arg13: memref<1x8x32xf32, #tpu.memory_space<vmem>>) attributes {dimension_semantics = [#tpu.dimension_semantics<parallel>, #tpu.dimension_semantics<arbitrary>], iteration_bounds = array<i64: 2, 2>, scalar_prefetch = 0 : i64, scratch_operands = 1 : i64, tpu.core_type = #tpu.core_type<tc>, window_params = [{transform_indices = @transform_0, window_bounds = array<i64: 1, 8, 32>}, {pipeline_mode = #tpu.pipeline_mode<synchronous>, transform_indices = @transform_1, window_bounds = array<i64: 8, 32>}, {transform_indices = @transform_2, window_bounds = array<i64: 1, 32, 96>}, {transform_indices = @transform_3, window_bounds = array<i64: 1, 1, 96>}, {transform_indices = @transform_4, window_bounds = array<i64: 1, 32, 32>}, {transform_indices = @transform_5, window_bounds = array<i64: 1, 1, 32>}, {transform_indices = @transform_6, window_bounds = array<i64: 1, 1, 32>}, {transform_indices = @transform_7, window_bounds = array<i64: 1, 1, 32>}, {pipeline_mode = #tpu.pipeline_mode<synchronous>, transform_indices = @transform_8, window_bounds = array<i64: 32, 32>}, {pipeline_mode = #tpu.pipeline_mode<synchronous>, transform_indices = @transform_9, window_bounds = array<i64: 1, 32>}, {transform_indices = @transform_10, window_bounds = array<i64: 1, 1, 32>}]} {
    %c0_i32 = arith.constant 0 : i32
    %0 = arith.cmpi eq, %arg1, %c0_i32 : i32
    %1 = arith.extui %0 : i1 to i32
    %c0_i32_0 = arith.constant 0 : i32
    %2 = arith.cmpi ne, %1, %c0_i32_0 : i32
    scf.if %2 {
      %c0_36 = arith.constant 0 : index
      %c0_37 = arith.constant 0 : index
      %c0_38 = arith.constant 0 : index
      %80 = vector.load %arg2[%c0_36, %c0_37, %c0_38] : memref<1x8x32xf32, #tpu.memory_space<vmem>>, vector<1x8x32xf32>
      %c0_39 = arith.constant 0 : index
      %c0_40 = arith.constant 0 : index
      %81 = vector.load %arg3[%c0_39, %c0_40] : memref<8x32xf32, #tpu.memory_space<vmem>>, vector<8x32xf32>
      %82 = vector.shape_cast %81 : vector<8x32xf32> to vector<1x8x32xf32>
      %83 = arith.addf %80, %82 : vector<1x8x32xf32>
      %c0_41 = arith.constant 0 : index
      %c0_42 = arith.constant 0 : index
      %c0_43 = arith.constant 0 : index
      %84 = vector.load %arg13[%c0_41, %c0_42, %c0_43] : memref<1x8x32xf32, #tpu.memory_space<vmem>>, vector<1x8x32xf32>
      tpu.vector_store %arg13[%c0_41, %c0_42, %c0_43], %83 {strides = array<i32>} : memref<1x8x32xf32, #tpu.memory_space<vmem>>, vector<1x8x32xf32>,
    } else {
    }
    %c0 = arith.constant 0 : index
    %c0_1 = arith.constant 0 : index
    %c0_2 = arith.constant 0 : index
    %3 = vector.load %arg13[%c0, %c0_1, %c0_2] : memref<1x8x32xf32, #tpu.memory_space<vmem>>, vector<1x8x32xf32>
    %4 = vector.shape_cast %3 : vector<1x8x32xf32> to vector<8x32xf32>
    %c0_3 = arith.constant 0 : index
    %c0_4 = arith.constant 0 : index
    %c0_5 = arith.constant 0 : index
    %5 = vector.load %arg4[%c0_3, %c0_4, %c0_5] : memref<1x32x96xf32, #tpu.memory_space<vmem>>, vector<1x32x96xf32>
    %6 = vector.shape_cast %5 : vector<1x32x96xf32> to vector<32x96xf32>
    %cst = arith.constant dense<0.000000e+00> : vector<8x96xf32>
    %7 = tpu.matmul %4, %6, %cst {dimension_numbers = #tpu.dot_dimension_numbers<[1], [0], [0], [1], [0, 0, 1, 1], [], []>} : vector<8x32xf32>, vector<32x96xf32>, vector<8x96xf32> -> vector<8x96xf32>
    %c0_6 = arith.constant 0 : index
    %c0_7 = arith.constant 0 : index
    %c0_8 = arith.constant 0 : index
    %8 = vector.load %arg5[%c0_6, %c0_7, %c0_8] : memref<1x1x96xf32, #tpu.memory_space<vmem>>, vector<1x1x96xf32>
    %9 = vector.shape_cast %8 : vector<1x1x96xf32> to vector<1x96xf32>
    %10 = vector.broadcast %9 : vector<1x96xf32> to vector<8x96xf32>
    %11 = arith.addf %7, %10 : vector<8x96xf32>
    %12 = vector.extract_strided_slice %11 {offsets = [0, 0], sizes = [8, 32], strides = [1, 1]} : vector<8x96xf32> to vector<8x32xf32>
    %13 = vector.shape_cast %12 : vector<8x32xf32> to vector<1x8x4x8xf32>
    %14 = tpu.transpose %13, [0, 2, 1, 3] : vector<1x8x4x8xf32> -> vector<1x4x8x8xf32>
    %15 = vector.shape_cast %14 : vector<1x4x8x8xf32> to vector<4x8x8xf32>
    %16 = vector.extract_strided_slice %11 {offsets = [0, 32], sizes = [8, 32], strides = [1, 1]} : vector<8x96xf32> to vector<8x32xf32>
    %17 = vector.shape_cast %16 : vector<8x32xf32> to vector<1x8x4x8xf32>
    %18 = tpu.transpose %17, [0, 2, 1, 3] : vector<1x8x4x8xf32> -> vector<1x4x8x8xf32>
    %19 = vector.shape_cast %18 : vector<1x4x8x8xf32> to vector<4x8x8xf32>
    %20 = vector.extract_strided_slice %11 {offsets = [0, 64], sizes = [8, 32], strides = [1, 1]} : vector<8x96xf32> to vector<8x32xf32>
    %21 = vector.shape_cast %20 : vector<8x32xf32> to vector<1x8x4x8xf32>
    %22 = tpu.transpose %21, [0, 2, 1, 3] : vector<1x8x4x8xf32> -> vector<1x4x8x8xf32>
    %23 = vector.shape_cast %22 : vector<1x4x8x8xf32> to vector<4x8x8xf32>
    "tpu.trace_start"() <{level = 10 : i32, message = "bqd,bkd->bqk"}> : () -> ()
    %cst_9 = arith.constant dense<0.000000e+00> : vector<4x8x8xf32>
    %24 = tpu.matmul %15, %19, %cst_9 {dimension_numbers = #tpu.dot_dimension_numbers<[2], [2], [1], [1], [0, 0, 0, 1, 1, 1], [0], [0]>} : vector<4x8x8xf32>, vector<4x8x8xf32>, vector<4x8x8xf32> -> vector<4x8x8xf32>
    "tpu.trace_stop"() : () -> ()
    %cst_10 = arith.constant 0.353553385 : f32
    %25 = vector.broadcast %cst_10 : f32 to vector<4x8x8xf32>
    %26 = arith.mulf %24, %25 : vector<4x8x8xf32>
    %cst_11 = arith.constant dense<0xFF800000> : vector<4x8xf32>
    %27 = vector.multi_reduction <maximumf>, %26, %cst_11 [2] : vector<4x8x8xf32> to vector<4x8xf32>
    %28 = vector.shape_cast %27 : vector<4x8xf32> to vector<4x8x1xf32>
    %29 = vector.broadcast %28 : vector<4x8x1xf32> to vector<4x8x8xf32>
    %30 = arith.subf %26, %29 : vector<4x8x8xf32>
    %31 = math.exp %30 : vector<4x8x8xf32>
    %cst_12 = arith.constant dense<0.000000e+00> : vector<4x8xf32>
    %32 = vector.multi_reduction <add>, %31, %cst_12 [2] : vector<4x8x8xf32> to vector<4x8xf32>
    %33 = vector.shape_cast %32 : vector<4x8xf32> to vector<4x8x1xf32>
    %34 = tpu.reciprocal %33 : vector<4x8x1xf32> -> vector<4x8x1xf32>
    %35 = vector.broadcast %34 : vector<4x8x1xf32> to vector<4x8x8xf32>
    %36 = arith.mulf %31, %35 : vector<4x8x8xf32>
    "tpu.trace_start"() <{level = 10 : i32, message = "bqk,bkd->bqd"}> : () -> ()
    %cst_13 = arith.constant dense<0.000000e+00> : vector<4x8x8xf32>
    %37 = tpu.matmul %36, %23, %cst_13 {dimension_numbers = #tpu.dot_dimension_numbers<[2], [1], [1], [2], [0, 0, 0, 1, 1, 2], [0], [0]>} : vector<4x8x8xf32>, vector<4x8x8xf32>, vector<4x8x8xf32> -> vector<4x8x8xf32>
    "tpu.trace_stop"() : () -> ()
    %38 = vector.shape_cast %37 : vector<4x8x8xf32> to vector<1x4x8x8xf32>
    %39 = tpu.transpose %38, [0, 2, 1, 3] : vector<1x4x8x8xf32> -> vector<1x8x4x8xf32>
    %40 = vector.shape_cast %39 : vector<1x8x4x8xf32> to vector<8x32xf32>
    %c0_14 = arith.constant 0 : index
    %c0_15 = arith.constant 0 : index
    %c0_16 = arith.constant 0 : index
    %41 = vector.load %arg6[%c0_14, %c0_15, %c0_16] : memref<1x32x32xf32, #tpu.memory_space<vmem>>, vector<1x32x32xf32>
    %42 = vector.shape_cast %41 : vector<1x32x32xf32> to vector<32x32xf32>
    %cst_17 = arith.constant dense<0.000000e+00> : vector<8x32xf32>
    %43 = tpu.matmul %40, %42, %cst_17 {dimension_numbers = #tpu.dot_dimension_numbers<[1], [0], [0], [1], [0, 0, 1, 1], [], []>} : vector<8x32xf32>, vector<32x32xf32>, vector<8x32xf32> -> vector<8x32xf32>
    %c0_18 = arith.constant 0 : index
    %c0_19 = arith.constant 0 : index
    %c0_20 = arith.constant 0 : index
    %44 = vector.load %arg7[%c0_18, %c0_19, %c0_20] : memref<1x1x32xf32, #tpu.memory_space<vmem>>, vector<1x1x32xf32>
    %45 = vector.shape_cast %44 : vector<1x1x32xf32> to vector<1x32xf32>
    %46 = vector.broadcast %45 : vector<1x32xf32> to vector<8x32xf32>
    %47 = arith.addf %43, %46 : vector<8x32xf32>
    %48 = arith.addf %47, %4 : vector<8x32xf32>
    %cst_21 = arith.constant dense<0.000000e+00> : vector<8xf32>
    %49 = vector.multi_reduction <add>, %48, %cst_21 [1] : vector<8x32xf32> to vector<8xf32>
    %50 = vector.shape_cast %49 : vector<8xf32> to vector<8x1xf32>
    %cst_22 = arith.constant 3.200000e+01 : f32
    %51 = vector.broadcast %cst_22 : f32 to vector<8x1xf32>
    %52 = arith.divf %50, %51 : vector<8x1xf32>
    %53 = vector.broadcast %52 : vector<8x1xf32> to vector<8x32xf32>
    %54 = arith.subf %48, %53 : vector<8x32xf32>
    %55 = arith.mulf %54, %54 : vector<8x32xf32>
    %cst_23 = arith.constant dense<0.000000e+00> : vector<8xf32>
    %56 = vector.multi_reduction <add>, %55, %cst_23 [1] : vector<8x32xf32> to vector<8xf32>
    %57 = vector.shape_cast %56 : vector<8xf32> to vector<8x1xf32>
    %cst_24 = arith.constant 3.200000e+01 : f32
    %58 = vector.broadcast %cst_24 : f32 to vector<8x1xf32>
    %59 = arith.divf %57, %58 : vector<8x1xf32>
    %60 = vector.broadcast %52 : vector<8x1xf32> to vector<8x32xf32>
    %61 = arith.subf %48, %60 : vector<8x32xf32>
    %cst_25 = arith.constant 9.99999996E-13 : f32
    %62 = vector.broadcast %cst_25 : f32 to vector<8x1xf32>
    %63 = arith.addf %59, %62 : vector<8x1xf32>
    %64 = math.rsqrt %63 : vector<8x1xf32>
    %65 = vector.broadcast %64 : vector<8x1xf32> to vector<8x32xf32>
    %66 = arith.mulf %61, %65 : vector<8x32xf32>
    %c0_26 = arith.constant 0 : index
    %c0_27 = arith.constant 0 : index
    %c0_28 = arith.constant 0 : index
    %67 = vector.load %arg8[%c0_26, %c0_27, %c0_28] : memref<1x1x32xf32, #tpu.memory_space<vmem>>, vector<1x1x32xf32>
    %68 = vector.shape_cast %67 : vector<1x1x32xf32> to vector<1x32xf32>
    %69 = vector.broadcast %68 : vector<1x32xf32> to vector<8x32xf32>
    %70 = arith.mulf %66, %69 : vector<8x32xf32>
    %c0_29 = arith.constant 0 : index
    %c0_30 = arith.constant 0 : index
    %c0_31 = arith.constant 0 : index
    %71 = vector.load %arg9[%c0_29, %c0_30, %c0_31] : memref<1x1x32xf32, #tpu.memory_space<vmem>>, vector<1x1x32xf32>
    %72 = vector.shape_cast %71 : vector<1x1x32xf32> to vector<1x32xf32>
    %73 = vector.broadcast %72 : vector<1x32xf32> to vector<8x32xf32>
    %74 = arith.addf %70, %73 : vector<8x32xf32>
    %75 = vector.shape_cast %74 : vector<8x32xf32> to vector<1x8x32xf32>
    %c0_32 = arith.constant 0 : index
    %c0_33 = arith.constant 0 : index
    %c0_34 = arith.constant 0 : index
    %76 = vector.load %arg13[%c0_32, %c0_33, %c0_34] : memref<1x8x32xf32, #tpu.memory_space<vmem>>, vector<1x8x32xf32>
    tpu.vector_store %arg13[%c0_32, %c0_33, %c0_34], %75 {strides = array<i32>} : memref<1x8x32xf32, #tpu.memory_space<vmem>>, vector<1x8x32xf32>,
    %c1_i32 = arith.constant 1 : i32
    %77 = arith.cmpi eq, %arg1, %c1_i32 : i32
    %78 = arith.extui %77 : i1 to i32
    %c0_i32_35 = arith.constant 0 : i32
    %79 = arith.cmpi ne, %78, %c0_i32_35 : i32
    scf.if %79 {
      %80 = vector.extract_strided_slice %75 {offsets = [0, 0, 0], sizes = [1, 1, 32], strides = [1, 1, 1]} : vector<1x8x32xf32> to vector<1x1x32xf32>
      %81 = vector.shape_cast %80 : vector<1x1x32xf32> to vector<1x32xf32>
      %c0_36 = arith.constant 0 : index
      %c0_37 = arith.constant 0 : index
      %82 = vector.load %arg10[%c0_36, %c0_37] : memref<32x32xf32, #tpu.memory_space<vmem>>, vector<32x32xf32>
      %cst_38 = arith.constant dense<0.000000e+00> : vector<1x32xf32>
      %83 = tpu.matmul %81, %82, %cst_38 {dimension_numbers = #tpu.dot_dimension_numbers<[1], [0], [0], [1], [0, 0, 1, 1], [], []>} : vector<1x32xf32>, vector<32x32xf32>, vector<1x32xf32> -> vector<1x32xf32>
      %c0_39 = arith.constant 0 : index
      %c0_40 = arith.constant 0 : index
      %84 = vector.load %arg11[%c0_39, %c0_40] : memref<1x32xf32, #tpu.memory_space<vmem>>, vector<1x32xf32>
      %85 = arith.addf %83, %84 : vector<1x32xf32>
      %86 = math.tanh %85 : vector<1x32xf32>
      %87 = vector.shape_cast %86 : vector<1x32xf32> to vector<1x1x32xf32>
      %c0_41 = arith.constant 0 : index
      %c0_42 = arith.constant 0 : index
      %c0_43 = arith.constant 0 : index
      %88 = vector.load %arg12[%c0_41, %c0_42, %c0_43] : memref<1x1x32xf32, #tpu.memory_space<vmem>>, vector<1x1x32xf32>
      tpu.vector_store %arg12[%c0_41, %c0_42, %c0_43], %87 {strides = array<i32>} : memref<1x1x32xf32, #tpu.memory_space<vmem>>, vector<1x1x32xf32>,
    } else {
    }
    return
  }
  func.func @transform_0(%arg0: i32, %arg1: i32) -> (i32, i32, i32) {
    %c0_i32 = arith.constant 0 : i32
    %c0_i32_0 = arith.constant 0 : i32
    %c0_i32_1 = arith.constant 0 : i32
    return %arg0, %c0_i32, %c0_i32_0 : i32, i32, i32
  }
  func.func @transform_1(%arg0: i32, %arg1: i32) -> (i32, i32) {
    %c0_i32 = arith.constant 0 : i32
    %c0_i32_0 = arith.constant 0 : i32
    %c0_i32_1 = arith.constant 0 : i32
    return %c0_i32, %c0_i32_0 : i32, i32
  }
  func.func @transform_2(%arg0: i32, %arg1: i32) -> (i32, i32, i32) {
    %c0_i32 = arith.constant 0 : i32
    %c0_i32_0 = arith.constant 0 : i32
    %c0_i32_1 = arith.constant 0 : i32
    return %arg1, %c0_i32, %c0_i32_0 : i32, i32, i32
  }
  func.func @transform_3(%arg0: i32, %arg1: i32) -> (i32, i32, i32) {
    %c0_i32 = arith.constant 0 : i32
    %c0_i32_0 = arith.constant 0 : i32
    %c0_i32_1 = arith.constant 0 : i32
    return %arg1, %c0_i32, %c0_i32_0 : i32, i32, i32
  }
  func.func @transform_4(%arg0: i32, %arg1: i32) -> (i32, i32, i32) {
    %c0_i32 = arith.constant 0 : i32
    %c0_i32_0 = arith.constant 0 : i32
    %c0_i32_1 = arith.constant 0 : i32
    return %arg1, %c0_i32, %c0_i32_0 : i32, i32, i32
  }
  func.func @transform_5(%arg0: i32, %arg1: i32) -> (i32, i32, i32) {
    %c0_i32 = arith.constant 0 : i32
    %c0_i32_0 = arith.constant 0 : i32
    %c0_i32_1 = arith.constant 0 : i32
    return %arg1, %c0_i32, %c0_i32_0 : i32, i32, i32
  }
  func.func @transform_6(%arg0: i32, %arg1: i32) -> (i32, i32, i32) {
    %c0_i32 = arith.constant 0 : i32
    %c0_i32_0 = arith.constant 0 : i32
    %c0_i32_1 = arith.constant 0 : i32
    return %arg1, %c0_i32, %c0_i32_0 : i32, i32, i32
  }
  func.func @transform_7(%arg0: i32, %arg1: i32) -> (i32, i32, i32) {
    %c0_i32 = arith.constant 0 : i32
    %c0_i32_0 = arith.constant 0 : i32
    %c0_i32_1 = arith.constant 0 : i32
    return %arg1, %c0_i32, %c0_i32_0 : i32, i32, i32
  }
  func.func @transform_8(%arg0: i32, %arg1: i32) -> (i32, i32) {
    %c0_i32 = arith.constant 0 : i32
    %c0_i32_0 = arith.constant 0 : i32
    %c0_i32_1 = arith.constant 0 : i32
    return %c0_i32, %c0_i32_0 : i32, i32
  }
  func.func @transform_9(%arg0: i32, %arg1: i32) -> (i32, i32) {
    %c0_i32 = arith.constant 0 : i32
    %c0_i32_0 = arith.constant 0 : i32
    %c0_i32_1 = arith.constant 0 : i32
    return %c0_i32, %c0_i32_0 : i32, i32
  }
  func.func @transform_10(%arg0: i32, %arg1: i32) -> (i32, i32, i32) {
    %c0_i32 = arith.constant 0 : i32
    %c0_i32_0 = arith.constant 0 : i32
    %c0_i32_1 = arith.constant 0 : i32
    return %arg0, %c0_i32, %c0_i32_0 : i32, i32, i32
  }
}

module attributes {stable_mosaic.version = 11 : i64} {
  func.func @_fused_submodal_kernel(%arg0: i32, %arg1: i32, %arg2: memref<1x8x32xf32, #tpu.memory_space<vmem>>, %arg3: memref<8x32xf32, #tpu.memory_space<vmem>>, %arg4: memref<1x32x96xf32, #tpu.memory_space<vmem>>, %arg5: memref<1x1x96xf32, #tpu.memory_space<vmem>>, %arg6: memref<1x32x32xf32, #tpu.memory_space<vmem>>, %arg7: memref<1x1x32xf32, #tpu.memory_space<vmem>>, %arg8: memref<1x1x32xf32, #tpu.memory_space<vmem>>, %arg9: memref<1x1x32xf32, #tpu.memory_space<vmem>>, %arg10: memref<32x32xf32, #tpu.memory_space<vmem>>, %arg11: memref<1x32xf32, #tpu.memory_space<vmem>>, %arg12: memref<1x1x32xf32, #tpu.memory_space<vmem>>, %arg13: memref<1x8x32xf32, #tpu.memory_space<vmem>>) attributes {dimension_semantics = [#tpu.dimension_semantics<parallel>, #tpu.dimension_semantics<arbitrary>], iteration_bounds = array<i64: 2, 2>, scalar_prefetch = 0 : i64, scratch_operands = 1 : i64, tpu.core_type = #tpu.core_type<tc>, window_params = [{transform_indices = @transform_0, window_bounds = array<i64: 1, 8, 32>}, {pipeline_mode = #tpu.pipeline_mode<synchronous>, transform_indices = @transform_1, window_bounds = array<i64: 8, 32>}, {transform_indices = @transform_2, window_bounds = array<i64: 1, 32, 96>}, {transform_indices = @transform_3, window_bounds = array<i64: 1, 1, 96>}, {transform_indices = @transform_4, window_bounds = array<i64: 1, 32, 32>}, {transform_indices = @transform_5, window_bounds = array<i64: 1, 1, 32>}, {transform_indices = @transform_6, window_bounds = array<i64: 1, 1, 32>}, {transform_indices = @transform_7, window_bounds = array<i64: 1, 1, 32>}, {pipeline_mode = #tpu.pipeline_mode<synchronous>, transform_indices = @transform_8, window_bounds = array<i64: 32, 32>}, {pipeline_mode = #tpu.pipeline_mode<synchronous>, transform_indices = @transform_9, window_bounds = array<i64: 1, 32>}, {transform_indices = @transform_10, window_bounds = array<i64: 1, 1, 32>}]} {
    %c0_i32 = arith.constant 0 : i32
    %0 = arith.cmpi eq, %arg1, %c0_i32 : i32
    %1 = arith.extui %0 : i1 to i32
    %c0_i32_0 = arith.constant 0 : i32
    %2 = arith.cmpi ne, %1, %c0_i32_0 : i32
    scf.if %2 {
      %c0_36 = arith.constant 0 : index
      %c0_37 = arith.constant 0 : index
      %c0_38 = arith.constant 0 : index
      %101 = vector.load %arg2[%c0_36, %c0_37, %c0_38] : memref<1x8x32xf32, #tpu.memory_space<vmem>>, vector<1x8x32xf32>
      %c0_39 = arith.constant 0 : index
      %c0_40 = arith.constant 0 : index
      %102 = vector.load %arg3[%c0_39, %c0_40] : memref<8x32xf32, #tpu.memory_space<vmem>>, vector<8x32xf32>
      %103 = vector.shape_cast %102 : vector<8x32xf32> to vector<1x8x32xf32>
      %104 = arith.addf %101, %103 : vector<1x8x32xf32>
      %c0_41 = arith.constant 0 : index
      %c0_42 = arith.constant 0 : index
      %c0_43 = arith.constant 0 : index
      %105 = vector.load %arg13[%c0_41, %c0_42, %c0_43] : memref<1x8x32xf32, #tpu.memory_space<vmem>>, vector<1x8x32xf32>
      tpu.vector_store %arg13[%c0_41, %c0_42, %c0_43], %104 {strides = array<i32>} : memref<1x8x32xf32, #tpu.memory_space<vmem>>, vector<1x8x32xf32>,
    } else {
    }
    %c0 = arith.constant 0 : index
    %c0_1 = arith.constant 0 : index
    %c0_2 = arith.constant 0 : index
    %3 = vector.load %arg13[%c0, %c0_1, %c0_2] : memref<1x8x32xf32, #tpu.memory_space<vmem>>, vector<1x8x32xf32>
    %4 = vector.shape_cast %3 : vector<1x8x32xf32> to vector<8x32xf32>
    %c0_3 = arith.constant 0 : index
    %c0_4 = arith.constant 0 : index
    %c0_5 = arith.constant 0 : index
    %5 = vector.load %arg4[%c0_3, %c0_4, %c0_5] : memref<1x32x96xf32, #tpu.memory_space<vmem>>, vector<1x32x96xf32>
    %6 = vector.shape_cast %5 : vector<1x32x96xf32> to vector<32x96xf32>
    %cst = arith.constant dense<0.000000e+00> : vector<8x96xf32>
    %7 = tpu.matmul %4, %6, %cst {dimension_numbers = #tpu.dot_dimension_numbers<[1], [0], [0], [1], [0, 0, 1, 1], [], []>} : vector<8x32xf32>, vector<32x96xf32>, vector<8x96xf32> -> vector<8x96xf32>
    %c0_6 = arith.constant 0 : index
    %c0_7 = arith.constant 0 : index
    %c0_8 = arith.constant 0 : index
    %8 = vector.load %arg5[%c0_6, %c0_7, %c0_8] : memref<1x1x96xf32, #tpu.memory_space<vmem>>, vector<1x1x96xf32>
    %9 = vector.shape_cast %8 : vector<1x1x96xf32> to vector<1x96xf32>
    %10 = vector.broadcast %9 : vector<1x96xf32> to vector<8x96xf32>
    %11 = arith.addf %7, %10 : vector<8x96xf32>
    %12 = vector.extract_strided_slice %11 {offsets = [0, 0], sizes = [8, 8], strides = [1, 1]} : vector<8x96xf32> to vector<8x8xf32>
    %13 = vector.shape_cast %12 : vector<8x8xf32> to vector<1x8x8xf32>
    %14 = vector.extract_strided_slice %11 {offsets = [0, 8], sizes = [8, 8], strides = [1, 1]} : vector<8x96xf32> to vector<8x8xf32>
    %15 = vector.shape_cast %14 : vector<8x8xf32> to vector<1x8x8xf32>
    %16 = vector.extract_strided_slice %11 {offsets = [0, 16], sizes = [8, 8], strides = [1, 1]} : vector<8x96xf32> to vector<8x8xf32>
    %17 = vector.shape_cast %16 : vector<8x8xf32> to vector<1x8x8xf32>
    %18 = vector.extract_strided_slice %11 {offsets = [0, 24], sizes = [8, 8], strides = [1, 1]} : vector<8x96xf32> to vector<8x8xf32>
    %19 = vector.shape_cast %18 : vector<8x8xf32> to vector<1x8x8xf32>
    %20 = tpu.concatenate %13, %15, %17, %19 in 0 : vector<1x8x8xf32>, vector<1x8x8xf32>, vector<1x8x8xf32>, vector<1x8x8xf32> -> vector<4x8x8xf32>
    %21 = vector.extract_strided_slice %11 {offsets = [0, 32], sizes = [8, 8], strides = [1, 1]} : vector<8x96xf32> to vector<8x8xf32>
    %22 = vector.shape_cast %21 : vector<8x8xf32> to vector<1x8x8xf32>
    %23 = vector.extract_strided_slice %11 {offsets = [0, 40], sizes = [8, 8], strides = [1, 1]} : vector<8x96xf32> to vector<8x8xf32>
    %24 = vector.shape_cast %23 : vector<8x8xf32> to vector<1x8x8xf32>
    %25 = vector.extract_strided_slice %11 {offsets = [0, 48], sizes = [8, 8], strides = [1, 1]} : vector<8x96xf32> to vector<8x8xf32>
    %26 = vector.shape_cast %25 : vector<8x8xf32> to vector<1x8x8xf32>
    %27 = vector.extract_strided_slice %11 {offsets = [0, 56], sizes = [8, 8], strides = [1, 1]} : vector<8x96xf32> to vector<8x8xf32>
    %28 = vector.shape_cast %27 : vector<8x8xf32> to vector<1x8x8xf32>
    %29 = tpu.concatenate %22, %24, %26, %28 in 0 : vector<1x8x8xf32>, vector<1x8x8xf32>, vector<1x8x8xf32>, vector<1x8x8xf32> -> vector<4x8x8xf32>
    %30 = vector.extract_strided_slice %11 {offsets = [0, 64], sizes = [8, 8], strides = [1, 1]} : vector<8x96xf32> to vector<8x8xf32>
    %31 = vector.shape_cast %30 : vector<8x8xf32> to vector<1x8x8xf32>
    %32 = vector.extract_strided_slice %11 {offsets = [0, 72], sizes = [8, 8], strides = [1, 1]} : vector<8x96xf32> to vector<8x8xf32>
    %33 = vector.shape_cast %32 : vector<8x8xf32> to vector<1x8x8xf32>
    %34 = vector.extract_strided_slice %11 {offsets = [0, 80], sizes = [8, 8], strides = [1, 1]} : vector<8x96xf32> to vector<8x8xf32>
    %35 = vector.shape_cast %34 : vector<8x8xf32> to vector<1x8x8xf32>
    %36 = vector.extract_strided_slice %11 {offsets = [0, 88], sizes = [8, 8], strides = [1, 1]} : vector<8x96xf32> to vector<8x8xf32>
    %37 = vector.shape_cast %36 : vector<8x8xf32> to vector<1x8x8xf32>
    %38 = tpu.concatenate %31, %33, %35, %37 in 0 : vector<1x8x8xf32>, vector<1x8x8xf32>, vector<1x8x8xf32>, vector<1x8x8xf32> -> vector<4x8x8xf32>
    "tpu.trace_start"() <{level = 10 : i32, message = "bqd,bkd->bqk"}> : () -> ()
    %cst_9 = arith.constant dense<0.000000e+00> : vector<4x8x8xf32>
    %39 = tpu.matmul %20, %29, %cst_9 {dimension_numbers = #tpu.dot_dimension_numbers<[2], [2], [1], [1], [0, 0, 0, 1, 1, 1], [0], [0]>} : vector<4x8x8xf32>, vector<4x8x8xf32>, vector<4x8x8xf32> -> vector<4x8x8xf32>
    "tpu.trace_stop"() : () -> ()
    %cst_10 = arith.constant 0.353553385 : f32
    %40 = vector.broadcast %cst_10 : f32 to vector<4x8x8xf32>
    %41 = arith.mulf %39, %40 : vector<4x8x8xf32>
    %cst_11 = arith.constant dense<0xFF800000> : vector<4x8xf32>
    %42 = vector.multi_reduction <maximumf>, %41, %cst_11 [2] : vector<4x8x8xf32> to vector<4x8xf32>
    %43 = vector.shape_cast %42 : vector<4x8xf32> to vector<4x8x1xf32>
    %44 = vector.broadcast %43 : vector<4x8x1xf32> to vector<4x8x8xf32>
    %45 = arith.subf %41, %44 : vector<4x8x8xf32>
    %46 = math.exp %45 : vector<4x8x8xf32>
    %cst_12 = arith.constant dense<0.000000e+00> : vector<4x8xf32>
    %47 = vector.multi_reduction <add>, %46, %cst_12 [2] : vector<4x8x8xf32> to vector<4x8xf32>
    %48 = vector.shape_cast %47 : vector<4x8xf32> to vector<4x8x1xf32>
    %49 = tpu.reciprocal %48 : vector<4x8x1xf32> -> vector<4x8x1xf32>
    %50 = vector.broadcast %49 : vector<4x8x1xf32> to vector<4x8x8xf32>
    %51 = arith.mulf %46, %50 : vector<4x8x8xf32>
    "tpu.trace_start"() <{level = 10 : i32, message = "bqk,bkd->bqd"}> : () -> ()
    %cst_13 = arith.constant dense<0.000000e+00> : vector<4x8x8xf32>
    %52 = tpu.matmul %51, %38, %cst_13 {dimension_numbers = #tpu.dot_dimension_numbers<[2], [1], [1], [2], [0, 0, 0, 1, 1, 2], [0], [0]>} : vector<4x8x8xf32>, vector<4x8x8xf32>, vector<4x8x8xf32> -> vector<4x8x8xf32>
    "tpu.trace_stop"() : () -> ()
    %53 = vector.extract_strided_slice %52 {offsets = [0, 0, 0], sizes = [1, 8, 8], strides = [1, 1, 1]} : vector<4x8x8xf32> to vector<1x8x8xf32>
    %54 = vector.shape_cast %53 : vector<1x8x8xf32> to vector<8x8xf32>
    %55 = vector.extract_strided_slice %52 {offsets = [1, 0, 0], sizes = [1, 8, 8], strides = [1, 1, 1]} : vector<4x8x8xf32> to vector<1x8x8xf32>
    %56 = vector.shape_cast %55 : vector<1x8x8xf32> to vector<8x8xf32>
    %57 = vector.extract_strided_slice %52 {offsets = [2, 0, 0], sizes = [1, 8, 8], strides = [1, 1, 1]} : vector<4x8x8xf32> to vector<1x8x8xf32>
    %58 = vector.shape_cast %57 : vector<1x8x8xf32> to vector<8x8xf32>
    %59 = vector.extract_strided_slice %52 {offsets = [3, 0, 0], sizes = [1, 8, 8], strides = [1, 1, 1]} : vector<4x8x8xf32> to vector<1x8x8xf32>
    %60 = vector.shape_cast %59 : vector<1x8x8xf32> to vector<8x8xf32>
    %61 = tpu.concatenate %54, %56, %58, %60 in 1 : vector<8x8xf32>, vector<8x8xf32>, vector<8x8xf32>, vector<8x8xf32> -> vector<8x32xf32>
    %c0_14 = arith.constant 0 : index
    %c0_15 = arith.constant 0 : index
    %c0_16 = arith.constant 0 : index
    %62 = vector.load %arg6[%c0_14, %c0_15, %c0_16] : memref<1x32x32xf32, #tpu.memory_space<vmem>>, vector<1x32x32xf32>
    %63 = vector.shape_cast %62 : vector<1x32x32xf32> to vector<32x32xf32>
    %cst_17 = arith.constant dense<0.000000e+00> : vector<8x32xf32>
    %64 = tpu.matmul %61, %63, %cst_17 {dimension_numbers = #tpu.dot_dimension_numbers<[1], [0], [0], [1], [0, 0, 1, 1], [], []>} : vector<8x32xf32>, vector<32x32xf32>, vector<8x32xf32> -> vector<8x32xf32>
    %c0_18 = arith.constant 0 : index
    %c0_19 = arith.constant 0 : index
    %c0_20 = arith.constant 0 : index
    %65 = vector.load %arg7[%c0_18, %c0_19, %c0_20] : memref<1x1x32xf32, #tpu.memory_space<vmem>>, vector<1x1x32xf32>
    %66 = vector.shape_cast %65 : vector<1x1x32xf32> to vector<1x32xf32>
    %67 = vector.broadcast %66 : vector<1x32xf32> to vector<8x32xf32>
    %68 = arith.addf %64, %67 : vector<8x32xf32>
    %69 = arith.addf %68, %4 : vector<8x32xf32>
    %cst_21 = arith.constant dense<0.000000e+00> : vector<8xf32>
    %70 = vector.multi_reduction <add>, %69, %cst_21 [1] : vector<8x32xf32> to vector<8xf32>
    %71 = vector.shape_cast %70 : vector<8xf32> to vector<8x1xf32>
    %cst_22 = arith.constant 3.200000e+01 : f32
    %72 = vector.broadcast %cst_22 : f32 to vector<8x1xf32>
    %73 = arith.divf %71, %72 : vector<8x1xf32>
    %74 = vector.broadcast %73 : vector<8x1xf32> to vector<8x32xf32>
    %75 = arith.subf %69, %74 : vector<8x32xf32>
    %76 = arith.mulf %75, %75 : vector<8x32xf32>
    %cst_23 = arith.constant dense<0.000000e+00> : vector<8xf32>
    %77 = vector.multi_reduction <add>, %76, %cst_23 [1] : vector<8x32xf32> to vector<8xf32>
    %78 = vector.shape_cast %77 : vector<8xf32> to vector<8x1xf32>
    %cst_24 = arith.constant 3.200000e+01 : f32
    %79 = vector.broadcast %cst_24 : f32 to vector<8x1xf32>
    %80 = arith.divf %78, %79 : vector<8x1xf32>
    %81 = vector.broadcast %73 : vector<8x1xf32> to vector<8x32xf32>
    %82 = arith.subf %69, %81 : vector<8x32xf32>
    %cst_25 = arith.constant 9.99999996E-13 : f32
    %83 = vector.broadcast %cst_25 : f32 to vector<8x1xf32>
    %84 = arith.addf %80, %83 : vector<8x1xf32>
    %85 = math.rsqrt %84 : vector<8x1xf32>
    %86 = vector.broadcast %85 : vector<8x1xf32> to vector<8x32xf32>
    %87 = arith.mulf %82, %86 : vector<8x32xf32>
    %c0_26 = arith.constant 0 : index
    %c0_27 = arith.constant 0 : index
    %c0_28 = arith.constant 0 : index
    %88 = vector.load %arg8[%c0_26, %c0_27, %c0_28] : memref<1x1x32xf32, #tpu.memory_space<vmem>>, vector<1x1x32xf32>
    %89 = vector.shape_cast %88 : vector<1x1x32xf32> to vector<1x32xf32>
    %90 = vector.broadcast %89 : vector<1x32xf32> to vector<8x32xf32>
    %91 = arith.mulf %87, %90 : vector<8x32xf32>
    %c0_29 = arith.constant 0 : index
    %c0_30 = arith.constant 0 : index
    %c0_31 = arith.constant 0 : index
    %92 = vector.load %arg9[%c0_29, %c0_30, %c0_31] : memref<1x1x32xf32, #tpu.memory_space<vmem>>, vector<1x1x32xf32>
    %93 = vector.shape_cast %92 : vector<1x1x32xf32> to vector<1x32xf32>
    %94 = vector.broadcast %93 : vector<1x32xf32> to vector<8x32xf32>
    %95 = arith.addf %91, %94 : vector<8x32xf32>
    %96 = vector.shape_cast %95 : vector<8x32xf32> to vector<1x8x32xf32>
    %c0_32 = arith.constant 0 : index
    %c0_33 = arith.constant 0 : index
    %c0_34 = arith.constant 0 : index
    %97 = vector.load %arg13[%c0_32, %c0_33, %c0_34] : memref<1x8x32xf32, #tpu.memory_space<vmem>>, vector<1x8x32xf32>
    tpu.vector_store %arg13[%c0_32, %c0_33, %c0_34], %96 {strides = array<i32>} : memref<1x8x32xf32, #tpu.memory_space<vmem>>, vector<1x8x32xf32>,
    %c1_i32 = arith.constant 1 : i32
    %98 = arith.cmpi eq, %arg1, %c1_i32 : i32
    %99 = arith.extui %98 : i1 to i32
    %c0_i32_35 = arith.constant 0 : i32
    %100 = arith.cmpi ne, %99, %c0_i32_35 : i32
    scf.if %100 {
      %101 = vector.extract_strided_slice %96 {offsets = [0, 0, 0], sizes = [1, 1, 32], strides = [1, 1, 1]} : vector<1x8x32xf32> to vector<1x1x32xf32>
      %102 = vector.shape_cast %101 : vector<1x1x32xf32> to vector<1x32xf32>
      %c0_36 = arith.constant 0 : index
      %c0_37 = arith.constant 0 : index
      %103 = vector.load %arg10[%c0_36, %c0_37] : memref<32x32xf32, #tpu.memory_space<vmem>>, vector<32x32xf32>
      %cst_38 = arith.constant dense<0.000000e+00> : vector<1x32xf32>
      %104 = tpu.matmul %102, %103, %cst_38 {dimension_numbers = #tpu.dot_dimension_numbers<[1], [0], [0], [1], [0, 0, 1, 1], [], []>} : vector<1x32xf32>, vector<32x32xf32>, vector<1x32xf32> -> vector<1x32xf32>
      %c0_39 = arith.constant 0 : index
      %c0_40 = arith.constant 0 : index
      %105 = vector.load %arg11[%c0_39, %c0_40] : memref<1x32xf32, #tpu.memory_space<vmem>>, vector<1x32xf32>
      %106 = arith.addf %104, %105 : vector<1x32xf32>
      %107 = math.tanh %106 : vector<1x32xf32>
      %108 = vector.shape_cast %107 : vector<1x32xf32> to vector<1x1x32xf32>
      %c0_41 = arith.constant 0 : index
      %c0_42 = arith.constant 0 : index
      %c0_43 = arith.constant 0 : index
      %109 = vector.load %arg12[%c0_41, %c0_42, %c0_43] : memref<1x1x32xf32, #tpu.memory_space<vmem>>, vector<1x1x32xf32>
      tpu.vector_store %arg12[%c0_41, %c0_42, %c0_43], %108 {strides = array<i32>} : memref<1x1x32xf32, #tpu.memory_space<vmem>>, vector<1x1x32xf32>,
    } else {
    }
    return
  }
  func.func @transform_0(%arg0: i32, %arg1: i32) -> (i32, i32, i32) {
    %c0_i32 = arith.constant 0 : i32
    %c0_i32_0 = arith.constant 0 : i32
    %c0_i32_1 = arith.constant 0 : i32
    return %arg0, %c0_i32, %c0_i32_0 : i32, i32, i32
  }
  func.func @transform_1(%arg0: i32, %arg1: i32) -> (i32, i32) {
    %c0_i32 = arith.constant 0 : i32
    %c0_i32_0 = arith.constant 0 : i32
    %c0_i32_1 = arith.constant 0 : i32
    return %c0_i32, %c0_i32_0 : i32, i32
  }
  func.func @transform_2(%arg0: i32, %arg1: i32) -> (i32, i32, i32) {
    %c0_i32 = arith.constant 0 : i32
    %c0_i32_0 = arith.constant 0 : i32
    %c0_i32_1 = arith.constant 0 : i32
    return %arg1, %c0_i32, %c0_i32_0 : i32, i32, i32
  }
  func.func @transform_3(%arg0: i32, %arg1: i32) -> (i32, i32, i32) {
    %c0_i32 = arith.constant 0 : i32
    %c0_i32_0 = arith.constant 0 : i32
    %c0_i32_1 = arith.constant 0 : i32
    return %arg1, %c0_i32, %c0_i32_0 : i32, i32, i32
  }
  func.func @transform_4(%arg0: i32, %arg1: i32) -> (i32, i32, i32) {
    %c0_i32 = arith.constant 0 : i32
    %c0_i32_0 = arith.constant 0 : i32
    %c0_i32_1 = arith.constant 0 : i32
    return %arg1, %c0_i32, %c0_i32_0 : i32, i32, i32
  }
  func.func @transform_5(%arg0: i32, %arg1: i32) -> (i32, i32, i32) {
    %c0_i32 = arith.constant 0 : i32
    %c0_i32_0 = arith.constant 0 : i32
    %c0_i32_1 = arith.constant 0 : i32
    return %arg1, %c0_i32, %c0_i32_0 : i32, i32, i32
  }
  func.func @transform_6(%arg0: i32, %arg1: i32) -> (i32, i32, i32) {
    %c0_i32 = arith.constant 0 : i32
    %c0_i32_0 = arith.constant 0 : i32
    %c0_i32_1 = arith.constant 0 : i32
    return %arg1, %c0_i32, %c0_i32_0 : i32, i32, i32
  }
  func.func @transform_7(%arg0: i32, %arg1: i32) -> (i32, i32, i32) {
    %c0_i32 = arith.constant 0 : i32
    %c0_i32_0 = arith.constant 0 : i32
    %c0_i32_1 = arith.constant 0 : i32
    return %arg1, %c0_i32, %c0_i32_0 : i32, i32, i32
  }
  func.func @transform_8(%arg0: i32, %arg1: i32) -> (i32, i32) {
    %c0_i32 = arith.constant 0 : i32
    %c0_i32_0 = arith.constant 0 : i32
    %c0_i32_1 = arith.constant 0 : i32
    return %c0_i32, %c0_i32_0 : i32, i32
  }
  func.func @transform_9(%arg0: i32, %arg1: i32) -> (i32, i32) {
    %c0_i32 = arith.constant 0 : i32
    %c0_i32_0 = arith.constant 0 : i32
    %c0_i32_1 = arith.constant 0 : i32
    return %c0_i32, %c0_i32_0 : i32, i32
  }
  func.func @transform_10(%arg0: i32, %arg1: i32) -> (i32, i32, i32) {
    %c0_i32 = arith.constant 0 : i32
    %c0_i32_0 = arith.constant 0 : i32
    %c0_i32_1 = arith.constant 0 : i32
    return %arg0, %c0_i32, %c0_i32_0 : i32, i32, i32
  }
}

</mosaic_0001>

<llo_original>
// kernel: tpu_custom_call.1
$region0: #{tpu_custom_call.1}
  #allocation0 [shape = 'u32[]', space=smem, size = 0x4, offset = 0x4, fixed_abs, tag = 'smem constant byte address 0x4 - core index']
  #allocation1 [shape = 'u32[144,128]{1,0:T(1,128)}', space=vmem, size = 0x12000, scoped, tag = 'internal scratch']
  #allocation2 [shape = 'f32[1,8,32]{2,1,0:T(8,128)}', space=vmem, size = 0x1000, scoped, tag = 'scratch operand']
  %s0 = inlined_call_operand.hbm [shape: f32[2,8,32], index: 0, kind: input, shape index: {}]
  %s1 = inlined_call_operand.hbm [shape: f32[8,32], index: 1, kind: input, shape index: {}]
  %s2 = inlined_call_operand.hbm [shape: f32[2,32,96], index: 2, kind: input, shape index: {}]
  %s3 = inlined_call_operand.vmem [shape: f32[2,1,96], index: 3, kind: input, shape index: {}]
  %s4 = inlined_call_operand.hbm [shape: f32[2,32,32], index: 4, kind: input, shape index: {}]
  %s5 = inlined_call_operand.vmem [shape: f32[2,1,32], index: 5, kind: input, shape index: {}]
  %s6 = inlined_call_operand.vmem [shape: f32[2,1,32], index: 6, kind: input, shape index: {}]
  %s7 = inlined_call_operand.vmem [shape: f32[2,1,32], index: 7, kind: input, shape index: {}]
  %s8 = inlined_call_operand.hbm [shape: f32[32,32], index: 8, kind: input, shape index: {}]
  %s9 = inlined_call_operand.vmem [shape: f32[1,32], index: 9, kind: input, shape index: {}]
  %s10 = inlined_call_operand.hbm [shape: f32[2,1,32], index: 10, kind: output, shape index: {}]
  %s11 = sld [smem:[#allocation0]]
  $region101: #{tpu_custom_call.1} parent=0
    _
  %s13 = ssub.s32 1, %s11
  %s14 = scalar_select 0, %s13, %s11
  $region1: #{tpu_custom_call.1} parent=0
    #allocation3 [shape = 'u8[8192]{0}', space=vmem, size = 0x2000, scoped, tag = 'input window, operand 0']
    #allocation4 [shape = 's32[2]{0}', space=sflag, size = 0x8, scoped, tag = 'scoped memory for tpu_custom_call.1']
    #allocation5 [shape = 's32[2]{0}', space=sflag, size = 0x8, scoped, tag = 'scoped memory for tpu_custom_call.1']
    #allocation6 [shape = 'u8[4096]{0}', space=vmem, size = 0x1000, scoped, tag = 'input window, operand 1, single buffered']
    #allocation7 [shape = 's32[1]{0}', space=sflag, size = 0x4, scoped, tag = 'scoped memory for tpu_custom_call.1']
    #allocation8 [shape = 'u8[32768]{0}', space=vmem, size = 0x8000, scoped, tag = 'input window, operand 2']
    #allocation9 [shape = 'u8[32768]{0}', space=vmem, size = 0x8000, scoped, tag = 'input window, operand 4']
    #allocation10 [shape = 'u8[16384]{0}', space=vmem, size = 0x4000, scoped, tag = 'input window, operand 8, single buffered']
    #allocation11 [shape = 'u8[1024]{0}', space=vmem, size = 0x400, scoped, tag = 'output window, operand 0']
    %15 = vsyncpa [#allocation4], 0
    %s16 = scalar_lea.sflag [#allocation4], 1
    %17 = vsyncpa %s16, 0
    %18 = vsyncpa [#allocation7], 0
    %19 = vsyncpa [#allocation5], 0
    %s20 = scalar_lea.sflag [#allocation5], 1
    %21 = vsyncpa %s20, 0
    loop: start=0, step=1, limit=6
    $region2: #{tpu_custom_call.1} parent=1 // loop_pre_header
      _
    $region3: #{tpu_custom_call.1} parent=1 // loop_header
      %s23 = sphi 0, %s27
      %p24 = scmp.ge.s32.totalorder %s23, 6
      %s30 = sphi 0, %s42
      %s31 = sphi 0, %s38
      %s32 = sphi 0, %s30
      %s33 = sphi 0, %s31
      %s34 = sphi 0, %s32
      %s35 = sphi 0, %s33
      %s45 = sphi 0, %s47
      %s48 = sphi 0, %s45
      %s49 = sphi 0, %s48
      %s65 = sphi 0, %s49
      %s69 = sphi 0, %s69
      %s71 = sphi 0, %s69
      %s72 = sphi 0, %s71
      %s86 = sphi 0, %s72
      %s92 = sphi 0, %s94
      %s95 = sphi 0, %s92
      %s96 = sphi 0, %s95
      %s112 = sphi 0, %s96
      %s118 = sphi 0, %s120
      %s121 = sphi 0, %s118
      %s122 = sphi 0, %s121
      %s138 = sphi 0, %s122
      %s144 = sphi 0, %s146
      %s147 = sphi 0, %s144
      %s148 = sphi 0, %s147
      %s164 = sphi 0, %s148
      %s170 = sphi 0, %s172
      %s173 = sphi 0, %s170
      %s174 = sphi 0, %s173
      %s190 = sphi 0, %s174
      %s196 = sphi 0, %s198
      %s199 = sphi 0, %s196
      %s200 = sphi 0, %s199
      %s216 = sphi 0, %s200
      %s222 = sphi 0, %s224
      %s225 = sphi 0, %s222
      %s226 = sphi 0, %s225
      %s242 = sphi 0, %s226
      %s246 = sphi 0, %s246
      %s248 = sphi 0, %s246
      %s249 = sphi 0, %s248
      %s263 = sphi 0, %s249
      %s267 = sphi 0, %s267
      %s269 = sphi 0, %s267
      %s270 = sphi 0, %s269
      %s284 = sphi 0, %s270
      %s290 = sphi 0, %s292
      %s293 = sphi 0, %s290
      %s294 = sphi 0, %s293
      %s310 = sphi 0, %s294
    $region4: #{tpu_custom_call.1} parent=1 // loop_header_branch
      %26 = sbr.rel (%p24) target = $region8
    $region5: #{tpu_custom_call.1} parent=1 // loop_body
      %s28 = ssub.s32 %s23, 1
      %s29 = ssub.s32 %s23, 2
      %s36 = sadd.s32 1, %s31
      %p37 = scmp.ge.s32.totalorder %s36, 2
      %s38 = scalar_select %p37, 0, %s36
      %s39 = sadd.s32 1, %s30
      %s40 = scalar_select %p37, %s39, %s30
      %p41 = scmp.ge.s32.totalorder %s40, 2
      %s42 = scalar_select %p41, 0, %s40
      %s43 = ssub.s32 %s30, %s42
      %p44 = scmp.eq.s32.totalorder %s43, 0
      %s46 = sadd.s32 %s45, 1
      %s47 = scalar_select %p44, %s45, %s46
      %p50 = pneg %p44
      %p51 = scmp.eq.s32.totalorder %s23, 3
      %p52 = por %p50, %p51
      %p53 = scmp.ne.s32.totalorder %s45, %s48
      %p54 = scmp.eq.s32.totalorder %s23, 0
      %p55 = por %p53, %p54
      %p56 = scmp.ne.s32.totalorder %s45, %s48
      %p57 = scmp.eq.s32.totalorder %s28, 3
      %p58 = por %p56, %p57
      %p59 = scmp.ne.s32.totalorder %s48, %s49
      %p60 = scmp.eq.s32.totalorder %s28, 0
      %p61 = por %p59, %p60
      %p62 = scmp.ne.s32.totalorder %s48, %s49
      %p63 = scmp.eq.s32.totalorder %s29, 3
      %p64 = por %p62, %p63
      %p66 = scmp.ne.s32.totalorder %s49, %s65
      %p67 = scmp.eq.s32.totalorder %s29, 0
      %p68 = por %p66, %p67
      %s70 = sadd.s32 %s69, 1
      %p73 = scmp.eq.s32.totalorder %s23, 3
      %p74 = scmp.ne.s32.totalorder %s69, %s71
      %p75 = scmp.eq.s32.totalorder %s23, 0
      %p76 = por %p74, %p75
      %p77 = scmp.ne.s32.totalorder %s69, %s71
      %p78 = scmp.eq.s32.totalorder %s28, 3
      %p79 = por %p77, %p78
      %p80 = scmp.ne.s32.totalorder %s71, %s72
      %p81 = scmp.eq.s32.totalorder %s28, 0
      %p82 = por %p80, %p81
      %p83 = scmp.ne.s32.totalorder %s71, %s72
      %p84 = scmp.eq.s32.totalorder %s29, 3
      %p85 = por %p83, %p84
      %p87 = scmp.ne.s32.totalorder %s72, %s86
      %p88 = scmp.eq.s32.totalorder %s29, 0
      %p89 = por %p87, %p88
      %s90 = ssub.s32 %s31, %s38
      %p91 = scmp.eq.s32.totalorder %s90, 0
      %s93 = sadd.s32 %s92, 1
      %s94 = scalar_select %p91, %s92, %s93
      %p97 = pneg %p91
      %p98 = scmp.eq.s32.totalorder %s23, 3
      %p99 = por %p97, %p98
      %p100 = scmp.ne.s32.totalorder %s92, %s95
      %p101 = scmp.eq.s32.totalorder %s23, 0
      %p102 = por %p100, %p101
      %p103 = scmp.ne.s32.totalorder %s92, %s95
      %p104 = scmp.eq.s32.totalorder %s28, 3
      %p105 = por %p103, %p104
      %p106 = scmp.ne.s32.totalorder %s95, %s96
      %p107 = scmp.eq.s32.totalorder %s28, 0
      %p108 = por %p106, %p107
      %p109 = scmp.ne.s32.totalorder %s95, %s96
      %p110 = scmp.eq.s32.totalorder %s29, 3
      %p111 = por %p109, %p110
      %p113 = scmp.ne.s32.totalorder %s96, %s112
      %p114 = scmp.eq.s32.totalorder %s29, 0
      %p115 = por %p113, %p114
      %s116 = ssub.s32 %s31, %s38
      %p117 = scmp.eq.s32.totalorder %s116, 0
      %s119 = sadd.s32 %s118, 1
      %s120 = scalar_select %p117, %s118, %s119
      %p123 = pneg %p117
      %p124 = scmp.eq.s32.totalorder %s23, 3
      %p125 = por %p123, %p124
      %p126 = scmp.ne.s32.totalorder %s118, %s121
      %p127 = scmp.eq.s32.totalorder %s23, 0
      %p128 = por %p126, %p127
      %p129 = scmp.ne.s32.totalorder %s118, %s121
      %p130 = scmp.eq.s32.totalorder %s28, 3
      %p131 = por %p129, %p130
      %p132 = scmp.ne.s32.totalorder %s121, %s122
      %p133 = scmp.eq.s32.totalorder %s28, 0
      %p134 = por %p132, %p133
      %p135 = scmp.ne.s32.totalorder %s121, %s122
      %p136 = scmp.eq.s32.totalorder %s29, 3
      %p137 = por %p135, %p136
      %p139 = scmp.ne.s32.totalorder %s122, %s138
      %p140 = scmp.eq.s32.totalorder %s29, 0
      %p141 = por %p139, %p140
      %s142 = ssub.s32 %s31, %s38
      %p143 = scmp.eq.s32.totalorder %s142, 0
      %s145 = sadd.s32 %s144, 1
      %s146 = scalar_select %p143, %s144, %s145
      %p149 = pneg %p143
      %p150 = scmp.eq.s32.totalorder %s23, 3
      %p151 = por %p149, %p150
      %p152 = scmp.ne.s32.totalorder %s144, %s147
      %p153 = scmp.eq.s32.totalorder %s23, 0
      %p154 = por %p152, %p153
      %p155 = scmp.ne.s32.totalorder %s144, %s147
      %p156 = scmp.eq.s32.totalorder %s28, 3
      %p157 = por %p155, %p156
      %p158 = scmp.ne.s32.totalorder %s147, %s148
      %p159 = scmp.eq.s32.totalorder %s28, 0
      %p160 = por %p158, %p159
      %p161 = scmp.ne.s32.totalorder %s147, %s148
      %p162 = scmp.eq.s32.totalorder %s29, 3
      %p163 = por %p161, %p162
      %p165 = scmp.ne.s32.totalorder %s148, %s164
      %p166 = scmp.eq.s32.totalorder %s29, 0
      %p167 = por %p165, %p166
      %s168 = ssub.s32 %s31, %s38
      %p169 = scmp.eq.s32.totalorder %s168, 0
      %s171 = sadd.s32 %s170, 1
      %s172 = scalar_select %p169, %s170, %s171
      %p175 = pneg %p169
      %p176 = scmp.eq.s32.totalorder %s23, 3
      %p177 = por %p175, %p176
      %p178 = scmp.ne.s32.totalorder %s170, %s173
      %p179 = scmp.eq.s32.totalorder %s23, 0
      %p180 = por %p178, %p179
      %p181 = scmp.ne.s32.totalorder %s170, %s173
      %p182 = scmp.eq.s32.totalorder %s28, 3
      %p183 = por %p181, %p182
      %p184 = scmp.ne.s32.totalorder %s173, %s174
      %p185 = scmp.eq.s32.totalorder %s28, 0
      %p186 = por %p184, %p185
      %p187 = scmp.ne.s32.totalorder %s173, %s174
      %p188 = scmp.eq.s32.totalorder %s29, 3
      %p189 = por %p187, %p188
      %p191 = scmp.ne.s32.totalorder %s174, %s190
      %p192 = scmp.eq.s32.totalorder %s29, 0
      %p193 = por %p191, %p192
      %s194 = ssub.s32 %s31, %s38
      %p195 = scmp.eq.s32.totalorder %s194, 0
      %s197 = sadd.s32 %s196, 1
      %s198 = scalar_select %p195, %s196, %s197
      %p201 = pneg %p195
      %p202 = scmp.eq.s32.totalorder %s23, 3
      %p203 = por %p201, %p202
      %p204 = scmp.ne.s32.totalorder %s196, %s199
      %p205 = scmp.eq.s32.totalorder %s23, 0
      %p206 = por %p204, %p205
      %p207 = scmp.ne.s32.totalorder %s196, %s199
      %p208 = scmp.eq.s32.totalorder %s28, 3
      %p209 = por %p207, %p208
      %p210 = scmp.ne.s32.totalorder %s199, %s200
      %p211 = scmp.eq.s32.totalorder %s28, 0
      %p212 = por %p210, %p211
      %p213 = scmp.ne.s32.totalorder %s199, %s200
      %p214 = scmp.eq.s32.totalorder %s29, 3
      %p215 = por %p213, %p214
      %p217 = scmp.ne.s32.totalorder %s200, %s216
      %p218 = scmp.eq.s32.totalorder %s29, 0
      %p219 = por %p217, %p218
      %s220 = ssub.s32 %s31, %s38
      %p221 = scmp.eq.s32.totalorder %s220, 0
      %s223 = sadd.s32 %s222, 1
      %s224 = scalar_select %p221, %s222, %s223
      %p227 = pneg %p221
      %p228 = scmp.eq.s32.totalorder %s23, 3
      %p229 = por %p227, %p228
      %p230 = scmp.ne.s32.totalorder %s222, %s225
      %p231 = scmp.eq.s32.totalorder %s23, 0
      %p232 = por %p230, %p231
      %p233 = scmp.ne.s32.totalorder %s222, %s225
      %p234 = scmp.eq.s32.totalorder %s28, 3
      %p235 = por %p233, %p234
      %p236 = scmp.ne.s32.totalorder %s225, %s226
      %p237 = scmp.eq.s32.totalorder %s28, 0
      %p238 = por %p236, %p237
      %p239 = scmp.ne.s32.totalorder %s225, %s226
      %p240 = scmp.eq.s32.totalorder %s29, 3
      %p241 = por %p239, %p240
      %p243 = scmp.ne.s32.totalorder %s226, %s242
      %p244 = scmp.eq.s32.totalorder %s29, 0
      %p245 = por %p243, %p244
      %s247 = sadd.s32 %s246, 1
      %p250 = scmp.eq.s32.totalorder %s23, 3
      %p251 = scmp.ne.s32.totalorder %s246, %s248
      %p252 = scmp.eq.s32.totalorder %s23, 0
      %p253 = por %p251, %p252
      %p254 = scmp.ne.s32.totalorder %s246, %s248
      %p255 = scmp.eq.s32.totalorder %s28, 3
      %p256 = por %p254, %p255
      %p257 = scmp.ne.s32.totalorder %s248, %s249
      %p258 = scmp.eq.s32.totalorder %s28, 0
      %p259 = por %p257, %p258
      %p260 = scmp.ne.s32.totalorder %s248, %s249
      %p261 = scmp.eq.s32.totalorder %s29, 3
      %p262 = por %p260, %p261
      %p264 = scmp.ne.s32.totalorder %s249, %s263
      %p265 = scmp.eq.s32.totalorder %s29, 0
      %p266 = por %p264, %p265
      %s268 = sadd.s32 %s267, 1
      %p271 = scmp.eq.s32.totalorder %s23, 3
      %p272 = scmp.ne.s32.totalorder %s267, %s269
      %p273 = scmp.eq.s32.totalorder %s23, 0
      %p274 = por %p272, %p273
      %p275 = scmp.ne.s32.totalorder %s267, %s269
      %p276 = scmp.eq.s32.totalorder %s28, 3
      %p277 = por %p275, %p276
      %p278 = scmp.ne.s32.totalorder %s269, %s270
      %p279 = scmp.eq.s32.totalorder %s28, 0
      %p280 = por %p278, %p279
      %p281 = scmp.ne.s32.totalorder %s269, %s270
      %p282 = scmp.eq.s32.totalorder %s29, 3
      %p283 = por %p281, %p282
      %p285 = scmp.ne.s32.totalorder %s270, %s284
      %p286 = scmp.eq.s32.totalorder %s29, 0
      %p287 = por %p285, %p286
      %s288 = ssub.s32 %s30, %s42
      %p289 = scmp.eq.s32.totalorder %s288, 0
      %s291 = sadd.s32 %s290, 1
      %s292 = scalar_select %p289, %s290, %s291
      %p295 = pneg %p289
      %p296 = scmp.eq.s32.totalorder %s23, 3
      %p297 = por %p295, %p296
      %p298 = scmp.ne.s32.totalorder %s290, %s293
      %p299 = scmp.eq.s32.totalorder %s23, 0
      %p300 = por %p298, %p299
      %p301 = scmp.ne.s32.totalorder %s290, %s293
      %p302 = scmp.eq.s32.totalorder %s28, 3
      %p303 = por %p301, %p302
      %p304 = scmp.ne.s32.totalorder %s293, %s294
      %p305 = scmp.eq.s32.totalorder %s28, 0
      %p306 = por %p304, %p305
      %p307 = scmp.ne.s32.totalorder %s293, %s294
      %p308 = scmp.eq.s32.totalorder %s29, 3
      %p309 = por %p307, %p308
      %p311 = scmp.ne.s32.totalorder %s294, %s310
      %p312 = scmp.eq.s32.totalorder %s29, 0
      %p313 = por %p311, %p312
      %p314 = scmp.le.s32.totalorder 1, %s23
      %p315 = scmp.lt.s32.totalorder %s23, 5
      %p316 = pnand %p314, %p315
      %p317 = pneg %p316
      // Predicated region
      $region9: #{tpu_custom_call.1} parent=5 // pred_check
        _
      $region10: #{tpu_custom_call.1} parent=5 // pred_check_branch
        %319 = sbr.rel (%p316) target = $region12
      $region11: #{tpu_custom_call.1} parent=5 // pred_region
        %s320 = ssub.s32 %s23, 1
        // Predicated region
        $region13: #{tpu_custom_call.1} parent=11 // pred_check
          %p321 = pneg %p82
        $region14: #{tpu_custom_call.1} parent=11 // pred_check_branch
          %323 = sbr.rel (%p321) target = $region16
        $region15: #{tpu_custom_call.1} parent=11 // pred_region
          %s325 = ssub.s32 128, 128
          %326 = vsyncadd [#allocation7], %s325
          %s328 = sshll.u32 [#allocation6], 4
          %s329 = int_to_ptr.vmem [resolvable:$true] %s328
          %331 = dma.hbm_to_vmem [thread:$0]  %s1, 128, %s329, [#allocation7]
        $region16: #{tpu_custom_call.1} parent=11 // pred_fallthru
          _
        // Predicated region
        $region17: #{tpu_custom_call.1} parent=11 // pred_check
          %p332 = pneg %p259
        $region18: #{tpu_custom_call.1} parent=11 // pred_check_branch
          %334 = sbr.rel (%p332) target = $region20
        $region19: #{tpu_custom_call.1} parent=11 // pred_region
          %s336 = ssub.s32 512, 512
          %337 = vsyncadd [#allocation7], %s336
          %s338 = sshll.u32 [#allocation10], 4
          %s339 = int_to_ptr.vmem [resolvable:$true] %s338
          %344 = dma.hbm_to_vmem [thread:$0]  %s8, 512, %s339, [#allocation7], 128, 128, 8
        $region20: #{tpu_custom_call.1} parent=11 // pred_fallthru
          _
        // Predicated region
        $region21: #{tpu_custom_call.1} parent=11 // pred_check
          %p345 = pneg %p280
        $region22: #{tpu_custom_call.1} parent=11 // pred_check_branch
          %347 = sbr.rel (%p345) target = $region24
        $region23: #{tpu_custom_call.1} parent=11 // pred_region
          _
        $region24: #{tpu_custom_call.1} parent=11 // pred_fallthru
          _
      $region12: #{tpu_custom_call.1} parent=5 // pred_fallthru
        _
      %p348 = scmp.lt.s32.totalorder %s23, 4
      // Predicated region
      $region25: #{tpu_custom_call.1} parent=5 // pred_check
        %p349 = pneg %p348
      $region26: #{tpu_custom_call.1} parent=5 // pred_check_branch
        %351 = sbr.rel (%p349) target = $region28
      $region27: #{tpu_custom_call.1} parent=5 // pred_region
        // Predicated region
        $region29: #{tpu_custom_call.1} parent=27 // pred_check
          %p352 = pneg %p55
        $region30: #{tpu_custom_call.1} parent=27 // pred_check_branch
          %354 = sbr.rel (%p352) target = $region32
        $region31: #{tpu_custom_call.1} parent=27 // pred_region
          %s355 = sand.u32 %s23, 1
          %s356 = scalar_lea.sflag [#allocation4], %s355
          %s357 = sand.u32 %s45, 1
          %s358 = smul.addr %s357, 8
          %s359 = scalar_lea.vmem [#allocation3], %s358
          %s361 = ssub.s32 128, 128
          %362 = vsyncadd %s356, %s361
          %s363 = smul.addr %s30, 128
          %s364 = scalar_lea.hbm %s0, %s363
          %s366 = sshll.u32 %s359, 4
          %s367 = int_to_ptr.vmem [resolvable:$true] %s366
          %369 = dma.hbm_to_vmem [thread:$0]  %s364, 128, %s367, %s356
        $region32: #{tpu_custom_call.1} parent=27 // pred_fallthru
          _
        // Predicated region
        $region33: #{tpu_custom_call.1} parent=27 // pred_check
          %p370 = pneg %p102
        $region34: #{tpu_custom_call.1} parent=27 // pred_check_branch
          %372 = sbr.rel (%p370) target = $region36
        $region35: #{tpu_custom_call.1} parent=27 // pred_region
          %s373 = sand.u32 %s23, 1
          %s374 = scalar_lea.sflag [#allocation4], %s373
          %s375 = sand.u32 %s92, 1
          %s376 = smul.addr %s375, 32
          %s377 = scalar_lea.vmem [#allocation8], %s376
          %s379 = ssub.s32 512, 512
          %380 = vsyncadd %s374, %s379
          %s381 = smul.addr %s31, 4
          %s382 = smul.addr %s381, 128
          %s383 = scalar_lea.hbm %s2, %s382
          %s384 = sshll.u32 %s377, 4
          %s385 = int_to_ptr.vmem [resolvable:$true] %s384
          %390 = dma.hbm_to_vmem [thread:$0]  %s383, 512, %s385, %s374, 128, 128, 8
        $region36: #{tpu_custom_call.1} parent=27 // pred_fallthru
          _
        // Predicated region
        $region37: #{tpu_custom_call.1} parent=27 // pred_check
          %p391 = pneg %p128
        $region38: #{tpu_custom_call.1} parent=27 // pred_check_branch
          %393 = sbr.rel (%p391) target = $region40
        $region39: #{tpu_custom_call.1} parent=27 // pred_region
          %p394 = scmp.lt.s32.totalorder %s31, 1
          %s395 = scalar_select %p394, %s31, 1
          %s396 = scalar_lea.vmem %s3, %s395
        $region40: #{tpu_custom_call.1} parent=27 // pred_fallthru
          _
        // Predicated region
        $region41: #{tpu_custom_call.1} parent=27 // pred_check
          %p397 = pneg %p154
        $region42: #{tpu_custom_call.1} parent=27 // pred_check_branch
          %399 = sbr.rel (%p397) target = $region44
        $region43: #{tpu_custom_call.1} parent=27 // pred_region
          %s400 = sand.u32 %s23, 1
          %s401 = scalar_lea.sflag [#allocation4], %s400
          %s402 = sand.u32 %s144, 1
          %s403 = smul.addr %s402, 32
          %s404 = scalar_lea.vmem [#allocation9], %s403
          %s406 = ssub.s32 512, 512
          %407 = vsyncadd %s401, %s406
          %s408 = smul.addr %s31, 4
          %s409 = smul.addr %s408, 128
          %s410 = scalar_lea.hbm %s4, %s409
          %s411 = sshll.u32 %s404, 4
          %s412 = int_to_ptr.vmem [resolvable:$true] %s411
          %417 = dma.hbm_to_vmem [thread:$0]  %s410, 512, %s412, %s401, 128, 128, 8
        $region44: #{tpu_custom_call.1} parent=27 // pred_fallthru
          _
        // Predicated region
        $region45: #{tpu_custom_call.1} parent=27 // pred_check
          %p418 = pneg %p180
        $region46: #{tpu_custom_call.1} parent=27 // pred_check_branch
          %420 = sbr.rel (%p418) target = $region48
        $region47: #{tpu_custom_call.1} parent=27 // pred_region
          %p421 = scmp.lt.s32.totalorder %s31, 1
          %s422 = scalar_select %p421, %s31, 1
          %s423 = scalar_lea.vmem %s5, %s422
        $region48: #{tpu_custom_call.1} parent=27 // pred_fallthru
          _
        // Predicated region
        $region49: #{tpu_custom_call.1} parent=27 // pred_check
          %p424 = pneg %p206
        $region50: #{tpu_custom_call.1} parent=27 // pred_check_branch
          %426 = sbr.rel (%p424) target = $region52
        $region51: #{tpu_custom_call.1} parent=27 // pred_region
          %p427 = scmp.lt.s32.totalorder %s31, 1
          %s428 = scalar_select %p427, %s31, 1
          %s429 = scalar_lea.vmem %s6, %s428
        $region52: #{tpu_custom_call.1} parent=27 // pred_fallthru
          _
        // Predicated region
        $region53: #{tpu_custom_call.1} parent=27 // pred_check
          %p430 = pneg %p232
        $region54: #{tpu_custom_call.1} parent=27 // pred_check_branch
          %432 = sbr.rel (%p430) target = $region56
        $region55: #{tpu_custom_call.1} parent=27 // pred_region
          %p433 = scmp.lt.s32.totalorder %s31, 1
          %s434 = scalar_select %p433, %s31, 1
          %s435 = scalar_lea.vmem %s7, %s434
        $region56: #{tpu_custom_call.1} parent=27 // pred_fallthru
          _
      $region28: #{tpu_custom_call.1} parent=5 // pred_fallthru
        _
      %p436 = scmp.le.s32.totalorder 1, %s23
      %p437 = scmp.lt.s32.totalorder %s23, 5
      %p438 = pnand %p436, %p437
      %p439 = pneg %p438
      // Predicated region
      $region57: #{tpu_custom_call.1} parent=5 // pred_check
        _
      $region58: #{tpu_custom_call.1} parent=5 // pred_check_branch
        %441 = sbr.rel (%p438) target = $region60
      $region59: #{tpu_custom_call.1} parent=5 // pred_region
        %s442 = ssub.s32 %s23, 1
        %s443 = sand.u32 %s28, 1
        %s444 = scalar_lea.sflag [#allocation4], %s443
        %s445 = sand.u32 %s48, 1
        %s446 = smul.addr %s445, 8
        %s447 = scalar_lea.vmem [#allocation3], %s446
        // Predicated region
        $region61: #{tpu_custom_call.1} parent=59 // pred_check
          %p448 = pneg %p61
        $region62: #{tpu_custom_call.1} parent=59 // pred_check_branch
          %450 = sbr.rel (%p448) target = $region64
        $region63: #{tpu_custom_call.1} parent=59 // pred_region
          %451 = dma.done %s444, 128
        $region64: #{tpu_custom_call.1} parent=59 // pred_fallthru
          _
        // Predicated region
        $region65: #{tpu_custom_call.1} parent=59 // pred_check
          %p452 = pneg %p82
        $region66: #{tpu_custom_call.1} parent=59 // pred_check_branch
          %454 = sbr.rel (%p452) target = $region68
        $region67: #{tpu_custom_call.1} parent=59 // pred_region
          %455 = dma.done [#allocation7], 128
        $region68: #{tpu_custom_call.1} parent=59 // pred_fallthru
          _
        %s456 = sand.u32 %s28, 1
        %s457 = scalar_lea.sflag [#allocation4], %s456
        %s458 = sand.u32 %s95, 1
        %s459 = smul.addr %s458, 32
        %s460 = scalar_lea.vmem [#allocation8], %s459
        // Predicated region
        $region69: #{tpu_custom_call.1} parent=59 // pred_check
          %p461 = pneg %p108
        $region70: #{tpu_custom_call.1} parent=59 // pred_check_branch
          %463 = sbr.rel (%p461) target = $region72
        $region71: #{tpu_custom_call.1} parent=59 // pred_region
          %464 = dma.done %s457, 512
        $region72: #{tpu_custom_call.1} parent=59 // pred_fallthru
          _
        %s465 = sand.u32 %s28, 1
        %s466 = scalar_lea.sflag [#allocation4], %s465
        %s467 = sand.u32 %s147, 1
        %s468 = smul.addr %s467, 32
        %s469 = scalar_lea.vmem [#allocation9], %s468
        // Predicated region
        $region73: #{tpu_custom_call.1} parent=59 // pred_check
          %p470 = pneg %p160
        $region74: #{tpu_custom_call.1} parent=59 // pred_check_branch
          %472 = sbr.rel (%p470) target = $region76
        $region75: #{tpu_custom_call.1} parent=59 // pred_region
          %473 = dma.done %s466, 512
        $region76: #{tpu_custom_call.1} parent=59 // pred_fallthru
          _
        // Predicated region
        $region77: #{tpu_custom_call.1} parent=59 // pred_check
          %p474 = pneg %p259
        $region78: #{tpu_custom_call.1} parent=59 // pred_check_branch
          %476 = sbr.rel (%p474) target = $region80
        $region79: #{tpu_custom_call.1} parent=59 // pred_region
          %477 = dma.done [#allocation7], 512
        $region80: #{tpu_custom_call.1} parent=59 // pred_fallthru
          _
        %s478 = sand.u32 %s28, 1
        %s479 = scalar_lea.sflag [#allocation4], %s478
        %s480 = sand.u32 %s48, 1
        %s481 = smul.addr %s480, 8
        %s482 = scalar_lea.vmem [#allocation3], %s481
        %p483 = pneg %p61
        %p484 = pneg %p58
        %p485 = pneg %p82
        %p486 = pneg %p79
        %s487 = sand.u32 %s28, 1
        %s488 = scalar_lea.sflag [#allocation4], %s487
        %s489 = sand.u32 %s95, 1
        %s490 = smul.addr %s489, 32
        %s491 = scalar_lea.vmem [#allocation8], %s490
        %p492 = pneg %p108
        %p493 = pneg %p105
        %p494 = scmp.lt.s32.totalorder %s33, 1
        %s495 = scalar_select %p494, %s33, 1
        %s496 = scalar_lea.vmem %s3, %s495
        %p497 = pneg %p134
        %p498 = pneg %p131
        %s499 = sand.u32 %s28, 1
        %s500 = scalar_lea.sflag [#allocation4], %s499
        %s501 = sand.u32 %s147, 1
        %s502 = smul.addr %s501, 32
        %s503 = scalar_lea.vmem [#allocation9], %s502
        %p504 = pneg %p160
        %p505 = pneg %p157
        %p506 = scmp.lt.s32.totalorder %s33, 1
        %s507 = scalar_select %p506, %s33, 1
        %s508 = scalar_lea.vmem %s5, %s507
        %p509 = pneg %p186
        %p510 = pneg %p183
        %p511 = scmp.lt.s32.totalorder %s33, 1
        %s512 = scalar_select %p511, %s33, 1
        %s513 = scalar_lea.vmem %s6, %s512
        %p514 = pneg %p212
        %p515 = pneg %p209
        %p516 = scmp.lt.s32.totalorder %s33, 1
        %s517 = scalar_select %p516, %s33, 1
        %s518 = scalar_lea.vmem %s7, %s517
        %p519 = pneg %p238
        %p520 = pneg %p235
        %p521 = pneg %p259
        %p522 = pneg %p256
        %p523 = pneg %p280
        %p524 = pneg %p277
        %p525 = pneg %p306
        %p526 = pneg %p303
        %s527 = sand.u32 %s293, 1
        %s528 = scalar_lea.sflag [#allocation5], %s527
        %s529 = sand.u32 %s293, 1
        %s530 = scalar_lea.vmem [#allocation11], %s529
        %p531 = scmp.lt.s32.totalorder %s33, 1
        %s532 = scalar_select %p531, %s33, 1
        %s533 = scalar_lea.vmem %s3, %s532
        %p534 = scmp.lt.s32.totalorder %s33, 1
        %s535 = scalar_select %p534, %s33, 1
        %s536 = scalar_lea.vmem %s5, %s535
        %p537 = scmp.lt.s32.totalorder %s33, 1
        %s538 = scalar_select %p537, %s33, 1
        %s539 = scalar_lea.vmem %s6, %s538
        %p540 = scmp.lt.s32.totalorder %s33, 1
        %s541 = scalar_select %p540, %s33, 1
        %s542 = scalar_lea.vmem %s7, %s541
        %p543 = scmp.eq.s32.totalorder %s33, 0
        // Predicated region
        $region81: #{tpu_custom_call.1} parent=59 // pred_check
          %p544 = pneg %p543
        $region82: #{tpu_custom_call.1} parent=59 // pred_check_branch
          %546 = sbr.rel (%p544) target = $region84
        $region83: #{tpu_custom_call.1} parent=59 // pred_region
          %v547 = vld [vmem:[%s447] sm:$0xff]
          %v548 = vld [vmem:[#allocation6] sm:$0xff]
          %v549 = vadd.f32 %v547, %v548
          %vm550 = vcmask 261120
          %551 = vst.msk [vmem:[#allocation2] sm:$0xff] %vm550, %v549
        $region84: #{tpu_custom_call.1} parent=59 // pred_fallthru
          _
        %v552 = vld [vmem:[#allocation2] sm:$0xff]
        %v553 = vld [vmem:[%s460] sm:$0xff]
        %v554 = vld [vmem:[%s460 + $0x8] sm:$0xff]
        %v555 = vld [vmem:[%s460 + $0x10] sm:$0xff]
        %v556 = vld [vmem:[%s460 + $0x18] sm:$0xff]
        %v557 = vld [vmem:[%s533] sm:$0x1]
        %v559 = vlaneseq
        %v560 = vshrl.u32 %v559, 7
        %v561 = vsub.s32 0, %v560
        %v562 = vrot.slane %v557, %v561
        %vm564 = vcmask 261120
        %v566 = vsel %vm564, %v552, 0
        %568 = vmatprep.subr.mxu0 0.0
        %569 = vmatpush1.msra.mxu0 %v553
        %570 = vmatprep.subr.mxu0 0.0
        %571 = vmatpush1.msra.mxu0 %v554
        %572 = vmatprep.subr.mxu0 0.0
        %573 = vmatpush1.msra.mxu0 %v555
        %574 = vmatprep.subr.mxu0 0.0
        %575 = vmatpush1.msra.mxu0 %v556
        %576 = vmatprep.subr.mxu0 0.0
        %577 = vmatpush1.msra.mxu0 0.0
        %578 = vmatprep.subr.mxu0 0.0
        %579 = vmatpush1.msra.mxu0 0.0
        %580 = vmatprep.subr.mxu0 0.0
        %581 = vmatpush1.msra.mxu0 0.0
        %582 = vmatprep.subr.mxu0 0.0
        %583 = vmatpush1.msra.mxu0 0.0
        %584 = vmatprep.subr.mxu0 0.0
        %585 = vmatpush1.msra.mxu0 0.0
        %586 = vmatprep.subr.mxu0 0.0
        %587 = vmatpush1.msra.mxu0 0.0
        %588 = vmatprep.subr.mxu0 0.0
        %589 = vmatpush1.msra.mxu0 0.0
        %590 = vmatprep.subr.mxu0 0.0
        %591 = vmatpush1.msra.mxu0 0.0
        %592 = vmatprep.subr.mxu0 0.0
        %593 = vmatpush1.msra.mxu0 0.0
        %594 = vmatprep.subr.mxu0 0.0
        %595 = vmatpush1.msra.mxu0 0.0
        %596 = vmatprep.subr.mxu0 0.0
        %597 = vmatpush1.msra.mxu0 0.0
        %598 = vmatprep.subr.mxu0 0.0
        %599 = vmatpush1.msra.mxu0 0.0
        %600 = vmatprep.subr.mxu0 0.0
        %601 = vmatpush1.msra.mxu0 0.0
        %602 = vmatprep.subr.mxu0 0.0
        %603 = vmatpush1.msra.mxu0 0.0
        %604 = vmatprep.subr.mxu0 0.0
        %605 = vmatpush1.msra.mxu0 0.0
        %606 = vmatprep.subr.mxu0 0.0
        %607 = vmatpush1.msra.mxu0 0.0
        %608 = vmatprep.subr.mxu0 0.0
        %609 = vmatpush1.msra.mxu0 0.0
        %610 = vmatprep.subr.mxu0 0.0
        %611 = vmatpush1.msra.mxu0 0.0
        %612 = vmatprep.subr.mxu0 0.0
        %613 = vmatpush1.msra.mxu0 0.0
        %614 = vmatprep.subr.mxu0 0.0
        %615 = vmatpush1.msra.mxu0 0.0
        %616 = vmatprep.subr.mxu0 0.0
        %617 = vmatpush1.msra.mxu0 0.0
        %618 = vmatprep.subr.mxu0 0.0
        %619 = vmatpush1.msra.mxu0 0.0
        %620 = vmatprep.subr.mxu0 0.0
        %621 = vmatpush1.msra.mxu0 0.0
        %622 = vmatprep.subr.mxu0 0.0
        %623 = vmatpush1.msra.mxu0 0.0
        %624 = vmatprep.subr.mxu0 0.0
        %625 = vmatpush1.msra.mxu0 0.0
        %626 = vmatprep.subr.mxu0 0.0
        %627 = vmatpush1.msra.mxu0 0.0
        %628 = vmatprep.subr.mxu0 0.0
        %629 = vmatpush1.msra.mxu0 0.0
        %630 = vmatprep.subr.mxu0 0.0
        %631 = vmatpush1.msra.mxu0 0.0
        %632 = vmatprep.mubr.f32.mxu0 0.0
        %633 = vmatmul.mubr.f32.gmra.mrb[0].mxu0 %v566
        %v634 = vpop.f32.mrb[0].mxu0
        %v635 = vadd.f32 %v562, %v634
        %v636 = vpop.f32.mrb[0].mxu0
        %637 = vdwg.mxu0
        %639 = vrot.lane.b32.xlu0 %v635, 120
        %v640 = vpop.permute.xlu0 %639
        %642 = vrot.lane.b32.xlu0 %v635, 112
        %v643 = vpop.permute.xlu0 %642
        %645 = vrot.lane.b32.xlu0 %v635, 104
        %v646 = vpop.permute.xlu0 %645
        %v648 = vcombine.low %v635, %v643
        %v649 = vcombine.high %v635, %v643
        %v651 = vunpack.c.l.s4 1983009808
        %v652 = vunpack.c.0.s8 %v651
        %v653 = vlaneseq
        %v654 = vshrl.u32 %v653, 7
        %v655 = vsub.s32 %v652, %v654
        %v656 = vrot.slane %v648, %v655
        %v658 = vunpack.c.l.s4 1983009808
        %v659 = vunpack.c.0.s8 %v658
        %v660 = vlaneseq
        %v661 = vshrl.u32 %v660, 7
        %v662 = vsub.s32 %v659, %v661
        %v663 = vrot.slane %v649, %v662
        %v664 = vcombine.low %v640, %v646
        %v665 = vcombine.high %v640, %v646
        %v667 = vunpack.c.l.s4 1983009808
        %v668 = vunpack.c.0.s8 %v667
        %v669 = vlaneseq
        %v670 = vshrl.u32 %v669, 7
        %v671 = vsub.s32 %v668, %v670
        %v672 = vrot.slane %v664, %v671
        %v674 = vunpack.c.l.s4 1983009808
        %v675 = vunpack.c.0.s8 %v674
        %v676 = vlaneseq
        %v677 = vshrl.u32 %v676, 7
        %v678 = vsub.s32 %v675, %v677
        %v679 = vrot.slane %v665, %v678
        %v680 = vcombine.low %v656, %v672
        %v681 = vcombine.high %v656, %v672
        %v683 = vunpack.c.l.s4 1934713408
        %v684 = vunpack.c.0.s8 %v683
        %v685 = vlaneseq
        %v686 = vshrl.u32 %v685, 7
        %v687 = vsub.s32 %v684, %v686
        %v688 = vrot.slane %v680, %v687
        %v690 = vunpack.c.l.s4 1934713408
        %v691 = vunpack.c.0.s8 %v690
        %v692 = vlaneseq
        %v693 = vshrl.u32 %v692, 7
        %v694 = vsub.s32 %v691, %v693
        %v695 = vrot.slane %v681, %v694
        %v696 = vcombine.low %v663, %v679
        %v697 = vcombine.high %v663, %v679
        %v699 = vunpack.c.l.s4 1934713408
        %v700 = vunpack.c.0.s8 %v699
        %v701 = vlaneseq
        %v702 = vshrl.u32 %v701, 7
        %v703 = vsub.s32 %v700, %v702
        %v704 = vrot.slane %v696, %v703
        %v706 = vunpack.c.l.s4 1934713408
        %v707 = vunpack.c.0.s8 %v706
        %v708 = vlaneseq
        %v709 = vshrl.u32 %v708, 7
        %v710 = vsub.s32 %v707, %v709
        %v711 = vrot.slane %v697, %v710
        %v712 = vcombine.high %v688, 0.0
        %v713 = vcombine.high %v695, 0.0
        %v714 = vcombine.high %v704, 0.0
        %v715 = vcombine.high %v711, 0.0
        %v716 = vcombine.low %v688, %v695
        %v718 = vunpack.c.l.s4 1983009808
        %v719 = vunpack.c.0.s8 %v718
        %v720 = vlaneseq
        %v721 = vshrl.u32 %v720, 7
        %v722 = vsub.s32 %v719, %v721
        %v723 = vrot.slane %v716, %v722
        %v724 = vcombine.low %v712, %v713
        %v726 = vunpack.c.l.s4 1983009808
        %v727 = vunpack.c.0.s8 %v726
        %v728 = vlaneseq
        %v729 = vshrl.u32 %v728, 7
        %v730 = vsub.s32 %v727, %v729
        %v731 = vrot.slane %v724, %v730
        %v732 = vcombine.low %v704, %v711
        %v734 = vunpack.c.l.s4 1983009808
        %v735 = vunpack.c.0.s8 %v734
        %v736 = vlaneseq
        %v737 = vshrl.u32 %v736, 7
        %v738 = vsub.s32 %v735, %v737
        %v739 = vrot.slane %v732, %v738
        %v740 = vcombine.low %v714, %v715
        %v742 = vunpack.c.l.s4 1983009808
        %v743 = vunpack.c.0.s8 %v742
        %v744 = vlaneseq
        %v745 = vshrl.u32 %v744, 7
        %v746 = vsub.s32 %v743, %v745
        %v747 = vrot.slane %v740, %v746
        %v748 = vcombine.low %v723, %v731
        %v749 = vcombine.high %v723, %v731
        %v751 = vunpack.c.l.s4 1934713408
        %v752 = vunpack.c.0.s8 %v751
        %v753 = vlaneseq
        %v754 = vshrl.u32 %v753, 7
        %v755 = vsub.s32 %v752, %v754
        %v756 = vrot.slane %v748, %v755
        %v758 = vunpack.c.l.s4 1934713408
        %v759 = vunpack.c.0.s8 %v758
        %v760 = vlaneseq
        %v761 = vshrl.u32 %v760, 7
        %v762 = vsub.s32 %v759, %v761
        %v763 = vrot.slane %v749, %v762
        %v764 = vcombine.low %v739, %v747
        %v765 = vcombine.high %v739, %v747
        %v767 = vunpack.c.l.s4 1934713408
        %v768 = vunpack.c.0.s8 %v767
        %v769 = vlaneseq
        %v770 = vshrl.u32 %v769, 7
        %v771 = vsub.s32 %v768, %v770
        %v772 = vrot.slane %v764, %v771
        %v774 = vunpack.c.l.s4 1934713408
        %v775 = vunpack.c.0.s8 %v774
        %v776 = vlaneseq
        %v777 = vshrl.u32 %v776, 7
        %v778 = vsub.s32 %v775, %v777
        %v779 = vrot.slane %v765, %v778
        %v780 = vcombine.low %v756, %v772
        %v781 = vcombine.high %v756, %v772
        %v782 = vcombine.low %v763, %v779
        %v783 = vcombine.high %v763, %v779
        %784 = vrot.lane.b32.xlu0 %v635, 96
        %v785 = vpop.permute.xlu0 %784
        %786 = vrot.lane.b32.xlu0 %v640, 96
        %v787 = vpop.permute.xlu0 %786
        %788 = vrot.lane.b32.xlu0 %v643, 96
        %v789 = vpop.permute.xlu0 %788
        %790 = vrot.lane.b32.xlu0 %v646, 96
        %v791 = vpop.permute.xlu0 %790
        %v796 = vcombine.low %v785, %v789
        %v797 = vcombine.high %v785, %v789
        %v799 = vunpack.c.l.s4 1983009808
        %v800 = vunpack.c.0.s8 %v799
        %v801 = vlaneseq
        %v802 = vshrl.u32 %v801, 7
        %v803 = vsub.s32 %v800, %v802
        %v804 = vrot.slane %v796, %v803
        %v806 = vunpack.c.l.s4 1983009808
        %v807 = vunpack.c.0.s8 %v806
        %v808 = vlaneseq
        %v809 = vshrl.u32 %v808, 7
        %v810 = vsub.s32 %v807, %v809
        %v811 = vrot.slane %v797, %v810
        %v812 = vcombine.low %v787, %v791
        %v813 = vcombine.high %v787, %v791
        %v815 = vunpack.c.l.s4 1983009808
        %v816 = vunpack.c.0.s8 %v815
        %v817 = vlaneseq
        %v818 = vshrl.u32 %v817, 7
        %v819 = vsub.s32 %v816, %v818
        %v820 = vrot.slane %v812, %v819
        %v822 = vunpack.c.l.s4 1983009808
        %v823 = vunpack.c.0.s8 %v822
        %v824 = vlaneseq
        %v825 = vshrl.u32 %v824, 7
        %v826 = vsub.s32 %v823, %v825
        %v827 = vrot.slane %v813, %v826
        %v828 = vcombine.low %v804, %v820
        %v829 = vcombine.high %v804, %v820
        %v831 = vunpack.c.l.s4 1934713408
        %v832 = vunpack.c.0.s8 %v831
        %v833 = vlaneseq
        %v834 = vshrl.u32 %v833, 7
        %v835 = vsub.s32 %v832, %v834
        %v836 = vrot.slane %v828, %v835
        %v838 = vunpack.c.l.s4 1934713408
        %v839 = vunpack.c.0.s8 %v838
        %v840 = vlaneseq
        %v841 = vshrl.u32 %v840, 7
        %v842 = vsub.s32 %v839, %v841
        %v843 = vrot.slane %v829, %v842
        %v844 = vcombine.low %v811, %v827
        %v845 = vcombine.high %v811, %v827
        %v847 = vunpack.c.l.s4 1934713408
        %v848 = vunpack.c.0.s8 %v847
        %v849 = vlaneseq
        %v850 = vshrl.u32 %v849, 7
        %v851 = vsub.s32 %v848, %v850
        %v852 = vrot.slane %v844, %v851
        %v854 = vunpack.c.l.s4 1934713408
        %v855 = vunpack.c.0.s8 %v854
        %v856 = vlaneseq
        %v857 = vshrl.u32 %v856, 7
        %v858 = vsub.s32 %v855, %v857
        %v859 = vrot.slane %v845, %v858
        %v860 = vcombine.high %v836, 0.0
        %v861 = vcombine.high %v843, 0.0
        %v862 = vcombine.high %v852, 0.0
        %v863 = vcombine.high %v859, 0.0
        %v864 = vcombine.low %v836, %v843
        %v866 = vunpack.c.l.s4 1983009808
        %v867 = vunpack.c.0.s8 %v866
        %v868 = vlaneseq
        %v869 = vshrl.u32 %v868, 7
        %v870 = vsub.s32 %v867, %v869
        %v871 = vrot.slane %v864, %v870
        %v872 = vcombine.low %v860, %v861
        %v874 = vunpack.c.l.s4 1983009808
        %v875 = vunpack.c.0.s8 %v874
        %v876 = vlaneseq
        %v877 = vshrl.u32 %v876, 7
        %v878 = vsub.s32 %v875, %v877
        %v879 = vrot.slane %v872, %v878
        %v880 = vcombine.low %v852, %v859
        %v882 = vunpack.c.l.s4 1983009808
        %v883 = vunpack.c.0.s8 %v882
        %v884 = vlaneseq
        %v885 = vshrl.u32 %v884, 7
        %v886 = vsub.s32 %v883, %v885
        %v887 = vrot.slane %v880, %v886
        %v888 = vcombine.low %v862, %v863
        %v890 = vunpack.c.l.s4 1983009808
        %v891 = vunpack.c.0.s8 %v890
        %v892 = vlaneseq
        %v893 = vshrl.u32 %v892, 7
        %v894 = vsub.s32 %v891, %v893
        %v895 = vrot.slane %v888, %v894
        %v896 = vcombine.low %v871, %v879
        %v897 = vcombine.high %v871, %v879
        %v899 = vunpack.c.l.s4 1934713408
        %v900 = vunpack.c.0.s8 %v899
        %v901 = vlaneseq
        %v902 = vshrl.u32 %v901, 7
        %v903 = vsub.s32 %v900, %v902
        %v904 = vrot.slane %v896, %v903
        %v906 = vunpack.c.l.s4 1934713408
        %v907 = vunpack.c.0.s8 %v906
        %v908 = vlaneseq
        %v909 = vshrl.u32 %v908, 7
        %v910 = vsub.s32 %v907, %v909
        %v911 = vrot.slane %v897, %v910
        %v912 = vcombine.low %v887, %v895
        %v913 = vcombine.high %v887, %v895
        %v915 = vunpack.c.l.s4 1934713408
        %v916 = vunpack.c.0.s8 %v915
        %v917 = vlaneseq
        %v918 = vshrl.u32 %v917, 7
        %v919 = vsub.s32 %v916, %v918
        %v920 = vrot.slane %v912, %v919
        %v922 = vunpack.c.l.s4 1934713408
        %v923 = vunpack.c.0.s8 %v922
        %v924 = vlaneseq
        %v925 = vshrl.u32 %v924, 7
        %v926 = vsub.s32 %v923, %v925
        %v927 = vrot.slane %v913, %v926
        %v928 = vcombine.low %v904, %v920
        %v929 = vcombine.high %v904, %v920
        %v930 = vcombine.low %v911, %v927
        %v931 = vcombine.high %v911, %v927
        %932 = vrot.lane.b32.xlu0 %v635, 64
        %v933 = vpop.permute.xlu0 %932
        %934 = vrot.lane.b32.xlu0 %v640, 64
        %v935 = vpop.permute.xlu0 %934
        %936 = vrot.lane.b32.xlu0 %v643, 64
        %v937 = vpop.permute.xlu0 %936
        %938 = vrot.lane.b32.xlu0 %v646, 64
        %v939 = vpop.permute.xlu0 %938
        %v944 = vcombine.low %v933, %v937
        %v945 = vcombine.high %v933, %v937
        %v947 = vunpack.c.l.s4 1983009808
        %v948 = vunpack.c.0.s8 %v947
        %v949 = vlaneseq
        %v950 = vshrl.u32 %v949, 7
        %v951 = vsub.s32 %v948, %v950
        %v952 = vrot.slane %v944, %v951
        %v954 = vunpack.c.l.s4 1983009808
        %v955 = vunpack.c.0.s8 %v954
        %v956 = vlaneseq
        %v957 = vshrl.u32 %v956, 7
        %v958 = vsub.s32 %v955, %v957
        %v959 = vrot.slane %v945, %v958
        %v960 = vcombine.low %v935, %v939
        %v961 = vcombine.high %v935, %v939
        %v963 = vunpack.c.l.s4 1983009808
        %v964 = vunpack.c.0.s8 %v963
        %v965 = vlaneseq
        %v966 = vshrl.u32 %v965, 7
        %v967 = vsub.s32 %v964, %v966
        %v968 = vrot.slane %v960, %v967
        %v970 = vunpack.c.l.s4 1983009808
        %v971 = vunpack.c.0.s8 %v970
        %v972 = vlaneseq
        %v973 = vshrl.u32 %v972, 7
        %v974 = vsub.s32 %v971, %v973
        %v975 = vrot.slane %v961, %v974
        %v976 = vcombine.low %v952, %v968
        %v977 = vcombine.high %v952, %v968
        %v979 = vunpack.c.l.s4 1934713408
        %v980 = vunpack.c.0.s8 %v979
        %v981 = vlaneseq
        %v982 = vshrl.u32 %v981, 7
        %v983 = vsub.s32 %v980, %v982
        %v984 = vrot.slane %v976, %v983
        %v986 = vunpack.c.l.s4 1934713408
        %v987 = vunpack.c.0.s8 %v986
        %v988 = vlaneseq
        %v989 = vshrl.u32 %v988, 7
        %v990 = vsub.s32 %v987, %v989
        %v991 = vrot.slane %v977, %v990
        %v992 = vcombine.low %v959, %v975
        %v993 = vcombine.high %v959, %v975
        %v995 = vunpack.c.l.s4 1934713408
        %v996 = vunpack.c.0.s8 %v995
        %v997 = vlaneseq
        %v998 = vshrl.u32 %v997, 7
        %v999 = vsub.s32 %v996, %v998
        %v1000 = vrot.slane %v992, %v999
        %v1002 = vunpack.c.l.s4 1934713408
        %v1003 = vunpack.c.0.s8 %v1002
        %v1004 = vlaneseq
        %v1005 = vshrl.u32 %v1004, 7
        %v1006 = vsub.s32 %v1003, %v1005
        %v1007 = vrot.slane %v993, %v1006
        %v1008 = vcombine.high %v984, 0.0
        %v1009 = vcombine.high %v991, 0.0
        %v1010 = vcombine.high %v1000, 0.0
        %v1011 = vcombine.high %v1007, 0.0
        %v1012 = vcombine.low %v984, %v991
        %v1014 = vunpack.c.l.s4 1983009808
        %v1015 = vunpack.c.0.s8 %v1014
        %v1016 = vlaneseq
        %v1017 = vshrl.u32 %v1016, 7
        %v1018 = vsub.s32 %v1015, %v1017
        %v1019 = vrot.slane %v1012, %v1018
        %v1020 = vcombine.low %v1008, %v1009
        %v1022 = vunpack.c.l.s4 1983009808
        %v1023 = vunpack.c.0.s8 %v1022
        %v1024 = vlaneseq
        %v1025 = vshrl.u32 %v1024, 7
        %v1026 = vsub.s32 %v1023, %v1025
        %v1027 = vrot.slane %v1020, %v1026
        %v1028 = vcombine.low %v1000, %v1007
        %v1030 = vunpack.c.l.s4 1983009808
        %v1031 = vunpack.c.0.s8 %v1030
        %v1032 = vlaneseq
        %v1033 = vshrl.u32 %v1032, 7
        %v1034 = vsub.s32 %v1031, %v1033
        %v1035 = vrot.slane %v1028, %v1034
        %v1036 = vcombine.low %v1010, %v1011
        %v1038 = vunpack.c.l.s4 1983009808
        %v1039 = vunpack.c.0.s8 %v1038
        %v1040 = vlaneseq
        %v1041 = vshrl.u32 %v1040, 7
        %v1042 = vsub.s32 %v1039, %v1041
        %v1043 = vrot.slane %v1036, %v1042
        %v1044 = vcombine.low %v1019, %v1027
        %v1045 = vcombine.high %v1019, %v1027
        %v1047 = vunpack.c.l.s4 1934713408
        %v1048 = vunpack.c.0.s8 %v1047
        %v1049 = vlaneseq
        %v1050 = vshrl.u32 %v1049, 7
        %v1051 = vsub.s32 %v1048, %v1050
        %v1052 = vrot.slane %v1044, %v1051
        %v1054 = vunpack.c.l.s4 1934713408
        %v1055 = vunpack.c.0.s8 %v1054
        %v1056 = vlaneseq
        %v1057 = vshrl.u32 %v1056, 7
        %v1058 = vsub.s32 %v1055, %v1057
        %v1059 = vrot.slane %v1045, %v1058
        %v1060 = vcombine.low %v1035, %v1043
        %v1061 = vcombine.high %v1035, %v1043
        %v1063 = vunpack.c.l.s4 1934713408
        %v1064 = vunpack.c.0.s8 %v1063
        %v1065 = vlaneseq
        %v1066 = vshrl.u32 %v1065, 7
        %v1067 = vsub.s32 %v1064, %v1066
        %v1068 = vrot.slane %v1060, %v1067
        %v1070 = vunpack.c.l.s4 1934713408
        %v1071 = vunpack.c.0.s8 %v1070
        %v1072 = vlaneseq
        %v1073 = vshrl.u32 %v1072, 7
        %v1074 = vsub.s32 %v1071, %v1073
        %v1075 = vrot.slane %v1061, %v1074
        %v1076 = vcombine.low %v1052, %v1068
        %v1077 = vcombine.high %v1052, %v1068
        %v1078 = vcombine.low %v1059, %v1075
        %v1079 = vcombine.high %v1059, %v1075
        %vm1080 = vcmask 64512
        %v1082 = vsel %vm1080, %v780, 0
        %v1085 = vsel %vm1080, %v928, 0
        %1087 = vmatprep.subr.mxu0 0.0
        %1088 = vmatpush1.xpose.msra.mxu0 %v1085
        %1089 = vmatprep.subr.mxu0 0.0
        %1090 = vmatpush1.xpose.msra.mxu0 0.0
        %1091 = vmatprep.subr.mxu0 0.0
        %1092 = vmatpush1.xpose.msra.mxu0 0.0
        %1093 = vmatprep.subr.mxu0 0.0
        %1094 = vmatpush1.xpose.msra.mxu0 0.0
        %1095 = vmatprep.subr.mxu0 0.0
        %1096 = vmatpush1.xpose.msra.mxu0 0.0
        %1097 = vmatprep.subr.mxu0 0.0
        %1098 = vmatpush1.xpose.msra.mxu0 0.0
        %1099 = vmatprep.subr.mxu0 0.0
        %1100 = vmatpush1.xpose.msra.mxu0 0.0
        %1101 = vmatprep.subr.mxu0 0.0
        %1102 = vmatpush1.xpose.msra.mxu0 0.0
        %1103 = vmatprep.subr.mxu0 0.0
        %1104 = vmatpush1.xpose.msra.mxu0 0.0
        %1105 = vmatprep.subr.mxu0 0.0
        %1106 = vmatpush1.xpose.msra.mxu0 0.0
        %1107 = vmatprep.subr.mxu0 0.0
        %1108 = vmatpush1.xpose.msra.mxu0 0.0
        %1109 = vmatprep.subr.mxu0 0.0
        %1110 = vmatpush1.xpose.msra.mxu0 0.0
        %1111 = vmatprep.subr.mxu0 0.0
        %1112 = vmatpush1.xpose.msra.mxu0 0.0
        %1113 = vmatprep.subr.mxu0 0.0
        %1114 = vmatpush1.xpose.msra.mxu0 0.0
        %1115 = vmatprep.subr.mxu0 0.0
        %1116 = vmatpush1.xpose.msra.mxu0 0.0
        %1117 = vmatprep.subr.mxu0 0.0
        %1118 = vmatpush1.xpose.msra.mxu0 0.0
        %1119 = vmatprep.subr.mxu0 0.0
        %1120 = vmatpush1.xpose.msra.mxu0 0.0
        %1121 = vmatprep.subr.mxu0 0.0
        %1122 = vmatpush1.xpose.msra.mxu0 0.0
        %1123 = vmatprep.subr.mxu0 0.0
        %1124 = vmatpush1.xpose.msra.mxu0 0.0
        %1125 = vmatprep.subr.mxu0 0.0
        %1126 = vmatpush1.xpose.msra.mxu0 0.0
        %1127 = vmatprep.subr.mxu0 0.0
        %1128 = vmatpush1.xpose.msra.mxu0 0.0
        %1129 = vmatprep.subr.mxu0 0.0
        %1130 = vmatpush1.xpose.msra.mxu0 0.0
        %1131 = vmatprep.subr.mxu0 0.0
        %1132 = vmatpush1.xpose.msra.mxu0 0.0
        %1133 = vmatprep.subr.mxu0 0.0
        %1134 = vmatpush1.xpose.msra.mxu0 0.0
        %1135 = vmatprep.subr.mxu0 0.0
        %1136 = vmatpush1.xpose.msra.mxu0 0.0
        %1137 = vmatprep.subr.mxu0 0.0
        %1138 = vmatpush1.xpose.msra.mxu0 0.0
        %1139 = vmatprep.subr.mxu0 0.0
        %1140 = vmatpush1.xpose.msra.mxu0 0.0
        %1141 = vmatprep.subr.mxu0 0.0
        %1142 = vmatpush1.xpose.msra.mxu0 0.0
        %1143 = vmatprep.subr.mxu0 0.0
        %1144 = vmatpush1.xpose.msra.mxu0 0.0
        %1145 = vmatprep.subr.mxu0 0.0
        %1146 = vmatpush1.xpose.msra.mxu0 0.0
        %1147 = vmatprep.subr.mxu0 0.0
        %1148 = vmatpush1.xpose.msra.mxu0 0.0
        %1149 = vmatprep.subr.mxu0 0.0
        %1150 = vmatpush1.xpose.msra.mxu0 0.0
        %1151 = vmatprep.mubr.f32.mxu0 0.0
        %1152 = vmatmul.mubr.f32.gmra.mrb[0].mxu0 %v1082
        %v1153 = vpop.f32.mrb[0].mxu0
        %v1154 = vadd.f32 0.0, %v1153
        %v1155 = vpop.f32.mrb[0].mxu0
        %1156 = vdwg.mxu0
        %v1158 = vsel %vm1080, %v781, 0
        %v1161 = vsel %vm1080, %v929, 0
        %1163 = vmatprep.subr.mxu0 0.0
        %1164 = vmatpush1.xpose.msra.mxu0 %v1161
        %1165 = vmatprep.subr.mxu0 0.0
        %1166 = vmatpush1.xpose.msra.mxu0 0.0
        %1167 = vmatprep.subr.mxu0 0.0
        %1168 = vmatpush1.xpose.msra.mxu0 0.0
        %1169 = vmatprep.subr.mxu0 0.0
        %1170 = vmatpush1.xpose.msra.mxu0 0.0
        %1171 = vmatprep.subr.mxu0 0.0
        %1172 = vmatpush1.xpose.msra.mxu0 0.0
        %1173 = vmatprep.subr.mxu0 0.0
        %1174 = vmatpush1.xpose.msra.mxu0 0.0
        %1175 = vmatprep.subr.mxu0 0.0
        %1176 = vmatpush1.xpose.msra.mxu0 0.0
        %1177 = vmatprep.subr.mxu0 0.0
        %1178 = vmatpush1.xpose.msra.mxu0 0.0
        %1179 = vmatprep.subr.mxu0 0.0
        %1180 = vmatpush1.xpose.msra.mxu0 0.0
        %1181 = vmatprep.subr.mxu0 0.0
        %1182 = vmatpush1.xpose.msra.mxu0 0.0
        %1183 = vmatprep.subr.mxu0 0.0
        %1184 = vmatpush1.xpose.msra.mxu0 0.0
        %1185 = vmatprep.subr.mxu0 0.0
        %1186 = vmatpush1.xpose.msra.mxu0 0.0
        %1187 = vmatprep.subr.mxu0 0.0
        %1188 = vmatpush1.xpose.msra.mxu0 0.0
        %1189 = vmatprep.subr.mxu0 0.0
        %1190 = vmatpush1.xpose.msra.mxu0 0.0
        %1191 = vmatprep.subr.mxu0 0.0
        %1192 = vmatpush1.xpose.msra.mxu0 0.0
        %1193 = vmatprep.subr.mxu0 0.0
        %1194 = vmatpush1.xpose.msra.mxu0 0.0
        %1195 = vmatprep.subr.mxu0 0.0
        %1196 = vmatpush1.xpose.msra.mxu0 0.0
        %1197 = vmatprep.subr.mxu0 0.0
        %1198 = vmatpush1.xpose.msra.mxu0 0.0
        %1199 = vmatprep.subr.mxu0 0.0
        %1200 = vmatpush1.xpose.msra.mxu0 0.0
        %1201 = vmatprep.subr.mxu0 0.0
        %1202 = vmatpush1.xpose.msra.mxu0 0.0
        %1203 = vmatprep.subr.mxu0 0.0
        %1204 = vmatpush1.xpose.msra.mxu0 0.0
        %1205 = vmatprep.subr.mxu0 0.0
        %1206 = vmatpush1.xpose.msra.mxu0 0.0
        %1207 = vmatprep.subr.mxu0 0.0
        %1208 = vmatpush1.xpose.msra.mxu0 0.0
        %1209 = vmatprep.subr.mxu0 0.0
        %1210 = vmatpush1.xpose.msra.mxu0 0.0
        %1211 = vmatprep.subr.mxu0 0.0
        %1212 = vmatpush1.xpose.msra.mxu0 0.0
        %1213 = vmatprep.subr.mxu0 0.0
        %1214 = vmatpush1.xpose.msra.mxu0 0.0
        %1215 = vmatprep.subr.mxu0 0.0
        %1216 = vmatpush1.xpose.msra.mxu0 0.0
        %1217 = vmatprep.subr.mxu0 0.0
        %1218 = vmatpush1.xpose.msra.mxu0 0.0
        %1219 = vmatprep.subr.mxu0 0.0
        %1220 = vmatpush1.xpose.msra.mxu0 0.0
        %1221 = vmatprep.subr.mxu0 0.0
        %1222 = vmatpush1.xpose.msra.mxu0 0.0
        %1223 = vmatprep.subr.mxu0 0.0
        %1224 = vmatpush1.xpose.msra.mxu0 0.0
        %1225 = vmatprep.subr.mxu0 0.0
        %1226 = vmatpush1.xpose.msra.mxu0 0.0
        %1227 = vmatprep.mubr.f32.mxu0 0.0
        %1228 = vmatmul.mubr.f32.gmra.mrb[0].mxu0 %v1158
        %v1229 = vpop.f32.mrb[0].mxu0
        %v1230 = vadd.f32 0.0, %v1229
        %v1231 = vpop.f32.mrb[0].mxu0
        %1232 = vdwg.mxu0
        %v1234 = vsel %vm1080, %v782, 0
        %v1237 = vsel %vm1080, %v930, 0
        %1239 = vmatprep.subr.mxu0 0.0
        %1240 = vmatpush1.xpose.msra.mxu0 %v1237
        %1241 = vmatprep.subr.mxu0 0.0
        %1242 = vmatpush1.xpose.msra.mxu0 0.0
        %1243 = vmatprep.subr.mxu0 0.0
        %1244 = vmatpush1.xpose.msra.mxu0 0.0
        %1245 = vmatprep.subr.mxu0 0.0
        %1246 = vmatpush1.xpose.msra.mxu0 0.0
        %1247 = vmatprep.subr.mxu0 0.0
        %1248 = vmatpush1.xpose.msra.mxu0 0.0
        %1249 = vmatprep.subr.mxu0 0.0
        %1250 = vmatpush1.xpose.msra.mxu0 0.0
        %1251 = vmatprep.subr.mxu0 0.0
        %1252 = vmatpush1.xpose.msra.mxu0 0.0
        %1253 = vmatprep.subr.mxu0 0.0
        %1254 = vmatpush1.xpose.msra.mxu0 0.0
        %1255 = vmatprep.subr.mxu0 0.0
        %1256 = vmatpush1.xpose.msra.mxu0 0.0
        %1257 = vmatprep.subr.mxu0 0.0
        %1258 = vmatpush1.xpose.msra.mxu0 0.0
        %1259 = vmatprep.subr.mxu0 0.0
        %1260 = vmatpush1.xpose.msra.mxu0 0.0
        %1261 = vmatprep.subr.mxu0 0.0
        %1262 = vmatpush1.xpose.msra.mxu0 0.0
        %1263 = vmatprep.subr.mxu0 0.0
        %1264 = vmatpush1.xpose.msra.mxu0 0.0
        %1265 = vmatprep.subr.mxu0 0.0
        %1266 = vmatpush1.xpose.msra.mxu0 0.0
        %1267 = vmatprep.subr.mxu0 0.0
        %1268 = vmatpush1.xpose.msra.mxu0 0.0
        %1269 = vmatprep.subr.mxu0 0.0
        %1270 = vmatpush1.xpose.msra.mxu0 0.0
        %1271 = vmatprep.subr.mxu0 0.0
        %1272 = vmatpush1.xpose.msra.mxu0 0.0
        %1273 = vmatprep.subr.mxu0 0.0
        %1274 = vmatpush1.xpose.msra.mxu0 0.0
        %1275 = vmatprep.subr.mxu0 0.0
        %1276 = vmatpush1.xpose.msra.mxu0 0.0
        %1277 = vmatprep.subr.mxu0 0.0
        %1278 = vmatpush1.xpose.msra.mxu0 0.0
        %1279 = vmatprep.subr.mxu0 0.0
        %1280 = vmatpush1.xpose.msra.mxu0 0.0
        %1281 = vmatprep.subr.mxu0 0.0
        %1282 = vmatpush1.xpose.msra.mxu0 0.0
        %1283 = vmatprep.subr.mxu0 0.0
        %1284 = vmatpush1.xpose.msra.mxu0 0.0
        %1285 = vmatprep.subr.mxu0 0.0
        %1286 = vmatpush1.xpose.msra.mxu0 0.0
        %1287 = vmatprep.subr.mxu0 0.0
        %1288 = vmatpush1.xpose.msra.mxu0 0.0
        %1289 = vmatprep.subr.mxu0 0.0
        %1290 = vmatpush1.xpose.msra.mxu0 0.0
        %1291 = vmatprep.subr.mxu0 0.0
        %1292 = vmatpush1.xpose.msra.mxu0 0.0
        %1293 = vmatprep.subr.mxu0 0.0
        %1294 = vmatpush1.xpose.msra.mxu0 0.0
        %1295 = vmatprep.subr.mxu0 0.0
        %1296 = vmatpush1.xpose.msra.mxu0 0.0
        %1297 = vmatprep.subr.mxu0 0.0
        %1298 = vmatpush1.xpose.msra.mxu0 0.0
        %1299 = vmatprep.subr.mxu0 0.0
        %1300 = vmatpush1.xpose.msra.mxu0 0.0
        %1301 = vmatprep.subr.mxu0 0.0
        %1302 = vmatpush1.xpose.msra.mxu0 0.0
        %1303 = vmatprep.mubr.f32.mxu0 0.0
        %1304 = vmatmul.mubr.f32.gmra.mrb[0].mxu0 %v1234
        %v1305 = vpop.f32.mrb[0].mxu0
        %v1306 = vadd.f32 0.0, %v1305
        %v1307 = vpop.f32.mrb[0].mxu0
        %1308 = vdwg.mxu0
        %v1310 = vsel %vm1080, %v783, 0
        %v1313 = vsel %vm1080, %v931, 0
        %1315 = vmatprep.subr.mxu0 0.0
        %1316 = vmatpush1.xpose.msra.mxu0 %v1313
        %1317 = vmatprep.subr.mxu0 0.0
        %1318 = vmatpush1.xpose.msra.mxu0 0.0
        %1319 = vmatprep.subr.mxu0 0.0
        %1320 = vmatpush1.xpose.msra.mxu0 0.0
        %1321 = vmatprep.subr.mxu0 0.0
        %1322 = vmatpush1.xpose.msra.mxu0 0.0
        %1323 = vmatprep.subr.mxu0 0.0
        %1324 = vmatpush1.xpose.msra.mxu0 0.0
        %1325 = vmatprep.subr.mxu0 0.0
        %1326 = vmatpush1.xpose.msra.mxu0 0.0
        %1327 = vmatprep.subr.mxu0 0.0
        %1328 = vmatpush1.xpose.msra.mxu0 0.0
        %1329 = vmatprep.subr.mxu0 0.0
        %1330 = vmatpush1.xpose.msra.mxu0 0.0
        %1331 = vmatprep.subr.mxu0 0.0
        %1332 = vmatpush1.xpose.msra.mxu0 0.0
        %1333 = vmatprep.subr.mxu0 0.0
        %1334 = vmatpush1.xpose.msra.mxu0 0.0
        %1335 = vmatprep.subr.mxu0 0.0
        %1336 = vmatpush1.xpose.msra.mxu0 0.0
        %1337 = vmatprep.subr.mxu0 0.0
        %1338 = vmatpush1.xpose.msra.mxu0 0.0
        %1339 = vmatprep.subr.mxu0 0.0
        %1340 = vmatpush1.xpose.msra.mxu0 0.0
        %1341 = vmatprep.subr.mxu0 0.0
        %1342 = vmatpush1.xpose.msra.mxu0 0.0
        %1343 = vmatprep.subr.mxu0 0.0
        %1344 = vmatpush1.xpose.msra.mxu0 0.0
        %1345 = vmatprep.subr.mxu0 0.0
        %1346 = vmatpush1.xpose.msra.mxu0 0.0
        %1347 = vmatprep.subr.mxu0 0.0
        %1348 = vmatpush1.xpose.msra.mxu0 0.0
        %1349 = vmatprep.subr.mxu0 0.0
        %1350 = vmatpush1.xpose.msra.mxu0 0.0
        %1351 = vmatprep.subr.mxu0 0.0
        %1352 = vmatpush1.xpose.msra.mxu0 0.0
        %1353 = vmatprep.subr.mxu0 0.0
        %1354 = vmatpush1.xpose.msra.mxu0 0.0
        %1355 = vmatprep.subr.mxu0 0.0
        %1356 = vmatpush1.xpose.msra.mxu0 0.0
        %1357 = vmatprep.subr.mxu0 0.0
        %1358 = vmatpush1.xpose.msra.mxu0 0.0
        %1359 = vmatprep.subr.mxu0 0.0
        %1360 = vmatpush1.xpose.msra.mxu0 0.0
        %1361 = vmatprep.subr.mxu0 0.0
        %1362 = vmatpush1.xpose.msra.mxu0 0.0
        %1363 = vmatprep.subr.mxu0 0.0
        %1364 = vmatpush1.xpose.msra.mxu0 0.0
        %1365 = vmatprep.subr.mxu0 0.0
        %1366 = vmatpush1.xpose.msra.mxu0 0.0
        %1367 = vmatprep.subr.mxu0 0.0
        %1368 = vmatpush1.xpose.msra.mxu0 0.0
        %1369 = vmatprep.subr.mxu0 0.0
        %1370 = vmatpush1.xpose.msra.mxu0 0.0
        %1371 = vmatprep.subr.mxu0 0.0
        %1372 = vmatpush1.xpose.msra.mxu0 0.0
        %1373 = vmatprep.subr.mxu0 0.0
        %1374 = vmatpush1.xpose.msra.mxu0 0.0
        %1375 = vmatprep.subr.mxu0 0.0
        %1376 = vmatpush1.xpose.msra.mxu0 0.0
        %1377 = vmatprep.subr.mxu0 0.0
        %1378 = vmatpush1.xpose.msra.mxu0 0.0
        %1379 = vmatprep.mubr.f32.mxu0 0.0
        %1380 = vmatmul.mubr.f32.gmra.mrb[0].mxu0 %v1310
        %v1381 = vpop.f32.mrb[0].mxu0
        %v1382 = vadd.f32 0.0, %v1381
        %v1383 = vpop.f32.mrb[0].mxu0
        %1384 = vdwg.mxu0
        %v1385 = vmul.f32 %v1154, 0.35355338
        %v1386 = vmul.f32 %v1230, 0.35355338
        %v1387 = vmul.f32 %v1306, 0.35355338
        %v1388 = vmul.f32 %v1382, 0.35355338
        %v1389 = vsel %vm1080, %v1385, -inf
        %1390 = vmax.xlane.f32.xlu0 %v1389
        %v1391 = vpop.xlane.xlu0 %1390
        %v1392 = vsel %vm1080, %v1386, -inf
        %1393 = vmax.xlane.f32.xlu0 %v1392
        %v1394 = vpop.xlane.xlu0 %1393
        %v1395 = vsel %vm1080, %v1387, -inf
        %1396 = vmax.xlane.f32.xlu0 %v1395
        %v1397 = vpop.xlane.xlu0 %1396
        %v1398 = vsel %vm1080, %v1388, -inf
        %1399 = vmax.xlane.f32.xlu0 %v1398
        %v1400 = vpop.xlane.xlu0 %1399
        %v1401 = vsub.f32 %v1385, %v1391
        %v1402 = vsub.f32 %v1386, %v1394
        %v1403 = vsub.f32 %v1387, %v1397
        %v1404 = vsub.f32 %v1388, %v1400
        %v1405 = vmul.f32 %v1401, 1.442695
        %v1406 = vpow.pop %v1405
        %v1407 = vmul.f32 %v1402, 1.442695
        %v1408 = vpow.pop %v1407
        %v1409 = vmul.f32 %v1403, 1.442695
        %v1410 = vpow.pop %v1409
        %v1411 = vmul.f32 %v1404, 1.442695
        %v1412 = vpow.pop %v1411
        %v1413 = vsel %vm1080, %v1406, 0.0
        %1414 = vadd.xlane.f32.xlu0 %v1413
        %v1415 = vpop.xlane.xlu0 %1414
        %v1416 = vsel %vm1080, %v1408, 0.0
        %1417 = vadd.xlane.f32.xlu0 %v1416
        %v1418 = vpop.xlane.xlu0 %1417
        %v1419 = vsel %vm1080, %v1410, 0.0
        %1420 = vadd.xlane.f32.xlu0 %v1419
        %v1421 = vpop.xlane.xlu0 %1420
        %v1422 = vsel %vm1080, %v1412, 0.0
        %1423 = vadd.xlane.f32.xlu0 %v1422
        %v1424 = vpop.xlane.xlu0 %1423
        %v1425 = vrcp.pop %v1415
        %v1426 = vrcp.pop %v1418
        %v1427 = vrcp.pop %v1421
        %v1428 = vrcp.pop %v1424
        %v1429 = vmul.f32 %v1406, %v1425
        %v1430 = vmul.f32 %v1408, %v1426
        %v1431 = vmul.f32 %v1410, %v1427
        %v1432 = vmul.f32 %v1412, %v1428
        %v1434 = vsel %vm1080, %v1429, 0
        %1436 = vmatprep.subr.mxu0 0.0
        %1437 = vmatpush1.msra.mxu0 %v1076
        %1438 = vmatprep.subr.mxu0 0.0
        %1439 = vmatpush1.msra.mxu0 0.0
        %1440 = vmatprep.subr.mxu0 0.0
        %1441 = vmatpush1.msra.mxu0 0.0
        %1442 = vmatprep.subr.mxu0 0.0
        %1443 = vmatpush1.msra.mxu0 0.0
        %1444 = vmatprep.subr.mxu0 0.0
        %1445 = vmatpush1.msra.mxu0 0.0
        %1446 = vmatprep.subr.mxu0 0.0
        %1447 = vmatpush1.msra.mxu0 0.0
        %1448 = vmatprep.subr.mxu0 0.0
        %1449 = vmatpush1.msra.mxu0 0.0
        %1450 = vmatprep.subr.mxu0 0.0
        %1451 = vmatpush1.msra.mxu0 0.0
        %1452 = vmatprep.subr.mxu0 0.0
        %1453 = vmatpush1.msra.mxu0 0.0
        %1454 = vmatprep.subr.mxu0 0.0
        %1455 = vmatpush1.msra.mxu0 0.0
        %1456 = vmatprep.subr.mxu0 0.0
        %1457 = vmatpush1.msra.mxu0 0.0
        %1458 = vmatprep.subr.mxu0 0.0
        %1459 = vmatpush1.msra.mxu0 0.0
        %1460 = vmatprep.subr.mxu0 0.0
        %1461 = vmatpush1.msra.mxu0 0.0
        %1462 = vmatprep.subr.mxu0 0.0
        %1463 = vmatpush1.msra.mxu0 0.0
        %1464 = vmatprep.subr.mxu0 0.0
        %1465 = vmatpush1.msra.mxu0 0.0
        %1466 = vmatprep.subr.mxu0 0.0
        %1467 = vmatpush1.msra.mxu0 0.0
        %1468 = vmatprep.subr.mxu0 0.0
        %1469 = vmatpush1.msra.mxu0 0.0
        %1470 = vmatprep.subr.mxu0 0.0
        %1471 = vmatpush1.msra.mxu0 0.0
        %1472 = vmatprep.subr.mxu0 0.0
        %1473 = vmatpush1.msra.mxu0 0.0
        %1474 = vmatprep.subr.mxu0 0.0
        %1475 = vmatpush1.msra.mxu0 0.0
        %1476 = vmatprep.subr.mxu0 0.0
        %1477 = vmatpush1.msra.mxu0 0.0
        %1478 = vmatprep.subr.mxu0 0.0
        %1479 = vmatpush1.msra.mxu0 0.0
        %1480 = vmatprep.subr.mxu0 0.0
        %1481 = vmatpush1.msra.mxu0 0.0
        %1482 = vmatprep.subr.mxu0 0.0
        %1483 = vmatpush1.msra.mxu0 0.0
        %1484 = vmatprep.subr.mxu0 0.0
        %1485 = vmatpush1.msra.mxu0 0.0
        %1486 = vmatprep.subr.mxu0 0.0
        %1487 = vmatpush1.msra.mxu0 0.0
        %1488 = vmatprep.subr.mxu0 0.0
        %1489 = vmatpush1.msra.mxu0 0.0
        %1490 = vmatprep.subr.mxu0 0.0
        %1491 = vmatpush1.msra.mxu0 0.0
        %1492 = vmatprep.subr.mxu0 0.0
        %1493 = vmatpush1.msra.mxu0 0.0
        %1494 = vmatprep.subr.mxu0 0.0
        %1495 = vmatpush1.msra.mxu0 0.0
        %1496 = vmatprep.subr.mxu0 0.0
        %1497 = vmatpush1.msra.mxu0 0.0
        %1498 = vmatprep.subr.mxu0 0.0
        %1499 = vmatpush1.msra.mxu0 0.0
        %1500 = vmatprep.mubr.f32.mxu0 0.0
        %1501 = vmatmul.mubr.f32.gmra.mrb[0].mxu0 %v1434
        %v1502 = vpop.f32.mrb[0].mxu0
        %v1503 = vadd.f32 0.0, %v1502
        %v1504 = vpop.f32.mrb[0].mxu0
        %1505 = vdwg.mxu0
        %v1507 = vsel %vm1080, %v1430, 0
        %1509 = vmatprep.subr.mxu0 0.0
        %1510 = vmatpush1.msra.mxu0 %v1077
        %1511 = vmatprep.subr.mxu0 0.0
        %1512 = vmatpush1.msra.mxu0 0.0
        %1513 = vmatprep.subr.mxu0 0.0
        %1514 = vmatpush1.msra.mxu0 0.0
        %1515 = vmatprep.subr.mxu0 0.0
        %1516 = vmatpush1.msra.mxu0 0.0
        %1517 = vmatprep.subr.mxu0 0.0
        %1518 = vmatpush1.msra.mxu0 0.0
        %1519 = vmatprep.subr.mxu0 0.0
        %1520 = vmatpush1.msra.mxu0 0.0
        %1521 = vmatprep.subr.mxu0 0.0
        %1522 = vmatpush1.msra.mxu0 0.0
        %1523 = vmatprep.subr.mxu0 0.0
        %1524 = vmatpush1.msra.mxu0 0.0
        %1525 = vmatprep.subr.mxu0 0.0
        %1526 = vmatpush1.msra.mxu0 0.0
        %1527 = vmatprep.subr.mxu0 0.0
        %1528 = vmatpush1.msra.mxu0 0.0
        %1529 = vmatprep.subr.mxu0 0.0
        %1530 = vmatpush1.msra.mxu0 0.0
        %1531 = vmatprep.subr.mxu0 0.0
        %1532 = vmatpush1.msra.mxu0 0.0
        %1533 = vmatprep.subr.mxu0 0.0
        %1534 = vmatpush1.msra.mxu0 0.0
        %1535 = vmatprep.subr.mxu0 0.0
        %1536 = vmatpush1.msra.mxu0 0.0
        %1537 = vmatprep.subr.mxu0 0.0
        %1538 = vmatpush1.msra.mxu0 0.0
        %1539 = vmatprep.subr.mxu0 0.0
        %1540 = vmatpush1.msra.mxu0 0.0
        %1541 = vmatprep.subr.mxu0 0.0
        %1542 = vmatpush1.msra.mxu0 0.0
        %1543 = vmatprep.subr.mxu0 0.0
        %1544 = vmatpush1.msra.mxu0 0.0
        %1545 = vmatprep.subr.mxu0 0.0
        %1546 = vmatpush1.msra.mxu0 0.0
        %1547 = vmatprep.subr.mxu0 0.0
        %1548 = vmatpush1.msra.mxu0 0.0
        %1549 = vmatprep.subr.mxu0 0.0
        %1550 = vmatpush1.msra.mxu0 0.0
        %1551 = vmatprep.subr.mxu0 0.0
        %1552 = vmatpush1.msra.mxu0 0.0
        %1553 = vmatprep.subr.mxu0 0.0
        %1554 = vmatpush1.msra.mxu0 0.0
        %1555 = vmatprep.subr.mxu0 0.0
        %1556 = vmatpush1.msra.mxu0 0.0
        %1557 = vmatprep.subr.mxu0 0.0
        %1558 = vmatpush1.msra.mxu0 0.0
        %1559 = vmatprep.subr.mxu0 0.0
        %1560 = vmatpush1.msra.mxu0 0.0
        %1561 = vmatprep.subr.mxu0 0.0
        %1562 = vmatpush1.msra.mxu0 0.0
        %1563 = vmatprep.subr.mxu0 0.0
        %1564 = vmatpush1.msra.mxu0 0.0
        %1565 = vmatprep.subr.mxu0 0.0
        %1566 = vmatpush1.msra.mxu0 0.0
        %1567 = vmatprep.subr.mxu0 0.0
        %1568 = vmatpush1.msra.mxu0 0.0
        %1569 = vmatprep.subr.mxu0 0.0
        %1570 = vmatpush1.msra.mxu0 0.0
        %1571 = vmatprep.subr.mxu0 0.0
        %1572 = vmatpush1.msra.mxu0 0.0
        %1573 = vmatprep.mubr.f32.mxu0 0.0
        %1574 = vmatmul.mubr.f32.gmra.mrb[0].mxu0 %v1507
        %v1575 = vpop.f32.mrb[0].mxu0
        %v1576 = vadd.f32 0.0, %v1575
        %v1577 = vpop.f32.mrb[0].mxu0
        %1578 = vdwg.mxu0
        %v1580 = vsel %vm1080, %v1431, 0
        %1582 = vmatprep.subr.mxu0 0.0
        %1583 = vmatpush1.msra.mxu0 %v1078
        %1584 = vmatprep.subr.mxu0 0.0
        %1585 = vmatpush1.msra.mxu0 0.0
        %1586 = vmatprep.subr.mxu0 0.0
        %1587 = vmatpush1.msra.mxu0 0.0
        %1588 = vmatprep.subr.mxu0 0.0
        %1589 = vmatpush1.msra.mxu0 0.0
        %1590 = vmatprep.subr.mxu0 0.0
        %1591 = vmatpush1.msra.mxu0 0.0
        %1592 = vmatprep.subr.mxu0 0.0
        %1593 = vmatpush1.msra.mxu0 0.0
        %1594 = vmatprep.subr.mxu0 0.0
        %1595 = vmatpush1.msra.mxu0 0.0
        %1596 = vmatprep.subr.mxu0 0.0
        %1597 = vmatpush1.msra.mxu0 0.0
        %1598 = vmatprep.subr.mxu0 0.0
        %1599 = vmatpush1.msra.mxu0 0.0
        %1600 = vmatprep.subr.mxu0 0.0
        %1601 = vmatpush1.msra.mxu0 0.0
        %1602 = vmatprep.subr.mxu0 0.0
        %1603 = vmatpush1.msra.mxu0 0.0
        %1604 = vmatprep.subr.mxu0 0.0
        %1605 = vmatpush1.msra.mxu0 0.0
        %1606 = vmatprep.subr.mxu0 0.0
        %1607 = vmatpush1.msra.mxu0 0.0
        %1608 = vmatprep.subr.mxu0 0.0
        %1609 = vmatpush1.msra.mxu0 0.0
        %1610 = vmatprep.subr.mxu0 0.0
        %1611 = vmatpush1.msra.mxu0 0.0
        %1612 = vmatprep.subr.mxu0 0.0
        %1613 = vmatpush1.msra.mxu0 0.0
        %1614 = vmatprep.subr.mxu0 0.0
        %1615 = vmatpush1.msra.mxu0 0.0
        %1616 = vmatprep.subr.mxu0 0.0
        %1617 = vmatpush1.msra.mxu0 0.0
        %1618 = vmatprep.subr.mxu0 0.0
        %1619 = vmatpush1.msra.mxu0 0.0
        %1620 = vmatprep.subr.mxu0 0.0
        %1621 = vmatpush1.msra.mxu0 0.0
        %1622 = vmatprep.subr.mxu0 0.0
        %1623 = vmatpush1.msra.mxu0 0.0
        %1624 = vmatprep.subr.mxu0 0.0
        %1625 = vmatpush1.msra.mxu0 0.0
        %1626 = vmatprep.subr.mxu0 0.0
        %1627 = vmatpush1.msra.mxu0 0.0
        %1628 = vmatprep.subr.mxu0 0.0
        %1629 = vmatpush1.msra.mxu0 0.0
        %1630 = vmatprep.subr.mxu0 0.0
        %1631 = vmatpush1.msra.mxu0 0.0
        %1632 = vmatprep.subr.mxu0 0.0
        %1633 = vmatpush1.msra.mxu0 0.0
        %1634 = vmatprep.subr.mxu0 0.0
        %1635 = vmatpush1.msra.mxu0 0.0
        %1636 = vmatprep.subr.mxu0 0.0
        %1637 = vmatpush1.msra.mxu0 0.0
        %1638 = vmatprep.subr.mxu0 0.0
        %1639 = vmatpush1.msra.mxu0 0.0
        %1640 = vmatprep.subr.mxu0 0.0
        %1641 = vmatpush1.msra.mxu0 0.0
        %1642 = vmatprep.subr.mxu0 0.0
        %1643 = vmatpush1.msra.mxu0 0.0
        %1644 = vmatprep.subr.mxu0 0.0
        %1645 = vmatpush1.msra.mxu0 0.0
        %1646 = vmatprep.mubr.f32.mxu0 0.0
        %1647 = vmatmul.mubr.f32.gmra.mrb[0].mxu0 %v1580
        %v1648 = vpop.f32.mrb[0].mxu0
        %v1649 = vadd.f32 0.0, %v1648
        %v1650 = vpop.f32.mrb[0].mxu0
        %1651 = vdwg.mxu0
        %v1653 = vsel %vm1080, %v1432, 0
        %1655 = vmatprep.subr.mxu0 0.0
        %1656 = vmatpush1.msra.mxu0 %v1079
        %1657 = vmatprep.subr.mxu0 0.0
        %1658 = vmatpush1.msra.mxu0 0.0
        %1659 = vmatprep.subr.mxu0 0.0
        %1660 = vmatpush1.msra.mxu0 0.0
        %1661 = vmatprep.subr.mxu0 0.0
        %1662 = vmatpush1.msra.mxu0 0.0
        %1663 = vmatprep.subr.mxu0 0.0
        %1664 = vmatpush1.msra.mxu0 0.0
        %1665 = vmatprep.subr.mxu0 0.0
        %1666 = vmatpush1.msra.mxu0 0.0
        %1667 = vmatprep.subr.mxu0 0.0
        %1668 = vmatpush1.msra.mxu0 0.0
        %1669 = vmatprep.subr.mxu0 0.0
        %1670 = vmatpush1.msra.mxu0 0.0
        %1671 = vmatprep.subr.mxu0 0.0
        %1672 = vmatpush1.msra.mxu0 0.0
        %1673 = vmatprep.subr.mxu0 0.0
        %1674 = vmatpush1.msra.mxu0 0.0
        %1675 = vmatprep.subr.mxu0 0.0
        %1676 = vmatpush1.msra.mxu0 0.0
        %1677 = vmatprep.subr.mxu0 0.0
        %1678 = vmatpush1.msra.mxu0 0.0
        %1679 = vmatprep.subr.mxu0 0.0
        %1680 = vmatpush1.msra.mxu0 0.0
        %1681 = vmatprep.subr.mxu0 0.0
        %1682 = vmatpush1.msra.mxu0 0.0
        %1683 = vmatprep.subr.mxu0 0.0
        %1684 = vmatpush1.msra.mxu0 0.0
        %1685 = vmatprep.subr.mxu0 0.0
        %1686 = vmatpush1.msra.mxu0 0.0
        %1687 = vmatprep.subr.mxu0 0.0
        %1688 = vmatpush1.msra.mxu0 0.0
        %1689 = vmatprep.subr.mxu0 0.0
        %1690 = vmatpush1.msra.mxu0 0.0
        %1691 = vmatprep.subr.mxu0 0.0
        %1692 = vmatpush1.msra.mxu0 0.0
        %1693 = vmatprep.subr.mxu0 0.0
        %1694 = vmatpush1.msra.mxu0 0.0
        %1695 = vmatprep.subr.mxu0 0.0
        %1696 = vmatpush1.msra.mxu0 0.0
        %1697 = vmatprep.subr.mxu0 0.0
        %1698 = vmatpush1.msra.mxu0 0.0
        %1699 = vmatprep.subr.mxu0 0.0
        %1700 = vmatpush1.msra.mxu0 0.0
        %1701 = vmatprep.subr.mxu0 0.0
        %1702 = vmatpush1.msra.mxu0 0.0
        %1703 = vmatprep.subr.mxu0 0.0
        %1704 = vmatpush1.msra.mxu0 0.0
        %1705 = vmatprep.subr.mxu0 0.0
        %1706 = vmatpush1.msra.mxu0 0.0
        %1707 = vmatprep.subr.mxu0 0.0
        %1708 = vmatpush1.msra.mxu0 0.0
        %1709 = vmatprep.subr.mxu0 0.0
        %1710 = vmatpush1.msra.mxu0 0.0
        %1711 = vmatprep.subr.mxu0 0.0
        %1712 = vmatpush1.msra.mxu0 0.0
        %1713 = vmatprep.subr.mxu0 0.0
        %1714 = vmatpush1.msra.mxu0 0.0
        %1715 = vmatprep.subr.mxu0 0.0
        %1716 = vmatpush1.msra.mxu0 0.0
        %1717 = vmatprep.subr.mxu0 0.0
        %1718 = vmatpush1.msra.mxu0 0.0
        %1719 = vmatprep.mubr.f32.mxu0 0.0
        %1720 = vmatmul.mubr.f32.gmra.mrb[0].mxu0 %v1653
        %v1721 = vpop.f32.mrb[0].mxu0
        %v1722 = vadd.f32 0.0, %v1721
        %v1723 = vpop.f32.mrb[0].mxu0
        %1724 = vdwg.mxu0
        %v1725 = vcombine.low %v1503, %v1649
        %v1726 = vcombine.high %v1503, %v1649
        %v1728 = vunpack.c.l.s4 1983009808
        %v1729 = vunpack.c.0.s8 %v1728
        %v1730 = vlaneseq
        %v1731 = vshrl.u32 %v1730, 7
        %v1732 = vsub.s32 %v1729, %v1731
        %v1733 = vrot.slane %v1725, %v1732
        %v1735 = vunpack.c.l.s4 1983009808
        %v1736 = vunpack.c.0.s8 %v1735
        %v1737 = vlaneseq
        %v1738 = vshrl.u32 %v1737, 7
        %v1739 = vsub.s32 %v1736, %v1738
        %v1740 = vrot.slane %v1726, %v1739
        %v1741 = vcombine.low %v1576, %v1722
        %v1742 = vcombine.high %v1576, %v1722
        %v1744 = vunpack.c.l.s4 1983009808
        %v1745 = vunpack.c.0.s8 %v1744
        %v1746 = vlaneseq
        %v1747 = vshrl.u32 %v1746, 7
        %v1748 = vsub.s32 %v1745, %v1747
        %v1749 = vrot.slane %v1741, %v1748
        %v1751 = vunpack.c.l.s4 1983009808
        %v1752 = vunpack.c.0.s8 %v1751
        %v1753 = vlaneseq
        %v1754 = vshrl.u32 %v1753, 7
        %v1755 = vsub.s32 %v1752, %v1754
        %v1756 = vrot.slane %v1742, %v1755
        %v1757 = vcombine.low %v1733, %v1749
        %v1758 = vcombine.high %v1733, %v1749
        %v1760 = vunpack.c.l.s4 1934713408
        %v1761 = vunpack.c.0.s8 %v1760
        %v1762 = vlaneseq
        %v1763 = vshrl.u32 %v1762, 7
        %v1764 = vsub.s32 %v1761, %v1763
        %v1765 = vrot.slane %v1757, %v1764
        %v1767 = vunpack.c.l.s4 1934713408
        %v1768 = vunpack.c.0.s8 %v1767
        %v1769 = vlaneseq
        %v1770 = vshrl.u32 %v1769, 7
        %v1771 = vsub.s32 %v1768, %v1770
        %v1772 = vrot.slane %v1758, %v1771
        %v1773 = vcombine.low %v1740, %v1756
        %v1774 = vcombine.high %v1740, %v1756
        %v1776 = vunpack.c.l.s4 1934713408
        %v1777 = vunpack.c.0.s8 %v1776
        %v1778 = vlaneseq
        %v1779 = vshrl.u32 %v1778, 7
        %v1780 = vsub.s32 %v1777, %v1779
        %v1781 = vrot.slane %v1773, %v1780
        %v1783 = vunpack.c.l.s4 1934713408
        %v1784 = vunpack.c.0.s8 %v1783
        %v1785 = vlaneseq
        %v1786 = vshrl.u32 %v1785, 7
        %v1787 = vsub.s32 %v1784, %v1786
        %v1788 = vrot.slane %v1774, %v1787
        %v1789 = vcombine.high %v1765, 0.0
        %v1790 = vcombine.high %v1772, 0.0
        %v1791 = vcombine.high %v1781, 0.0
        %v1792 = vcombine.high %v1788, 0.0
        %v1793 = vcombine.low %v1765, %v1772
        %v1795 = vunpack.c.l.s4 1983009808
        %v1796 = vunpack.c.0.s8 %v1795
        %v1797 = vlaneseq
        %v1798 = vshrl.u32 %v1797, 7
        %v1799 = vsub.s32 %v1796, %v1798
        %v1800 = vrot.slane %v1793, %v1799
        %v1801 = vcombine.low %v1789, %v1790
        %v1803 = vunpack.c.l.s4 1983009808
        %v1804 = vunpack.c.0.s8 %v1803
        %v1805 = vlaneseq
        %v1806 = vshrl.u32 %v1805, 7
        %v1807 = vsub.s32 %v1804, %v1806
        %v1808 = vrot.slane %v1801, %v1807
        %v1809 = vcombine.low %v1781, %v1788
        %v1811 = vunpack.c.l.s4 1983009808
        %v1812 = vunpack.c.0.s8 %v1811
        %v1813 = vlaneseq
        %v1814 = vshrl.u32 %v1813, 7
        %v1815 = vsub.s32 %v1812, %v1814
        %v1816 = vrot.slane %v1809, %v1815
        %v1817 = vcombine.low %v1791, %v1792
        %v1819 = vunpack.c.l.s4 1983009808
        %v1820 = vunpack.c.0.s8 %v1819
        %v1821 = vlaneseq
        %v1822 = vshrl.u32 %v1821, 7
        %v1823 = vsub.s32 %v1820, %v1822
        %v1824 = vrot.slane %v1817, %v1823
        %v1825 = vcombine.low %v1800, %v1808
        %v1826 = vcombine.high %v1800, %v1808
        %v1828 = vunpack.c.l.s4 1934713408
        %v1829 = vunpack.c.0.s8 %v1828
        %v1830 = vlaneseq
        %v1831 = vshrl.u32 %v1830, 7
        %v1832 = vsub.s32 %v1829, %v1831
        %v1833 = vrot.slane %v1825, %v1832
        %v1835 = vunpack.c.l.s4 1934713408
        %v1836 = vunpack.c.0.s8 %v1835
        %v1837 = vlaneseq
        %v1838 = vshrl.u32 %v1837, 7
        %v1839 = vsub.s32 %v1836, %v1838
        %v1840 = vrot.slane %v1826, %v1839
        %v1841 = vcombine.low %v1816, %v1824
        %v1842 = vcombine.high %v1816, %v1824
        %v1844 = vunpack.c.l.s4 1934713408
        %v1845 = vunpack.c.0.s8 %v1844
        %v1846 = vlaneseq
        %v1847 = vshrl.u32 %v1846, 7
        %v1848 = vsub.s32 %v1845, %v1847
        %v1849 = vrot.slane %v1841, %v1848
        %v1851 = vunpack.c.l.s4 1934713408
        %v1852 = vunpack.c.0.s8 %v1851
        %v1853 = vlaneseq
        %v1854 = vshrl.u32 %v1853, 7
        %v1855 = vsub.s32 %v1852, %v1854
        %v1856 = vrot.slane %v1842, %v1855
        %v1857 = vcombine.low %v1833, %v1849
        %v1858 = vcombine.high %v1833, %v1849
        %v1859 = vcombine.low %v1840, %v1856
        %v1860 = vcombine.high %v1840, %v1856
        %1862 = vrot.lane.b32.xlu0 %v1858, 8
        %v1863 = vpop.permute.xlu0 %1862
        %1866 = vrot.lane.b32.xlu0 %v1859, 16
        %v1867 = vpop.permute.xlu0 %1866
        %1870 = vrot.lane.b32.xlu0 %v1860, 24
        %v1871 = vpop.permute.xlu0 %1870
        %v1873 = vsel %vm1080, %v1857, %v1863
        %vm1874 = vcmask 130048
        %v1875 = vsel %vm1874, %v1873, %v1867
        %vm1876 = vcmask 195584
        %v1877 = vsel %vm1876, %v1875, %v1871
        %v1878 = vld [vmem:[%s469] sm:$0xff]
        %v1879 = vld [vmem:[%s469 + $0x8] sm:$0xff]
        %v1880 = vld [vmem:[%s469 + $0x10] sm:$0xff]
        %v1881 = vld [vmem:[%s469 + $0x18] sm:$0xff]
        %v1882 = vld [vmem:[%s536] sm:$0x1]
        %v1884 = vlaneseq
        %v1885 = vshrl.u32 %v1884, 7
        %v1886 = vsub.s32 0, %v1885
        %v1887 = vrot.slane %v1882, %v1886
        %v1890 = vsel %vm564, %v1877, 0
        %1892 = vmatprep.subr.mxu0 0.0
        %1893 = vmatpush1.msra.mxu0 %v1878
        %1894 = vmatprep.subr.mxu0 0.0
        %1895 = vmatpush1.msra.mxu0 %v1879
        %1896 = vmatprep.subr.mxu0 0.0
        %1897 = vmatpush1.msra.mxu0 %v1880
        %1898 = vmatprep.subr.mxu0 0.0
        %1899 = vmatpush1.msra.mxu0 %v1881
        %1900 = vmatprep.subr.mxu0 0.0
        %1901 = vmatpush1.msra.mxu0 0.0
        %1902 = vmatprep.subr.mxu0 0.0
        %1903 = vmatpush1.msra.mxu0 0.0
        %1904 = vmatprep.subr.mxu0 0.0
        %1905 = vmatpush1.msra.mxu0 0.0
        %1906 = vmatprep.subr.mxu0 0.0
        %1907 = vmatpush1.msra.mxu0 0.0
        %1908 = vmatprep.subr.mxu0 0.0
        %1909 = vmatpush1.msra.mxu0 0.0
        %1910 = vmatprep.subr.mxu0 0.0
        %1911 = vmatpush1.msra.mxu0 0.0
        %1912 = vmatprep.subr.mxu0 0.0
        %1913 = vmatpush1.msra.mxu0 0.0
        %1914 = vmatprep.subr.mxu0 0.0
        %1915 = vmatpush1.msra.mxu0 0.0
        %1916 = vmatprep.subr.mxu0 0.0
        %1917 = vmatpush1.msra.mxu0 0.0
        %1918 = vmatprep.subr.mxu0 0.0
        %1919 = vmatpush1.msra.mxu0 0.0
        %1920 = vmatprep.subr.mxu0 0.0
        %1921 = vmatpush1.msra.mxu0 0.0
        %1922 = vmatprep.subr.mxu0 0.0
        %1923 = vmatpush1.msra.mxu0 0.0
        %1924 = vmatprep.subr.mxu0 0.0
        %1925 = vmatpush1.msra.mxu0 0.0
        %1926 = vmatprep.subr.mxu0 0.0
        %1927 = vmatpush1.msra.mxu0 0.0
        %1928 = vmatprep.subr.mxu0 0.0
        %1929 = vmatpush1.msra.mxu0 0.0
        %1930 = vmatprep.subr.mxu0 0.0
        %1931 = vmatpush1.msra.mxu0 0.0
        %1932 = vmatprep.subr.mxu0 0.0
        %1933 = vmatpush1.msra.mxu0 0.0
        %1934 = vmatprep.subr.mxu0 0.0
        %1935 = vmatpush1.msra.mxu0 0.0
        %1936 = vmatprep.subr.mxu0 0.0
        %1937 = vmatpush1.msra.mxu0 0.0
        %1938 = vmatprep.subr.mxu0 0.0
        %1939 = vmatpush1.msra.mxu0 0.0
        %1940 = vmatprep.subr.mxu0 0.0
        %1941 = vmatpush1.msra.mxu0 0.0
        %1942 = vmatprep.subr.mxu0 0.0
        %1943 = vmatpush1.msra.mxu0 0.0
        %1944 = vmatprep.subr.mxu0 0.0
        %1945 = vmatpush1.msra.mxu0 0.0
        %1946 = vmatprep.subr.mxu0 0.0
        %1947 = vmatpush1.msra.mxu0 0.0
        %1948 = vmatprep.subr.mxu0 0.0
        %1949 = vmatpush1.msra.mxu0 0.0
        %1950 = vmatprep.subr.mxu0 0.0
        %1951 = vmatpush1.msra.mxu0 0.0
        %1952 = vmatprep.subr.mxu0 0.0
        %1953 = vmatpush1.msra.mxu0 0.0
        %1954 = vmatprep.subr.mxu0 0.0
        %1955 = vmatpush1.msra.mxu0 0.0
        %1956 = vmatprep.mubr.f32.mxu0 0.0
        %1957 = vmatmul.mubr.f32.gmra.mrb[0].mxu0 %v1890
        %v1958 = vpop.f32.mrb[0].mxu0
        %v1959 = vadd.f32 %v1887, %v1958
        %v1960 = vpop.f32.mrb[0].mxu0
        %1961 = vdwg.mxu0
        %v1962 = vadd.f32 %v1959, %v552
        %v1963 = vsel %vm564, %v1962, 0.0
        %1964 = vadd.xlane.f32.xlu0 %v1963
        %v1965 = vpop.xlane.xlu0 %1964
        %v1966 = vrcp.pop 32.0
        %v1967 = vmul.f32 %v1965, %v1966
        %v1968 = vsub.f32 %v1962, %v1967
        %v1969 = vmul.f32 %v1968, %v1968
        %v1970 = vsel %vm564, %v1969, 0.0
        %1971 = vadd.xlane.f32.xlu0 %v1970
        %v1972 = vpop.xlane.xlu0 %1971
        %v1973 = vmul.f32 %v1972, %v1966
        %v1974 = vadd.f32 %v1973, 1e-12
        %v1975 = vrsqrt.pop %v1974
        %v1976 = vmul.f32 %v1968, %v1975
        %v1977 = vld [vmem:[%s539] sm:$0x1]
        %v1979 = vlaneseq
        %v1980 = vshrl.u32 %v1979, 7
        %v1981 = vsub.s32 0, %v1980
        %v1982 = vrot.slane %v1977, %v1981
        %v1984 = vmul.f32 %v1976, %v1982
        %v1985 = vld [vmem:[%s542] sm:$0x1]
        %v1987 = vlaneseq
        %v1988 = vshrl.u32 %v1987, 7
        %v1989 = vsub.s32 0, %v1988
        %v1990 = vrot.slane %v1985, %v1989
        %v1992 = vadd.f32 %v1984, %v1990
        %1993 = vst.msk [vmem:[#allocation2] sm:$0xff] %vm564, %v1992
        %p1994 = scmp.eq.s32.totalorder %s33, 1
        // Predicated region
        $region85: #{tpu_custom_call.1} parent=59 // pred_check
          %p1995 = pneg %p1994
        $region86: #{tpu_custom_call.1} parent=59 // pred_check_branch
          %1997 = sbr.rel (%p1995) target = $region88
        $region87: #{tpu_custom_call.1} parent=59 // pred_region
          %v1998 = vld [vmem:[#allocation10] sm:$0xff]
          %v1999 = vld [vmem:[#allocation10 + $0x8] sm:$0xff]
          %v2000 = vld [vmem:[#allocation10 + $0x10] sm:$0xff]
          %v2001 = vld [vmem:[#allocation10 + $0x18] sm:$0xff]
          %v2002 = vld [vmem:[%s9] sm:$0x1]
          %v2004 = vsel %vm564, %v1992, 0
          %2006 = vmatprep.subr.mxu0 0.0
          %2007 = vmatpush1.msra.mxu0 %v1998
          %2008 = vmatprep.subr.mxu0 0.0
          %2009 = vmatpush1.msra.mxu0 %v1999
          %2010 = vmatprep.subr.mxu0 0.0
          %2011 = vmatpush1.msra.mxu0 %v2000
          %2012 = vmatprep.subr.mxu0 0.0
          %2013 = vmatpush1.msra.mxu0 %v2001
          %2014 = vmatprep.subr.mxu0 0.0
          %2015 = vmatpush1.msra.mxu0 0.0
          %2016 = vmatprep.subr.mxu0 0.0
          %2017 = vmatpush1.msra.mxu0 0.0
          %2018 = vmatprep.subr.mxu0 0.0
          %2019 = vmatpush1.msra.mxu0 0.0
          %2020 = vmatprep.subr.mxu0 0.0
          %2021 = vmatpush1.msra.mxu0 0.0
          %2022 = vmatprep.subr.mxu0 0.0
          %2023 = vmatpush1.msra.mxu0 0.0
          %2024 = vmatprep.subr.mxu0 0.0
          %2025 = vmatpush1.msra.mxu0 0.0
          %2026 = vmatprep.subr.mxu0 0.0
          %2027 = vmatpush1.msra.mxu0 0.0
          %2028 = vmatprep.subr.mxu0 0.0
          %2029 = vmatpush1.msra.mxu0 0.0
          %2030 = vmatprep.subr.mxu0 0.0
          %2031 = vmatpush1.msra.mxu0 0.0
          %2032 = vmatprep.subr.mxu0 0.0
          %2033 = vmatpush1.msra.mxu0 0.0
          %2034 = vmatprep.subr.mxu0 0.0
          %2035 = vmatpush1.msra.mxu0 0.0
          %2036 = vmatprep.subr.mxu0 0.0
          %2037 = vmatpush1.msra.mxu0 0.0
          %2038 = vmatprep.subr.mxu0 0.0
          %2039 = vmatpush1.msra.mxu0 0.0
          %2040 = vmatprep.subr.mxu0 0.0
          %2041 = vmatpush1.msra.mxu0 0.0
          %2042 = vmatprep.subr.mxu0 0.0
          %2043 = vmatpush1.msra.mxu0 0.0
          %2044 = vmatprep.subr.mxu0 0.0
          %2045 = vmatpush1.msra.mxu0 0.0
          %2046 = vmatprep.subr.mxu0 0.0
          %2047 = vmatpush1.msra.mxu0 0.0
          %2048 = vmatprep.subr.mxu0 0.0
          %2049 = vmatpush1.msra.mxu0 0.0
          %2050 = vmatprep.subr.mxu0 0.0
          %2051 = vmatpush1.msra.mxu0 0.0
          %2052 = vmatprep.subr.mxu0 0.0
          %2053 = vmatpush1.msra.mxu0 0.0
          %2054 = vmatprep.subr.mxu0 0.0
          %2055 = vmatpush1.msra.mxu0 0.0
          %2056 = vmatprep.subr.mxu0 0.0
          %2057 = vmatpush1.msra.mxu0 0.0
          %2058 = vmatprep.subr.mxu0 0.0
          %2059 = vmatpush1.msra.mxu0 0.0
          %2060 = vmatprep.subr.mxu0 0.0
          %2061 = vmatpush1.msra.mxu0 0.0
          %2062 = vmatprep.subr.mxu0 0.0
          %2063 = vmatpush1.msra.mxu0 0.0
          %2064 = vmatprep.subr.mxu0 0.0
          %2065 = vmatpush1.msra.mxu0 0.0
          %2066 = vmatprep.subr.mxu0 0.0
          %2067 = vmatpush1.msra.mxu0 0.0
          %2068 = vmatprep.subr.mxu0 0.0
          %2069 = vmatpush1.msra.mxu0 0.0
          %2070 = vmatprep.mubr.f32.mxu0 0.0
          %2071 = vmatmul.mubr.f32.gmra.mrb[0].mxu0 %v2004
          %v2072 = vpop.f32.mrb[0].mxu0
          %v2073 = vadd.f32 %v2002, %v2072
          %v2074 = vpop.f32.mrb[0].mxu0
          %2075 = vdwg.mxu0
          %v2076 = vtanh.pop %v2073
          %vm2077 = vcmask 253952
          %2078 = vst.msk [vmem:[%s530] sm:$0x1] %vm2077, %v2076
        $region88: #{tpu_custom_call.1} parent=59 // pred_fallthru
          _
        %s2079 = sand.u32 %s293, 1
        %s2080 = scalar_lea.sflag [#allocation5], %s2079
        %s2081 = sand.u32 %s293, 1
        %s2082 = scalar_lea.vmem [#allocation11], %s2081
        // Predicated region
        $region89: #{tpu_custom_call.1} parent=59 // pred_check
          %p2083 = pneg %p303
        $region90: #{tpu_custom_call.1} parent=59 // pred_check_branch
          %2085 = sbr.rel (%p2083) target = $region92
        $region91: #{tpu_custom_call.1} parent=59 // pred_region
          %s2087 = ssub.s32 16, 16
          %2088 = vsyncadd %s2080, %s2087
          %s2089 = smul.addr %s32, 16
          %s2090 = scalar_lea.hbm %s10, %s2089
          %s2092 = sshll.u32 %s2082, 4
          %s2093 = int_to_ptr.vmem [resolvable:$true] %s2092
          %2095 = dma.vmem_to_hbm [thread:$0]  %s2093, 16, %s2090, %s2080
        $region92: #{tpu_custom_call.1} parent=59 // pred_fallthru
          _
      $region60: #{tpu_custom_call.1} parent=5 // pred_fallthru
        _
      %p2096 = scmp.le.s32.totalorder 2, %s23
      // Predicated region
      $region93: #{tpu_custom_call.1} parent=5 // pred_check
        %p2097 = pneg %p2096
      $region94: #{tpu_custom_call.1} parent=5 // pred_check_branch
        %2099 = sbr.rel (%p2097) target = $region96
      $region95: #{tpu_custom_call.1} parent=5 // pred_region
        %s2100 = ssub.s32 %s23, 2
        // Predicated region
        $region97: #{tpu_custom_call.1} parent=95 // pred_check
          %p2101 = pneg %p309
        $region98: #{tpu_custom_call.1} parent=95 // pred_check_branch
          %2103 = sbr.rel (%p2101) target = $region100
        $region99: #{tpu_custom_call.1} parent=95 // pred_region
          %s2104 = sand.u32 %s294, 1
          %s2105 = scalar_lea.sflag [#allocation5], %s2104
          %s2106 = sand.u32 %s294, 1
          %s2107 = scalar_lea.vmem [#allocation11], %s2106
          %2108 = dma.done %s2105, 16
        $region100: #{tpu_custom_call.1} parent=95 // pred_fallthru
          _
      $region96: #{tpu_custom_call.1} parent=5 // pred_fallthru
        _
    $region6: #{tpu_custom_call.1} parent=1 // loop_footer
      %s27 = sadd.s32 1, %s23
    $region7: #{tpu_custom_call.1} parent=1 // loop_footer_branch
      %22 = sbr.rel target = $region3
    $region8: #{tpu_custom_call.1} parent=1 // loop_exit
      _
    %2109 = vsyncpa [#allocation4], 1
    %s2110 = scalar_lea.sflag [#allocation4], 1
    %2111 = vsyncpa %s2110, 1
    %2112 = vsyncpa [#allocation7], 1
    %2113 = vsyncpa [#allocation5], 1
    %s2114 = scalar_lea.sflag [#allocation5], 1
    %2115 = vsyncpa %s2114, 1

// kernel: tpu_custom_call.1
$region0: #{tpu_custom_call.1}
  #allocation0 [shape = 'u32[]', space=smem, size = 0x4, offset = 0x4, fixed_abs, tag = 'smem constant byte address 0x4 - core index']
  #allocation1 [shape = 'u32[144,128]{1,0:T(1,128)}', space=vmem, size = 0x12000, scoped, tag = 'internal scratch']
  #allocation2 [shape = 'f32[1,8,32]{2,1,0:T(8,128)}', space=vmem, size = 0x1000, scoped, tag = 'scratch operand']
  %s0 = inlined_call_operand.hbm [shape: f32[2,8,32], index: 0, kind: input, shape index: {}]
  %s1 = inlined_call_operand.hbm [shape: f32[8,32], index: 1, kind: input, shape index: {}]
  %s2 = inlined_call_operand.hbm [shape: f32[2,32,96], index: 2, kind: input, shape index: {}]
  %s3 = inlined_call_operand.vmem [shape: f32[2,1,96], index: 3, kind: input, shape index: {}]
  %s4 = inlined_call_operand.hbm [shape: f32[2,32,32], index: 4, kind: input, shape index: {}]
  %s5 = inlined_call_operand.vmem [shape: f32[2,1,32], index: 5, kind: input, shape index: {}]
  %s6 = inlined_call_operand.vmem [shape: f32[2,1,32], index: 6, kind: input, shape index: {}]
  %s7 = inlined_call_operand.vmem [shape: f32[2,1,32], index: 7, kind: input, shape index: {}]
  %s8 = inlined_call_operand.hbm [shape: f32[32,32], index: 8, kind: input, shape index: {}]
  %s9 = inlined_call_operand.vmem [shape: f32[1,32], index: 9, kind: input, shape index: {}]
  %s10 = inlined_call_operand.hbm [shape: f32[2,1,32], index: 10, kind: output, shape index: {}]
  %s11 = sld [smem:[#allocation0]]
  $region101: #{tpu_custom_call.1} parent=0
    _
  %s13 = ssub.s32 1, %s11
  %s14 = scalar_select 0, %s13, %s11
  $region1: #{tpu_custom_call.1} parent=0
    #allocation3 [shape = 'u8[8192]{0}', space=vmem, size = 0x2000, scoped, tag = 'input window, operand 0']
    #allocation4 [shape = 's32[2]{0}', space=sflag, size = 0x8, scoped, tag = 'scoped memory for tpu_custom_call.1']
    #allocation5 [shape = 's32[2]{0}', space=sflag, size = 0x8, scoped, tag = 'scoped memory for tpu_custom_call.1']
    #allocation6 [shape = 'u8[4096]{0}', space=vmem, size = 0x1000, scoped, tag = 'input window, operand 1, single buffered']
    #allocation7 [shape = 's32[1]{0}', space=sflag, size = 0x4, scoped, tag = 'scoped memory for tpu_custom_call.1']
    #allocation8 [shape = 'u8[32768]{0}', space=vmem, size = 0x8000, scoped, tag = 'input window, operand 2']
    #allocation9 [shape = 'u8[32768]{0}', space=vmem, size = 0x8000, scoped, tag = 'input window, operand 4']
    #allocation10 [shape = 'u8[16384]{0}', space=vmem, size = 0x4000, scoped, tag = 'input window, operand 8, single buffered']
    #allocation11 [shape = 'u8[1024]{0}', space=vmem, size = 0x400, scoped, tag = 'output window, operand 0']
    %15 = vsyncpa [#allocation4], 0
    %s16 = scalar_lea.sflag [#allocation4], 1
    %17 = vsyncpa %s16, 0
    %18 = vsyncpa [#allocation7], 0
    %19 = vsyncpa [#allocation5], 0
    %s20 = scalar_lea.sflag [#allocation5], 1
    %21 = vsyncpa %s20, 0
    loop: start=0, step=1, limit=6
    $region2: #{tpu_custom_call.1} parent=1 // loop_pre_header
      _
    $region3: #{tpu_custom_call.1} parent=1 // loop_header
      %s23 = sphi 0, %s27
      %p24 = scmp.ge.s32.totalorder %s23, 6
      %s30 = sphi 0, %s42
      %s31 = sphi 0, %s38
      %s32 = sphi 0, %s30
      %s33 = sphi 0, %s31
      %s34 = sphi 0, %s32
      %s35 = sphi 0, %s33
      %s45 = sphi 0, %s47
      %s48 = sphi 0, %s45
      %s49 = sphi 0, %s48
      %s65 = sphi 0, %s49
      %s69 = sphi 0, %s69
      %s71 = sphi 0, %s69
      %s72 = sphi 0, %s71
      %s86 = sphi 0, %s72
      %s92 = sphi 0, %s94
      %s95 = sphi 0, %s92
      %s96 = sphi 0, %s95
      %s112 = sphi 0, %s96
      %s118 = sphi 0, %s120
      %s121 = sphi 0, %s118
      %s122 = sphi 0, %s121
      %s138 = sphi 0, %s122
      %s144 = sphi 0, %s146
      %s147 = sphi 0, %s144
      %s148 = sphi 0, %s147
      %s164 = sphi 0, %s148
      %s170 = sphi 0, %s172
      %s173 = sphi 0, %s170
      %s174 = sphi 0, %s173
      %s190 = sphi 0, %s174
      %s196 = sphi 0, %s198
      %s199 = sphi 0, %s196
      %s200 = sphi 0, %s199
      %s216 = sphi 0, %s200
      %s222 = sphi 0, %s224
      %s225 = sphi 0, %s222
      %s226 = sphi 0, %s225
      %s242 = sphi 0, %s226
      %s246 = sphi 0, %s246
      %s248 = sphi 0, %s246
      %s249 = sphi 0, %s248
      %s263 = sphi 0, %s249
      %s267 = sphi 0, %s267
      %s269 = sphi 0, %s267
      %s270 = sphi 0, %s269
      %s284 = sphi 0, %s270
      %s290 = sphi 0, %s292
      %s293 = sphi 0, %s290
      %s294 = sphi 0, %s293
      %s310 = sphi 0, %s294
    $region4: #{tpu_custom_call.1} parent=1 // loop_header_branch
      %26 = sbr.rel (%p24) target = $region8
    $region5: #{tpu_custom_call.1} parent=1 // loop_body
      %s28 = ssub.s32 %s23, 1
      %s29 = ssub.s32 %s23, 2
      %s36 = sadd.s32 1, %s31
      %p37 = scmp.ge.s32.totalorder %s36, 2
      %s38 = scalar_select %p37, 0, %s36
      %s39 = sadd.s32 1, %s30
      %s40 = scalar_select %p37, %s39, %s30
      %p41 = scmp.ge.s32.totalorder %s40, 2
      %s42 = scalar_select %p41, 0, %s40
      %s43 = ssub.s32 %s30, %s42
      %p44 = scmp.eq.s32.totalorder %s43, 0
      %s46 = sadd.s32 %s45, 1
      %s47 = scalar_select %p44, %s45, %s46
      %p50 = pneg %p44
      %p51 = scmp.eq.s32.totalorder %s23, 3
      %p52 = por %p50, %p51
      %p53 = scmp.ne.s32.totalorder %s45, %s48
      %p54 = scmp.eq.s32.totalorder %s23, 0
      %p55 = por %p53, %p54
      %p56 = scmp.ne.s32.totalorder %s45, %s48
      %p57 = scmp.eq.s32.totalorder %s28, 3
      %p58 = por %p56, %p57
      %p59 = scmp.ne.s32.totalorder %s48, %s49
      %p60 = scmp.eq.s32.totalorder %s28, 0
      %p61 = por %p59, %p60
      %p62 = scmp.ne.s32.totalorder %s48, %s49
      %p63 = scmp.eq.s32.totalorder %s29, 3
      %p64 = por %p62, %p63
      %p66 = scmp.ne.s32.totalorder %s49, %s65
      %p67 = scmp.eq.s32.totalorder %s29, 0
      %p68 = por %p66, %p67
      %s70 = sadd.s32 %s69, 1
      %p73 = scmp.eq.s32.totalorder %s23, 3
      %p74 = scmp.ne.s32.totalorder %s69, %s71
      %p75 = scmp.eq.s32.totalorder %s23, 0
      %p76 = por %p74, %p75
      %p77 = scmp.ne.s32.totalorder %s69, %s71
      %p78 = scmp.eq.s32.totalorder %s28, 3
      %p79 = por %p77, %p78
      %p80 = scmp.ne.s32.totalorder %s71, %s72
      %p81 = scmp.eq.s32.totalorder %s28, 0
      %p82 = por %p80, %p81
      %p83 = scmp.ne.s32.totalorder %s71, %s72
      %p84 = scmp.eq.s32.totalorder %s29, 3
      %p85 = por %p83, %p84
      %p87 = scmp.ne.s32.totalorder %s72, %s86
      %p88 = scmp.eq.s32.totalorder %s29, 0
      %p89 = por %p87, %p88
      %s90 = ssub.s32 %s31, %s38
      %p91 = scmp.eq.s32.totalorder %s90, 0
      %s93 = sadd.s32 %s92, 1
      %s94 = scalar_select %p91, %s92, %s93
      %p97 = pneg %p91
      %p98 = scmp.eq.s32.totalorder %s23, 3
      %p99 = por %p97, %p98
      %p100 = scmp.ne.s32.totalorder %s92, %s95
      %p101 = scmp.eq.s32.totalorder %s23, 0
      %p102 = por %p100, %p101
      %p103 = scmp.ne.s32.totalorder %s92, %s95
      %p104 = scmp.eq.s32.totalorder %s28, 3
      %p105 = por %p103, %p104
      %p106 = scmp.ne.s32.totalorder %s95, %s96
      %p107 = scmp.eq.s32.totalorder %s28, 0
      %p108 = por %p106, %p107
      %p109 = scmp.ne.s32.totalorder %s95, %s96
      %p110 = scmp.eq.s32.totalorder %s29, 3
      %p111 = por %p109, %p110
      %p113 = scmp.ne.s32.totalorder %s96, %s112
      %p114 = scmp.eq.s32.totalorder %s29, 0
      %p115 = por %p113, %p114
      %s116 = ssub.s32 %s31, %s38
      %p117 = scmp.eq.s32.totalorder %s116, 0
      %s119 = sadd.s32 %s118, 1
      %s120 = scalar_select %p117, %s118, %s119
      %p123 = pneg %p117
      %p124 = scmp.eq.s32.totalorder %s23, 3
      %p125 = por %p123, %p124
      %p126 = scmp.ne.s32.totalorder %s118, %s121
      %p127 = scmp.eq.s32.totalorder %s23, 0
      %p128 = por %p126, %p127
      %p129 = scmp.ne.s32.totalorder %s118, %s121
      %p130 = scmp.eq.s32.totalorder %s28, 3
      %p131 = por %p129, %p130
      %p132 = scmp.ne.s32.totalorder %s121, %s122
      %p133 = scmp.eq.s32.totalorder %s28, 0
      %p134 = por %p132, %p133
      %p135 = scmp.ne.s32.totalorder %s121, %s122
      %p136 = scmp.eq.s32.totalorder %s29, 3
      %p137 = por %p135, %p136
      %p139 = scmp.ne.s32.totalorder %s122, %s138
      %p140 = scmp.eq.s32.totalorder %s29, 0
      %p141 = por %p139, %p140
      %s142 = ssub.s32 %s31, %s38
      %p143 = scmp.eq.s32.totalorder %s142, 0
      %s145 = sadd.s32 %s144, 1
      %s146 = scalar_select %p143, %s144, %s145
      %p149 = pneg %p143
      %p150 = scmp.eq.s32.totalorder %s23, 3
      %p151 = por %p149, %p150
      %p152 = scmp.ne.s32.totalorder %s144, %s147
      %p153 = scmp.eq.s32.totalorder %s23, 0
      %p154 = por %p152, %p153
      %p155 = scmp.ne.s32.totalorder %s144, %s147
      %p156 = scmp.eq.s32.totalorder %s28, 3
      %p157 = por %p155, %p156
      %p158 = scmp.ne.s32.totalorder %s147, %s148
      %p159 = scmp.eq.s32.totalorder %s28, 0
      %p160 = por %p158, %p159
      %p161 = scmp.ne.s32.totalorder %s147, %s148
      %p162 = scmp.eq.s32.totalorder %s29, 3
      %p163 = por %p161, %p162
      %p165 = scmp.ne.s32.totalorder %s148, %s164
      %p166 = scmp.eq.s32.totalorder %s29, 0
      %p167 = por %p165, %p166
      %s168 = ssub.s32 %s31, %s38
      %p169 = scmp.eq.s32.totalorder %s168, 0
      %s171 = sadd.s32 %s170, 1
      %s172 = scalar_select %p169, %s170, %s171
      %p175 = pneg %p169
      %p176 = scmp.eq.s32.totalorder %s23, 3
      %p177 = por %p175, %p176
      %p178 = scmp.ne.s32.totalorder %s170, %s173
      %p179 = scmp.eq.s32.totalorder %s23, 0
      %p180 = por %p178, %p179
      %p181 = scmp.ne.s32.totalorder %s170, %s173
      %p182 = scmp.eq.s32.totalorder %s28, 3
      %p183 = por %p181, %p182
      %p184 = scmp.ne.s32.totalorder %s173, %s174
      %p185 = scmp.eq.s32.totalorder %s28, 0
      %p186 = por %p184, %p185
      %p187 = scmp.ne.s32.totalorder %s173, %s174
      %p188 = scmp.eq.s32.totalorder %s29, 3
      %p189 = por %p187, %p188
      %p191 = scmp.ne.s32.totalorder %s174, %s190
      %p192 = scmp.eq.s32.totalorder %s29, 0
      %p193 = por %p191, %p192
      %s194 = ssub.s32 %s31, %s38
      %p195 = scmp.eq.s32.totalorder %s194, 0
      %s197 = sadd.s32 %s196, 1
      %s198 = scalar_select %p195, %s196, %s197
      %p201 = pneg %p195
      %p202 = scmp.eq.s32.totalorder %s23, 3
      %p203 = por %p201, %p202
      %p204 = scmp.ne.s32.totalorder %s196, %s199
      %p205 = scmp.eq.s32.totalorder %s23, 0
      %p206 = por %p204, %p205
      %p207 = scmp.ne.s32.totalorder %s196, %s199
      %p208 = scmp.eq.s32.totalorder %s28, 3
      %p209 = por %p207, %p208
      %p210 = scmp.ne.s32.totalorder %s199, %s200
      %p211 = scmp.eq.s32.totalorder %s28, 0
      %p212 = por %p210, %p211
      %p213 = scmp.ne.s32.totalorder %s199, %s200
      %p214 = scmp.eq.s32.totalorder %s29, 3
      %p215 = por %p213, %p214
      %p217 = scmp.ne.s32.totalorder %s200, %s216
      %p218 = scmp.eq.s32.totalorder %s29, 0
      %p219 = por %p217, %p218
      %s220 = ssub.s32 %s31, %s38
      %p221 = scmp.eq.s32.totalorder %s220, 0
      %s223 = sadd.s32 %s222, 1
      %s224 = scalar_select %p221, %s222, %s223
      %p227 = pneg %p221
      %p228 = scmp.eq.s32.totalorder %s23, 3
      %p229 = por %p227, %p228
      %p230 = scmp.ne.s32.totalorder %s222, %s225
      %p231 = scmp.eq.s32.totalorder %s23, 0
      %p232 = por %p230, %p231
      %p233 = scmp.ne.s32.totalorder %s222, %s225
      %p234 = scmp.eq.s32.totalorder %s28, 3
      %p235 = por %p233, %p234
      %p236 = scmp.ne.s32.totalorder %s225, %s226
      %p237 = scmp.eq.s32.totalorder %s28, 0
      %p238 = por %p236, %p237
      %p239 = scmp.ne.s32.totalorder %s225, %s226
      %p240 = scmp.eq.s32.totalorder %s29, 3
      %p241 = por %p239, %p240
      %p243 = scmp.ne.s32.totalorder %s226, %s242
      %p244 = scmp.eq.s32.totalorder %s29, 0
      %p245 = por %p243, %p244
      %s247 = sadd.s32 %s246, 1
      %p250 = scmp.eq.s32.totalorder %s23, 3
      %p251 = scmp.ne.s32.totalorder %s246, %s248
      %p252 = scmp.eq.s32.totalorder %s23, 0
      %p253 = por %p251, %p252
      %p254 = scmp.ne.s32.totalorder %s246, %s248
      %p255 = scmp.eq.s32.totalorder %s28, 3
      %p256 = por %p254, %p255
      %p257 = scmp.ne.s32.totalorder %s248, %s249
      %p258 = scmp.eq.s32.totalorder %s28, 0
      %p259 = por %p257, %p258
      %p260 = scmp.ne.s32.totalorder %s248, %s249
      %p261 = scmp.eq.s32.totalorder %s29, 3
      %p262 = por %p260, %p261
      %p264 = scmp.ne.s32.totalorder %s249, %s263
      %p265 = scmp.eq.s32.totalorder %s29, 0
      %p266 = por %p264, %p265
      %s268 = sadd.s32 %s267, 1
      %p271 = scmp.eq.s32.totalorder %s23, 3
      %p272 = scmp.ne.s32.totalorder %s267, %s269
      %p273 = scmp.eq.s32.totalorder %s23, 0
      %p274 = por %p272, %p273
      %p275 = scmp.ne.s32.totalorder %s267, %s269
      %p276 = scmp.eq.s32.totalorder %s28, 3
      %p277 = por %p275, %p276
      %p278 = scmp.ne.s32.totalorder %s269, %s270
      %p279 = scmp.eq.s32.totalorder %s28, 0
      %p280 = por %p278, %p279
      %p281 = scmp.ne.s32.totalorder %s269, %s270
      %p282 = scmp.eq.s32.totalorder %s29, 3
      %p283 = por %p281, %p282
      %p285 = scmp.ne.s32.totalorder %s270, %s284
      %p286 = scmp.eq.s32.totalorder %s29, 0
      %p287 = por %p285, %p286
      %s288 = ssub.s32 %s30, %s42
      %p289 = scmp.eq.s32.totalorder %s288, 0
      %s291 = sadd.s32 %s290, 1
      %s292 = scalar_select %p289, %s290, %s291
      %p295 = pneg %p289
      %p296 = scmp.eq.s32.totalorder %s23, 3
      %p297 = por %p295, %p296
      %p298 = scmp.ne.s32.totalorder %s290, %s293
      %p299 = scmp.eq.s32.totalorder %s23, 0
      %p300 = por %p298, %p299
      %p301 = scmp.ne.s32.totalorder %s290, %s293
      %p302 = scmp.eq.s32.totalorder %s28, 3
      %p303 = por %p301, %p302
      %p304 = scmp.ne.s32.totalorder %s293, %s294
      %p305 = scmp.eq.s32.totalorder %s28, 0
      %p306 = por %p304, %p305
      %p307 = scmp.ne.s32.totalorder %s293, %s294
      %p308 = scmp.eq.s32.totalorder %s29, 3
      %p309 = por %p307, %p308
      %p311 = scmp.ne.s32.totalorder %s294, %s310
      %p312 = scmp.eq.s32.totalorder %s29, 0
      %p313 = por %p311, %p312
      %p314 = scmp.le.s32.totalorder 1, %s23
      %p315 = scmp.lt.s32.totalorder %s23, 5
      %p316 = pnand %p314, %p315
      %p317 = pneg %p316
      // Predicated region
      $region9: #{tpu_custom_call.1} parent=5 // pred_check
        _
      $region10: #{tpu_custom_call.1} parent=5 // pred_check_branch
        %319 = sbr.rel (%p316) target = $region12
      $region11: #{tpu_custom_call.1} parent=5 // pred_region
        %s320 = ssub.s32 %s23, 1
        // Predicated region
        $region13: #{tpu_custom_call.1} parent=11 // pred_check
          %p321 = pneg %p82
        $region14: #{tpu_custom_call.1} parent=11 // pred_check_branch
          %323 = sbr.rel (%p321) target = $region16
        $region15: #{tpu_custom_call.1} parent=11 // pred_region
          %s325 = ssub.s32 128, 128
          %326 = vsyncadd [#allocation7], %s325
          %s328 = sshll.u32 [#allocation6], 4
          %s329 = int_to_ptr.vmem [resolvable:$true] %s328
          %331 = dma.hbm_to_vmem [thread:$0]  %s1, 128, %s329, [#allocation7]
        $region16: #{tpu_custom_call.1} parent=11 // pred_fallthru
          _
        // Predicated region
        $region17: #{tpu_custom_call.1} parent=11 // pred_check
          %p332 = pneg %p259
        $region18: #{tpu_custom_call.1} parent=11 // pred_check_branch
          %334 = sbr.rel (%p332) target = $region20
        $region19: #{tpu_custom_call.1} parent=11 // pred_region
          %s336 = ssub.s32 512, 512
          %337 = vsyncadd [#allocation7], %s336
          %s338 = sshll.u32 [#allocation10], 4
          %s339 = int_to_ptr.vmem [resolvable:$true] %s338
          %344 = dma.hbm_to_vmem [thread:$0]  %s8, 512, %s339, [#allocation7], 128, 128, 8
        $region20: #{tpu_custom_call.1} parent=11 // pred_fallthru
          _
        // Predicated region
        $region21: #{tpu_custom_call.1} parent=11 // pred_check
          %p345 = pneg %p280
        $region22: #{tpu_custom_call.1} parent=11 // pred_check_branch
          %347 = sbr.rel (%p345) target = $region24
        $region23: #{tpu_custom_call.1} parent=11 // pred_region
          _
        $region24: #{tpu_custom_call.1} parent=11 // pred_fallthru
          _
      $region12: #{tpu_custom_call.1} parent=5 // pred_fallthru
        _
      %p348 = scmp.lt.s32.totalorder %s23, 4
      // Predicated region
      $region25: #{tpu_custom_call.1} parent=5 // pred_check
        %p349 = pneg %p348
      $region26: #{tpu_custom_call.1} parent=5 // pred_check_branch
        %351 = sbr.rel (%p349) target = $region28
      $region27: #{tpu_custom_call.1} parent=5 // pred_region
        // Predicated region
        $region29: #{tpu_custom_call.1} parent=27 // pred_check
          %p352 = pneg %p55
        $region30: #{tpu_custom_call.1} parent=27 // pred_check_branch
          %354 = sbr.rel (%p352) target = $region32
        $region31: #{tpu_custom_call.1} parent=27 // pred_region
          %s355 = sand.u32 %s23, 1
          %s356 = scalar_lea.sflag [#allocation4], %s355
          %s357 = sand.u32 %s45, 1
          %s358 = smul.addr %s357, 8
          %s359 = scalar_lea.vmem [#allocation3], %s358
          %s361 = ssub.s32 128, 128
          %362 = vsyncadd %s356, %s361
          %s363 = smul.addr %s30, 128
          %s364 = scalar_lea.hbm %s0, %s363
          %s366 = sshll.u32 %s359, 4
          %s367 = int_to_ptr.vmem [resolvable:$true] %s366
          %369 = dma.hbm_to_vmem [thread:$0]  %s364, 128, %s367, %s356
        $region32: #{tpu_custom_call.1} parent=27 // pred_fallthru
          _
        // Predicated region
        $region33: #{tpu_custom_call.1} parent=27 // pred_check
          %p370 = pneg %p102
        $region34: #{tpu_custom_call.1} parent=27 // pred_check_branch
          %372 = sbr.rel (%p370) target = $region36
        $region35: #{tpu_custom_call.1} parent=27 // pred_region
          %s373 = sand.u32 %s23, 1
          %s374 = scalar_lea.sflag [#allocation4], %s373
          %s375 = sand.u32 %s92, 1
          %s376 = smul.addr %s375, 32
          %s377 = scalar_lea.vmem [#allocation8], %s376
          %s379 = ssub.s32 512, 512
          %380 = vsyncadd %s374, %s379
          %s381 = smul.addr %s31, 4
          %s382 = smul.addr %s381, 128
          %s383 = scalar_lea.hbm %s2, %s382
          %s384 = sshll.u32 %s377, 4
          %s385 = int_to_ptr.vmem [resolvable:$true] %s384
          %390 = dma.hbm_to_vmem [thread:$0]  %s383, 512, %s385, %s374, 128, 128, 8
        $region36: #{tpu_custom_call.1} parent=27 // pred_fallthru
          _
        // Predicated region
        $region37: #{tpu_custom_call.1} parent=27 // pred_check
          %p391 = pneg %p128
        $region38: #{tpu_custom_call.1} parent=27 // pred_check_branch
          %393 = sbr.rel (%p391) target = $region40
        $region39: #{tpu_custom_call.1} parent=27 // pred_region
          %p394 = scmp.lt.s32.totalorder %s31, 1
          %s395 = scalar_select %p394, %s31, 1
          %s396 = scalar_lea.vmem %s3, %s395
        $region40: #{tpu_custom_call.1} parent=27 // pred_fallthru
          _
        // Predicated region
        $region41: #{tpu_custom_call.1} parent=27 // pred_check
          %p397 = pneg %p154
        $region42: #{tpu_custom_call.1} parent=27 // pred_check_branch
          %399 = sbr.rel (%p397) target = $region44
        $region43: #{tpu_custom_call.1} parent=27 // pred_region
          %s400 = sand.u32 %s23, 1
          %s401 = scalar_lea.sflag [#allocation4], %s400
          %s402 = sand.u32 %s144, 1
          %s403 = smul.addr %s402, 32
          %s404 = scalar_lea.vmem [#allocation9], %s403
          %s406 = ssub.s32 512, 512
          %407 = vsyncadd %s401, %s406
          %s408 = smul.addr %s31, 4
          %s409 = smul.addr %s408, 128
          %s410 = scalar_lea.hbm %s4, %s409
          %s411 = sshll.u32 %s404, 4
          %s412 = int_to_ptr.vmem [resolvable:$true] %s411
          %417 = dma.hbm_to_vmem [thread:$0]  %s410, 512, %s412, %s401, 128, 128, 8
        $region44: #{tpu_custom_call.1} parent=27 // pred_fallthru
          _
        // Predicated region
        $region45: #{tpu_custom_call.1} parent=27 // pred_check
          %p418 = pneg %p180
        $region46: #{tpu_custom_call.1} parent=27 // pred_check_branch
          %420 = sbr.rel (%p418) target = $region48
        $region47: #{tpu_custom_call.1} parent=27 // pred_region
          %p421 = scmp.lt.s32.totalorder %s31, 1
          %s422 = scalar_select %p421, %s31, 1
          %s423 = scalar_lea.vmem %s5, %s422
        $region48: #{tpu_custom_call.1} parent=27 // pred_fallthru
          _
        // Predicated region
        $region49: #{tpu_custom_call.1} parent=27 // pred_check
          %p424 = pneg %p206
        $region50: #{tpu_custom_call.1} parent=27 // pred_check_branch
          %426 = sbr.rel (%p424) target = $region52
        $region51: #{tpu_custom_call.1} parent=27 // pred_region
          %p427 = scmp.lt.s32.totalorder %s31, 1
          %s428 = scalar_select %p427, %s31, 1
          %s429 = scalar_lea.vmem %s6, %s428
        $region52: #{tpu_custom_call.1} parent=27 // pred_fallthru
          _
        // Predicated region
        $region53: #{tpu_custom_call.1} parent=27 // pred_check
          %p430 = pneg %p232
        $region54: #{tpu_custom_call.1} parent=27 // pred_check_branch
          %432 = sbr.rel (%p430) target = $region56
        $region55: #{tpu_custom_call.1} parent=27 // pred_region
          %p433 = scmp.lt.s32.totalorder %s31, 1
          %s434 = scalar_select %p433, %s31, 1
          %s435 = scalar_lea.vmem %s7, %s434
        $region56: #{tpu_custom_call.1} parent=27 // pred_fallthru
          _
      $region28: #{tpu_custom_call.1} parent=5 // pred_fallthru
        _
      %p436 = scmp.le.s32.totalorder 1, %s23
      %p437 = scmp.lt.s32.totalorder %s23, 5
      %p438 = pnand %p436, %p437
      %p439 = pneg %p438
      // Predicated region
      $region57: #{tpu_custom_call.1} parent=5 // pred_check
        _
      $region58: #{tpu_custom_call.1} parent=5 // pred_check_branch
        %441 = sbr.rel (%p438) target = $region60
      $region59: #{tpu_custom_call.1} parent=5 // pred_region
        %s442 = ssub.s32 %s23, 1
        %s443 = sand.u32 %s28, 1
        %s444 = scalar_lea.sflag [#allocation4], %s443
        %s445 = sand.u32 %s48, 1
        %s446 = smul.addr %s445, 8
        %s447 = scalar_lea.vmem [#allocation3], %s446
        // Predicated region
        $region61: #{tpu_custom_call.1} parent=59 // pred_check
          %p448 = pneg %p61
        $region62: #{tpu_custom_call.1} parent=59 // pred_check_branch
          %450 = sbr.rel (%p448) target = $region64
        $region63: #{tpu_custom_call.1} parent=59 // pred_region
          %451 = dma.done %s444, 128
        $region64: #{tpu_custom_call.1} parent=59 // pred_fallthru
          _
        // Predicated region
        $region65: #{tpu_custom_call.1} parent=59 // pred_check
          %p452 = pneg %p82
        $region66: #{tpu_custom_call.1} parent=59 // pred_check_branch
          %454 = sbr.rel (%p452) target = $region68
        $region67: #{tpu_custom_call.1} parent=59 // pred_region
          %455 = dma.done [#allocation7], 128
        $region68: #{tpu_custom_call.1} parent=59 // pred_fallthru
          _
        %s456 = sand.u32 %s28, 1
        %s457 = scalar_lea.sflag [#allocation4], %s456
        %s458 = sand.u32 %s95, 1
        %s459 = smul.addr %s458, 32
        %s460 = scalar_lea.vmem [#allocation8], %s459
        // Predicated region
        $region69: #{tpu_custom_call.1} parent=59 // pred_check
          %p461 = pneg %p108
        $region70: #{tpu_custom_call.1} parent=59 // pred_check_branch
          %463 = sbr.rel (%p461) target = $region72
        $region71: #{tpu_custom_call.1} parent=59 // pred_region
          %464 = dma.done %s457, 512
        $region72: #{tpu_custom_call.1} parent=59 // pred_fallthru
          _
        %s465 = sand.u32 %s28, 1
        %s466 = scalar_lea.sflag [#allocation4], %s465
        %s467 = sand.u32 %s147, 1
        %s468 = smul.addr %s467, 32
        %s469 = scalar_lea.vmem [#allocation9], %s468
        // Predicated region
        $region73: #{tpu_custom_call.1} parent=59 // pred_check
          %p470 = pneg %p160
        $region74: #{tpu_custom_call.1} parent=59 // pred_check_branch
          %472 = sbr.rel (%p470) target = $region76
        $region75: #{tpu_custom_call.1} parent=59 // pred_region
          %473 = dma.done %s466, 512
        $region76: #{tpu_custom_call.1} parent=59 // pred_fallthru
          _
        // Predicated region
        $region77: #{tpu_custom_call.1} parent=59 // pred_check
          %p474 = pneg %p259
        $region78: #{tpu_custom_call.1} parent=59 // pred_check_branch
          %476 = sbr.rel (%p474) target = $region80
        $region79: #{tpu_custom_call.1} parent=59 // pred_region
          %477 = dma.done [#allocation7], 512
        $region80: #{tpu_custom_call.1} parent=59 // pred_fallthru
          _
        %s478 = sand.u32 %s28, 1
        %s479 = scalar_lea.sflag [#allocation4], %s478
        %s480 = sand.u32 %s48, 1
        %s481 = smul.addr %s480, 8
        %s482 = scalar_lea.vmem [#allocation3], %s481
        %p483 = pneg %p61
        %p484 = pneg %p58
        %p485 = pneg %p82
        %p486 = pneg %p79
        %s487 = sand.u32 %s28, 1
        %s488 = scalar_lea.sflag [#allocation4], %s487
        %s489 = sand.u32 %s95, 1
        %s490 = smul.addr %s489, 32
        %s491 = scalar_lea.vmem [#allocation8], %s490
        %p492 = pneg %p108
        %p493 = pneg %p105
        %p494 = scmp.lt.s32.totalorder %s33, 1
        %s495 = scalar_select %p494, %s33, 1
        %s496 = scalar_lea.vmem %s3, %s495
        %p497 = pneg %p134
        %p498 = pneg %p131
        %s499 = sand.u32 %s28, 1
        %s500 = scalar_lea.sflag [#allocation4], %s499
        %s501 = sand.u32 %s147, 1
        %s502 = smul.addr %s501, 32
        %s503 = scalar_lea.vmem [#allocation9], %s502
        %p504 = pneg %p160
        %p505 = pneg %p157
        %p506 = scmp.lt.s32.totalorder %s33, 1
        %s507 = scalar_select %p506, %s33, 1
        %s508 = scalar_lea.vmem %s5, %s507
        %p509 = pneg %p186
        %p510 = pneg %p183
        %p511 = scmp.lt.s32.totalorder %s33, 1
        %s512 = scalar_select %p511, %s33, 1
        %s513 = scalar_lea.vmem %s6, %s512
        %p514 = pneg %p212
        %p515 = pneg %p209
        %p516 = scmp.lt.s32.totalorder %s33, 1
        %s517 = scalar_select %p516, %s33, 1
        %s518 = scalar_lea.vmem %s7, %s517
        %p519 = pneg %p238
        %p520 = pneg %p235
        %p521 = pneg %p259
        %p522 = pneg %p256
        %p523 = pneg %p280
        %p524 = pneg %p277
        %p525 = pneg %p306
        %p526 = pneg %p303
        %s527 = sand.u32 %s293, 1
        %s528 = scalar_lea.sflag [#allocation5], %s527
        %s529 = sand.u32 %s293, 1
        %s530 = scalar_lea.vmem [#allocation11], %s529
        %p531 = scmp.lt.s32.totalorder %s33, 1
        %s532 = scalar_select %p531, %s33, 1
        %s533 = scalar_lea.vmem %s3, %s532
        %p534 = scmp.lt.s32.totalorder %s33, 1
        %s535 = scalar_select %p534, %s33, 1
        %s536 = scalar_lea.vmem %s5, %s535
        %p537 = scmp.lt.s32.totalorder %s33, 1
        %s538 = scalar_select %p537, %s33, 1
        %s539 = scalar_lea.vmem %s6, %s538
        %p540 = scmp.lt.s32.totalorder %s33, 1
        %s541 = scalar_select %p540, %s33, 1
        %s542 = scalar_lea.vmem %s7, %s541
        %p543 = scmp.eq.s32.totalorder %s33, 0
        // Predicated region
        $region81: #{tpu_custom_call.1} parent=59 // pred_check
          %p544 = pneg %p543
        $region82: #{tpu_custom_call.1} parent=59 // pred_check_branch
          %546 = sbr.rel (%p544) target = $region84
        $region83: #{tpu_custom_call.1} parent=59 // pred_region
          %v547 = vld [vmem:[%s447] sm:$0xff]
          %v548 = vld [vmem:[#allocation6] sm:$0xff]
          %v549 = vadd.f32 %v547, %v548
          %vm550 = vcmask 261120
          %551 = vst.msk [vmem:[#allocation2] sm:$0xff] %vm550, %v549
        $region84: #{tpu_custom_call.1} parent=59 // pred_fallthru
          _
        %v552 = vld [vmem:[#allocation2] sm:$0xff]
        %v553 = vld [vmem:[%s460] sm:$0xff]
        %v554 = vld [vmem:[%s460 + $0x8] sm:$0xff]
        %v555 = vld [vmem:[%s460 + $0x10] sm:$0xff]
        %v556 = vld [vmem:[%s460 + $0x18] sm:$0xff]
        %v557 = vld [vmem:[%s533] sm:$0x1]
        %v559 = vlaneseq
        %v560 = vshrl.u32 %v559, 7
        %v561 = vsub.s32 0, %v560
        %v562 = vrot.slane %v557, %v561
        %vm564 = vcmask 261120
        %v566 = vsel %vm564, %v552, 0
        %568 = vmatprep.subr.mxu0 0.0
        %569 = vmatpush1.msra.mxu0 %v553
        %570 = vmatprep.subr.mxu0 0.0
        %571 = vmatpush1.msra.mxu0 %v554
        %572 = vmatprep.subr.mxu0 0.0
        %573 = vmatpush1.msra.mxu0 %v555
        %574 = vmatprep.subr.mxu0 0.0
        %575 = vmatpush1.msra.mxu0 %v556
        %576 = vmatprep.subr.mxu0 0.0
        %577 = vmatpush1.msra.mxu0 0.0
        %578 = vmatprep.subr.mxu0 0.0
        %579 = vmatpush1.msra.mxu0 0.0
        %580 = vmatprep.subr.mxu0 0.0
        %581 = vmatpush1.msra.mxu0 0.0
        %582 = vmatprep.subr.mxu0 0.0
        %583 = vmatpush1.msra.mxu0 0.0
        %584 = vmatprep.subr.mxu0 0.0
        %585 = vmatpush1.msra.mxu0 0.0
        %586 = vmatprep.subr.mxu0 0.0
        %587 = vmatpush1.msra.mxu0 0.0
        %588 = vmatprep.subr.mxu0 0.0
        %589 = vmatpush1.msra.mxu0 0.0
        %590 = vmatprep.subr.mxu0 0.0
        %591 = vmatpush1.msra.mxu0 0.0
        %592 = vmatprep.subr.mxu0 0.0
        %593 = vmatpush1.msra.mxu0 0.0
        %594 = vmatprep.subr.mxu0 0.0
        %595 = vmatpush1.msra.mxu0 0.0
        %596 = vmatprep.subr.mxu0 0.0
        %597 = vmatpush1.msra.mxu0 0.0
        %598 = vmatprep.subr.mxu0 0.0
        %599 = vmatpush1.msra.mxu0 0.0
        %600 = vmatprep.subr.mxu0 0.0
        %601 = vmatpush1.msra.mxu0 0.0
        %602 = vmatprep.subr.mxu0 0.0
        %603 = vmatpush1.msra.mxu0 0.0
        %604 = vmatprep.subr.mxu0 0.0
        %605 = vmatpush1.msra.mxu0 0.0
        %606 = vmatprep.subr.mxu0 0.0
        %607 = vmatpush1.msra.mxu0 0.0
        %608 = vmatprep.subr.mxu0 0.0
        %609 = vmatpush1.msra.mxu0 0.0
        %610 = vmatprep.subr.mxu0 0.0
        %611 = vmatpush1.msra.mxu0 0.0
        %612 = vmatprep.subr.mxu0 0.0
        %613 = vmatpush1.msra.mxu0 0.0
        %614 = vmatprep.subr.mxu0 0.0
        %615 = vmatpush1.msra.mxu0 0.0
        %616 = vmatprep.subr.mxu0 0.0
        %617 = vmatpush1.msra.mxu0 0.0
        %618 = vmatprep.subr.mxu0 0.0
        %619 = vmatpush1.msra.mxu0 0.0
        %620 = vmatprep.subr.mxu0 0.0
        %621 = vmatpush1.msra.mxu0 0.0
        %622 = vmatprep.subr.mxu0 0.0
        %623 = vmatpush1.msra.mxu0 0.0
        %624 = vmatprep.subr.mxu0 0.0
        %625 = vmatpush1.msra.mxu0 0.0
        %626 = vmatprep.subr.mxu0 0.0
        %627 = vmatpush1.msra.mxu0 0.0
        %628 = vmatprep.subr.mxu0 0.0
        %629 = vmatpush1.msra.mxu0 0.0
        %630 = vmatprep.subr.mxu0 0.0
        %631 = vmatpush1.msra.mxu0 0.0
        %632 = vmatprep.mubr.f32.mxu0 0.0
        %633 = vmatmul.mubr.f32.gmra.mrb[0].mxu0 %v566
        %v634 = vpop.f32.mrb[0].mxu0
        %v635 = vadd.f32 %v562, %v634
        %v636 = vpop.f32.mrb[0].mxu0
        %637 = vdwg.mxu0
        %639 = vrot.lane.b32.xlu0 %v635, 120
        %v640 = vpop.permute.xlu0 %639
        %641 = vrot.lane.b32.xlu0 %v635, 112
        %v642 = vpop.permute.xlu0 %641
        %643 = vrot.lane.b32.xlu0 %v635, 104
        %v644 = vpop.permute.xlu0 %643
        %645 = vrot.lane.b32.xlu0 %v635, 96
        %v646 = vpop.permute.xlu0 %645
        %vm647 = vcmask 64512
        %v648 = vsel %vm647, %v635, 0
        %v650 = vsel %vm647, %v646, 0
        %652 = vmatprep.subr.mxu0 0.0
        %653 = vmatpush1.xpose.msra.mxu0 %v650
        %654 = vmatprep.subr.mxu0 0.0
        %655 = vmatpush1.xpose.msra.mxu0 0.0
        %656 = vmatprep.subr.mxu0 0.0
        %657 = vmatpush1.xpose.msra.mxu0 0.0
        %658 = vmatprep.subr.mxu0 0.0
        %659 = vmatpush1.xpose.msra.mxu0 0.0
        %660 = vmatprep.subr.mxu0 0.0
        %661 = vmatpush1.xpose.msra.mxu0 0.0
        %662 = vmatprep.subr.mxu0 0.0
        %663 = vmatpush1.xpose.msra.mxu0 0.0
        %664 = vmatprep.subr.mxu0 0.0
        %665 = vmatpush1.xpose.msra.mxu0 0.0
        %666 = vmatprep.subr.mxu0 0.0
        %667 = vmatpush1.xpose.msra.mxu0 0.0
        %668 = vmatprep.subr.mxu0 0.0
        %669 = vmatpush1.xpose.msra.mxu0 0.0
        %670 = vmatprep.subr.mxu0 0.0
        %671 = vmatpush1.xpose.msra.mxu0 0.0
        %672 = vmatprep.subr.mxu0 0.0
        %673 = vmatpush1.xpose.msra.mxu0 0.0
        %674 = vmatprep.subr.mxu0 0.0
        %675 = vmatpush1.xpose.msra.mxu0 0.0
        %676 = vmatprep.subr.mxu0 0.0
        %677 = vmatpush1.xpose.msra.mxu0 0.0
        %678 = vmatprep.subr.mxu0 0.0
        %679 = vmatpush1.xpose.msra.mxu0 0.0
        %680 = vmatprep.subr.mxu0 0.0
        %681 = vmatpush1.xpose.msra.mxu0 0.0
        %682 = vmatprep.subr.mxu0 0.0
        %683 = vmatpush1.xpose.msra.mxu0 0.0
        %684 = vmatprep.subr.mxu0 0.0
        %685 = vmatpush1.xpose.msra.mxu0 0.0
        %686 = vmatprep.subr.mxu0 0.0
        %687 = vmatpush1.xpose.msra.mxu0 0.0
        %688 = vmatprep.subr.mxu0 0.0
        %689 = vmatpush1.xpose.msra.mxu0 0.0
        %690 = vmatprep.subr.mxu0 0.0
        %691 = vmatpush1.xpose.msra.mxu0 0.0
        %692 = vmatprep.subr.mxu0 0.0
        %693 = vmatpush1.xpose.msra.mxu0 0.0
        %694 = vmatprep.subr.mxu0 0.0
        %695 = vmatpush1.xpose.msra.mxu0 0.0
        %696 = vmatprep.subr.mxu0 0.0
        %697 = vmatpush1.xpose.msra.mxu0 0.0
        %698 = vmatprep.subr.mxu0 0.0
        %699 = vmatpush1.xpose.msra.mxu0 0.0
        %700 = vmatprep.subr.mxu0 0.0
        %701 = vmatpush1.xpose.msra.mxu0 0.0
        %702 = vmatprep.subr.mxu0 0.0
        %703 = vmatpush1.xpose.msra.mxu0 0.0
        %704 = vmatprep.subr.mxu0 0.0
        %705 = vmatpush1.xpose.msra.mxu0 0.0
        %706 = vmatprep.subr.mxu0 0.0
        %707 = vmatpush1.xpose.msra.mxu0 0.0
        %708 = vmatprep.subr.mxu0 0.0
        %709 = vmatpush1.xpose.msra.mxu0 0.0
        %710 = vmatprep.subr.mxu0 0.0
        %711 = vmatpush1.xpose.msra.mxu0 0.0
        %712 = vmatprep.subr.mxu0 0.0
        %713 = vmatpush1.xpose.msra.mxu0 0.0
        %714 = vmatprep.subr.mxu0 0.0
        %715 = vmatpush1.xpose.msra.mxu0 0.0
        %716 = vmatprep.mubr.f32.mxu0 0.0
        %717 = vmatmul.mubr.f32.gmra.mrb[0].mxu0 %v648
        %v718 = vpop.f32.mrb[0].mxu0
        %v719 = vadd.f32 0.0, %v718
        %v720 = vpop.f32.mrb[0].mxu0
        %721 = vdwg.mxu0
        %722 = vrot.lane.b32.xlu0 %v640, 96
        %v723 = vpop.permute.xlu0 %722
        %v724 = vsel %vm647, %v640, 0
        %v726 = vsel %vm647, %v723, 0
        %728 = vmatprep.subr.mxu0 0.0
        %729 = vmatpush1.xpose.msra.mxu0 %v726
        %730 = vmatprep.subr.mxu0 0.0
        %731 = vmatpush1.xpose.msra.mxu0 0.0
        %732 = vmatprep.subr.mxu0 0.0
        %733 = vmatpush1.xpose.msra.mxu0 0.0
        %734 = vmatprep.subr.mxu0 0.0
        %735 = vmatpush1.xpose.msra.mxu0 0.0
        %736 = vmatprep.subr.mxu0 0.0
        %737 = vmatpush1.xpose.msra.mxu0 0.0
        %738 = vmatprep.subr.mxu0 0.0
        %739 = vmatpush1.xpose.msra.mxu0 0.0
        %740 = vmatprep.subr.mxu0 0.0
        %741 = vmatpush1.xpose.msra.mxu0 0.0
        %742 = vmatprep.subr.mxu0 0.0
        %743 = vmatpush1.xpose.msra.mxu0 0.0
        %744 = vmatprep.subr.mxu0 0.0
        %745 = vmatpush1.xpose.msra.mxu0 0.0
        %746 = vmatprep.subr.mxu0 0.0
        %747 = vmatpush1.xpose.msra.mxu0 0.0
        %748 = vmatprep.subr.mxu0 0.0
        %749 = vmatpush1.xpose.msra.mxu0 0.0
        %750 = vmatprep.subr.mxu0 0.0
        %751 = vmatpush1.xpose.msra.mxu0 0.0
        %752 = vmatprep.subr.mxu0 0.0
        %753 = vmatpush1.xpose.msra.mxu0 0.0
        %754 = vmatprep.subr.mxu0 0.0
        %755 = vmatpush1.xpose.msra.mxu0 0.0
        %756 = vmatprep.subr.mxu0 0.0
        %757 = vmatpush1.xpose.msra.mxu0 0.0
        %758 = vmatprep.subr.mxu0 0.0
        %759 = vmatpush1.xpose.msra.mxu0 0.0
        %760 = vmatprep.subr.mxu0 0.0
        %761 = vmatpush1.xpose.msra.mxu0 0.0
        %762 = vmatprep.subr.mxu0 0.0
        %763 = vmatpush1.xpose.msra.mxu0 0.0
        %764 = vmatprep.subr.mxu0 0.0
        %765 = vmatpush1.xpose.msra.mxu0 0.0
        %766 = vmatprep.subr.mxu0 0.0
        %767 = vmatpush1.xpose.msra.mxu0 0.0
        %768 = vmatprep.subr.mxu0 0.0
        %769 = vmatpush1.xpose.msra.mxu0 0.0
        %770 = vmatprep.subr.mxu0 0.0
        %771 = vmatpush1.xpose.msra.mxu0 0.0
        %772 = vmatprep.subr.mxu0 0.0
        %773 = vmatpush1.xpose.msra.mxu0 0.0
        %774 = vmatprep.subr.mxu0 0.0
        %775 = vmatpush1.xpose.msra.mxu0 0.0
        %776 = vmatprep.subr.mxu0 0.0
        %777 = vmatpush1.xpose.msra.mxu0 0.0
        %778 = vmatprep.subr.mxu0 0.0
        %779 = vmatpush1.xpose.msra.mxu0 0.0
        %780 = vmatprep.subr.mxu0 0.0
        %781 = vmatpush1.xpose.msra.mxu0 0.0
        %782 = vmatprep.subr.mxu0 0.0
        %783 = vmatpush1.xpose.msra.mxu0 0.0
        %784 = vmatprep.subr.mxu0 0.0
        %785 = vmatpush1.xpose.msra.mxu0 0.0
        %786 = vmatprep.subr.mxu0 0.0
        %787 = vmatpush1.xpose.msra.mxu0 0.0
        %788 = vmatprep.subr.mxu0 0.0
        %789 = vmatpush1.xpose.msra.mxu0 0.0
        %790 = vmatprep.subr.mxu0 0.0
        %791 = vmatpush1.xpose.msra.mxu0 0.0
        %792 = vmatprep.mubr.f32.mxu0 0.0
        %793 = vmatmul.mubr.f32.gmra.mrb[0].mxu0 %v724
        %v794 = vpop.f32.mrb[0].mxu0
        %v795 = vadd.f32 0.0, %v794
        %v796 = vpop.f32.mrb[0].mxu0
        %797 = vdwg.mxu0
        %798 = vrot.lane.b32.xlu0 %v642, 96
        %v799 = vpop.permute.xlu0 %798
        %v800 = vsel %vm647, %v642, 0
        %v802 = vsel %vm647, %v799, 0
        %804 = vmatprep.subr.mxu0 0.0
        %805 = vmatpush1.xpose.msra.mxu0 %v802
        %806 = vmatprep.subr.mxu0 0.0
        %807 = vmatpush1.xpose.msra.mxu0 0.0
        %808 = vmatprep.subr.mxu0 0.0
        %809 = vmatpush1.xpose.msra.mxu0 0.0
        %810 = vmatprep.subr.mxu0 0.0
        %811 = vmatpush1.xpose.msra.mxu0 0.0
        %812 = vmatprep.subr.mxu0 0.0
        %813 = vmatpush1.xpose.msra.mxu0 0.0
        %814 = vmatprep.subr.mxu0 0.0
        %815 = vmatpush1.xpose.msra.mxu0 0.0
        %816 = vmatprep.subr.mxu0 0.0
        %817 = vmatpush1.xpose.msra.mxu0 0.0
        %818 = vmatprep.subr.mxu0 0.0
        %819 = vmatpush1.xpose.msra.mxu0 0.0
        %820 = vmatprep.subr.mxu0 0.0
        %821 = vmatpush1.xpose.msra.mxu0 0.0
        %822 = vmatprep.subr.mxu0 0.0
        %823 = vmatpush1.xpose.msra.mxu0 0.0
        %824 = vmatprep.subr.mxu0 0.0
        %825 = vmatpush1.xpose.msra.mxu0 0.0
        %826 = vmatprep.subr.mxu0 0.0
        %827 = vmatpush1.xpose.msra.mxu0 0.0
        %828 = vmatprep.subr.mxu0 0.0
        %829 = vmatpush1.xpose.msra.mxu0 0.0
        %830 = vmatprep.subr.mxu0 0.0
        %831 = vmatpush1.xpose.msra.mxu0 0.0
        %832 = vmatprep.subr.mxu0 0.0
        %833 = vmatpush1.xpose.msra.mxu0 0.0
        %834 = vmatprep.subr.mxu0 0.0
        %835 = vmatpush1.xpose.msra.mxu0 0.0
        %836 = vmatprep.subr.mxu0 0.0
        %837 = vmatpush1.xpose.msra.mxu0 0.0
        %838 = vmatprep.subr.mxu0 0.0
        %839 = vmatpush1.xpose.msra.mxu0 0.0
        %840 = vmatprep.subr.mxu0 0.0
        %841 = vmatpush1.xpose.msra.mxu0 0.0
        %842 = vmatprep.subr.mxu0 0.0
        %843 = vmatpush1.xpose.msra.mxu0 0.0
        %844 = vmatprep.subr.mxu0 0.0
        %845 = vmatpush1.xpose.msra.mxu0 0.0
        %846 = vmatprep.subr.mxu0 0.0
        %847 = vmatpush1.xpose.msra.mxu0 0.0
        %848 = vmatprep.subr.mxu0 0.0
        %849 = vmatpush1.xpose.msra.mxu0 0.0
        %850 = vmatprep.subr.mxu0 0.0
        %851 = vmatpush1.xpose.msra.mxu0 0.0
        %852 = vmatprep.subr.mxu0 0.0
        %853 = vmatpush1.xpose.msra.mxu0 0.0
        %854 = vmatprep.subr.mxu0 0.0
        %855 = vmatpush1.xpose.msra.mxu0 0.0
        %856 = vmatprep.subr.mxu0 0.0
        %857 = vmatpush1.xpose.msra.mxu0 0.0
        %858 = vmatprep.subr.mxu0 0.0
        %859 = vmatpush1.xpose.msra.mxu0 0.0
        %860 = vmatprep.subr.mxu0 0.0
        %861 = vmatpush1.xpose.msra.mxu0 0.0
        %862 = vmatprep.subr.mxu0 0.0
        %863 = vmatpush1.xpose.msra.mxu0 0.0
        %864 = vmatprep.subr.mxu0 0.0
        %865 = vmatpush1.xpose.msra.mxu0 0.0
        %866 = vmatprep.subr.mxu0 0.0
        %867 = vmatpush1.xpose.msra.mxu0 0.0
        %868 = vmatprep.mubr.f32.mxu0 0.0
        %869 = vmatmul.mubr.f32.gmra.mrb[0].mxu0 %v800
        %v870 = vpop.f32.mrb[0].mxu0
        %v871 = vadd.f32 0.0, %v870
        %v872 = vpop.f32.mrb[0].mxu0
        %873 = vdwg.mxu0
        %874 = vrot.lane.b32.xlu0 %v644, 96
        %v875 = vpop.permute.xlu0 %874
        %v876 = vsel %vm647, %v644, 0
        %v878 = vsel %vm647, %v875, 0
        %880 = vmatprep.subr.mxu0 0.0
        %881 = vmatpush1.xpose.msra.mxu0 %v878
        %882 = vmatprep.subr.mxu0 0.0
        %883 = vmatpush1.xpose.msra.mxu0 0.0
        %884 = vmatprep.subr.mxu0 0.0
        %885 = vmatpush1.xpose.msra.mxu0 0.0
        %886 = vmatprep.subr.mxu0 0.0
        %887 = vmatpush1.xpose.msra.mxu0 0.0
        %888 = vmatprep.subr.mxu0 0.0
        %889 = vmatpush1.xpose.msra.mxu0 0.0
        %890 = vmatprep.subr.mxu0 0.0
        %891 = vmatpush1.xpose.msra.mxu0 0.0
        %892 = vmatprep.subr.mxu0 0.0
        %893 = vmatpush1.xpose.msra.mxu0 0.0
        %894 = vmatprep.subr.mxu0 0.0
        %895 = vmatpush1.xpose.msra.mxu0 0.0
        %896 = vmatprep.subr.mxu0 0.0
        %897 = vmatpush1.xpose.msra.mxu0 0.0
        %898 = vmatprep.subr.mxu0 0.0
        %899 = vmatpush1.xpose.msra.mxu0 0.0
        %900 = vmatprep.subr.mxu0 0.0
        %901 = vmatpush1.xpose.msra.mxu0 0.0
        %902 = vmatprep.subr.mxu0 0.0
        %903 = vmatpush1.xpose.msra.mxu0 0.0
        %904 = vmatprep.subr.mxu0 0.0
        %905 = vmatpush1.xpose.msra.mxu0 0.0
        %906 = vmatprep.subr.mxu0 0.0
        %907 = vmatpush1.xpose.msra.mxu0 0.0
        %908 = vmatprep.subr.mxu0 0.0
        %909 = vmatpush1.xpose.msra.mxu0 0.0
        %910 = vmatprep.subr.mxu0 0.0
        %911 = vmatpush1.xpose.msra.mxu0 0.0
        %912 = vmatprep.subr.mxu0 0.0
        %913 = vmatpush1.xpose.msra.mxu0 0.0
        %914 = vmatprep.subr.mxu0 0.0
        %915 = vmatpush1.xpose.msra.mxu0 0.0
        %916 = vmatprep.subr.mxu0 0.0
        %917 = vmatpush1.xpose.msra.mxu0 0.0
        %918 = vmatprep.subr.mxu0 0.0
        %919 = vmatpush1.xpose.msra.mxu0 0.0
        %920 = vmatprep.subr.mxu0 0.0
        %921 = vmatpush1.xpose.msra.mxu0 0.0
        %922 = vmatprep.subr.mxu0 0.0
        %923 = vmatpush1.xpose.msra.mxu0 0.0
        %924 = vmatprep.subr.mxu0 0.0
        %925 = vmatpush1.xpose.msra.mxu0 0.0
        %926 = vmatprep.subr.mxu0 0.0
        %927 = vmatpush1.xpose.msra.mxu0 0.0
        %928 = vmatprep.subr.mxu0 0.0
        %929 = vmatpush1.xpose.msra.mxu0 0.0
        %930 = vmatprep.subr.mxu0 0.0
        %931 = vmatpush1.xpose.msra.mxu0 0.0
        %932 = vmatprep.subr.mxu0 0.0
        %933 = vmatpush1.xpose.msra.mxu0 0.0
        %934 = vmatprep.subr.mxu0 0.0
        %935 = vmatpush1.xpose.msra.mxu0 0.0
        %936 = vmatprep.subr.mxu0 0.0
        %937 = vmatpush1.xpose.msra.mxu0 0.0
        %938 = vmatprep.subr.mxu0 0.0
        %939 = vmatpush1.xpose.msra.mxu0 0.0
        %940 = vmatprep.subr.mxu0 0.0
        %941 = vmatpush1.xpose.msra.mxu0 0.0
        %942 = vmatprep.subr.mxu0 0.0
        %943 = vmatpush1.xpose.msra.mxu0 0.0
        %944 = vmatprep.mubr.f32.mxu0 0.0
        %945 = vmatmul.mubr.f32.gmra.mrb[0].mxu0 %v876
        %v946 = vpop.f32.mrb[0].mxu0
        %v947 = vadd.f32 0.0, %v946
        %v948 = vpop.f32.mrb[0].mxu0
        %949 = vdwg.mxu0
        %v950 = vmul.f32 %v719, 0.35355338
        %v951 = vmul.f32 %v795, 0.35355338
        %v952 = vmul.f32 %v871, 0.35355338
        %v953 = vmul.f32 %v947, 0.35355338
        %v954 = vsel %vm647, %v950, -inf
        %955 = vmax.xlane.f32.xlu0 %v954
        %v956 = vpop.xlane.xlu0 %955
        %v957 = vsel %vm647, %v951, -inf
        %958 = vmax.xlane.f32.xlu0 %v957
        %v959 = vpop.xlane.xlu0 %958
        %v960 = vsel %vm647, %v952, -inf
        %961 = vmax.xlane.f32.xlu0 %v960
        %v962 = vpop.xlane.xlu0 %961
        %v963 = vsel %vm647, %v953, -inf
        %964 = vmax.xlane.f32.xlu0 %v963
        %v965 = vpop.xlane.xlu0 %964
        %v966 = vsub.f32 %v950, %v956
        %v967 = vsub.f32 %v951, %v959
        %v968 = vsub.f32 %v952, %v962
        %v969 = vsub.f32 %v953, %v965
        %v970 = vmul.f32 %v966, 1.442695
        %v971 = vpow.pop %v970
        %v972 = vmul.f32 %v967, 1.442695
        %v973 = vpow.pop %v972
        %v974 = vmul.f32 %v968, 1.442695
        %v975 = vpow.pop %v974
        %v976 = vmul.f32 %v969, 1.442695
        %v977 = vpow.pop %v976
        %v978 = vsel %vm647, %v971, 0.0
        %979 = vadd.xlane.f32.xlu0 %v978
        %v980 = vpop.xlane.xlu0 %979
        %v981 = vsel %vm647, %v973, 0.0
        %982 = vadd.xlane.f32.xlu0 %v981
        %v983 = vpop.xlane.xlu0 %982
        %v984 = vsel %vm647, %v975, 0.0
        %985 = vadd.xlane.f32.xlu0 %v984
        %v986 = vpop.xlane.xlu0 %985
        %v987 = vsel %vm647, %v977, 0.0
        %988 = vadd.xlane.f32.xlu0 %v987
        %v989 = vpop.xlane.xlu0 %988
        %v990 = vrcp.pop %v980
        %v991 = vrcp.pop %v983
        %v992 = vrcp.pop %v986
        %v993 = vrcp.pop %v989
        %v994 = vmul.f32 %v971, %v990
        %v995 = vmul.f32 %v973, %v991
        %v996 = vmul.f32 %v975, %v992
        %v997 = vmul.f32 %v977, %v993
        %998 = vrot.lane.b32.xlu0 %v635, 64
        %v999 = vpop.permute.xlu0 %998
        %v1002 = vsel %vm647, %v994, 0
        %1004 = vmatprep.subr.mxu0 0.0
        %1005 = vmatpush1.msra.mxu0 %v999
        %1006 = vmatprep.subr.mxu0 0.0
        %1007 = vmatpush1.msra.mxu0 0.0
        %1008 = vmatprep.subr.mxu0 0.0
        %1009 = vmatpush1.msra.mxu0 0.0
        %1010 = vmatprep.subr.mxu0 0.0
        %1011 = vmatpush1.msra.mxu0 0.0
        %1012 = vmatprep.subr.mxu0 0.0
        %1013 = vmatpush1.msra.mxu0 0.0
        %1014 = vmatprep.subr.mxu0 0.0
        %1015 = vmatpush1.msra.mxu0 0.0
        %1016 = vmatprep.subr.mxu0 0.0
        %1017 = vmatpush1.msra.mxu0 0.0
        %1018 = vmatprep.subr.mxu0 0.0
        %1019 = vmatpush1.msra.mxu0 0.0
        %1020 = vmatprep.subr.mxu0 0.0
        %1021 = vmatpush1.msra.mxu0 0.0
        %1022 = vmatprep.subr.mxu0 0.0
        %1023 = vmatpush1.msra.mxu0 0.0
        %1024 = vmatprep.subr.mxu0 0.0
        %1025 = vmatpush1.msra.mxu0 0.0
        %1026 = vmatprep.subr.mxu0 0.0
        %1027 = vmatpush1.msra.mxu0 0.0
        %1028 = vmatprep.subr.mxu0 0.0
        %1029 = vmatpush1.msra.mxu0 0.0
        %1030 = vmatprep.subr.mxu0 0.0
        %1031 = vmatpush1.msra.mxu0 0.0
        %1032 = vmatprep.subr.mxu0 0.0
        %1033 = vmatpush1.msra.mxu0 0.0
        %1034 = vmatprep.subr.mxu0 0.0
        %1035 = vmatpush1.msra.mxu0 0.0
        %1036 = vmatprep.subr.mxu0 0.0
        %1037 = vmatpush1.msra.mxu0 0.0
        %1038 = vmatprep.subr.mxu0 0.0
        %1039 = vmatpush1.msra.mxu0 0.0
        %1040 = vmatprep.subr.mxu0 0.0
        %1041 = vmatpush1.msra.mxu0 0.0
        %1042 = vmatprep.subr.mxu0 0.0
        %1043 = vmatpush1.msra.mxu0 0.0
        %1044 = vmatprep.subr.mxu0 0.0
        %1045 = vmatpush1.msra.mxu0 0.0
        %1046 = vmatprep.subr.mxu0 0.0
        %1047 = vmatpush1.msra.mxu0 0.0
        %1048 = vmatprep.subr.mxu0 0.0
        %1049 = vmatpush1.msra.mxu0 0.0
        %1050 = vmatprep.subr.mxu0 0.0
        %1051 = vmatpush1.msra.mxu0 0.0
        %1052 = vmatprep.subr.mxu0 0.0
        %1053 = vmatpush1.msra.mxu0 0.0
        %1054 = vmatprep.subr.mxu0 0.0
        %1055 = vmatpush1.msra.mxu0 0.0
        %1056 = vmatprep.subr.mxu0 0.0
        %1057 = vmatpush1.msra.mxu0 0.0
        %1058 = vmatprep.subr.mxu0 0.0
        %1059 = vmatpush1.msra.mxu0 0.0
        %1060 = vmatprep.subr.mxu0 0.0
        %1061 = vmatpush1.msra.mxu0 0.0
        %1062 = vmatprep.subr.mxu0 0.0
        %1063 = vmatpush1.msra.mxu0 0.0
        %1064 = vmatprep.subr.mxu0 0.0
        %1065 = vmatpush1.msra.mxu0 0.0
        %1066 = vmatprep.subr.mxu0 0.0
        %1067 = vmatpush1.msra.mxu0 0.0
        %1068 = vmatprep.mubr.f32.mxu0 0.0
        %1069 = vmatmul.mubr.f32.gmra.mrb[0].mxu0 %v1002
        %v1070 = vpop.f32.mrb[0].mxu0
        %v1071 = vadd.f32 0.0, %v1070
        %v1072 = vpop.f32.mrb[0].mxu0
        %1073 = vdwg.mxu0
        %1074 = vrot.lane.b32.xlu0 %v640, 64
        %v1075 = vpop.permute.xlu0 %1074
        %v1078 = vsel %vm647, %v995, 0
        %1080 = vmatprep.subr.mxu0 0.0
        %1081 = vmatpush1.msra.mxu0 %v1075
        %1082 = vmatprep.subr.mxu0 0.0
        %1083 = vmatpush1.msra.mxu0 0.0
        %1084 = vmatprep.subr.mxu0 0.0
        %1085 = vmatpush1.msra.mxu0 0.0
        %1086 = vmatprep.subr.mxu0 0.0
        %1087 = vmatpush1.msra.mxu0 0.0
        %1088 = vmatprep.subr.mxu0 0.0
        %1089 = vmatpush1.msra.mxu0 0.0
        %1090 = vmatprep.subr.mxu0 0.0
        %1091 = vmatpush1.msra.mxu0 0.0
        %1092 = vmatprep.subr.mxu0 0.0
        %1093 = vmatpush1.msra.mxu0 0.0
        %1094 = vmatprep.subr.mxu0 0.0
        %1095 = vmatpush1.msra.mxu0 0.0
        %1096 = vmatprep.subr.mxu0 0.0
        %1097 = vmatpush1.msra.mxu0 0.0
        %1098 = vmatprep.subr.mxu0 0.0
        %1099 = vmatpush1.msra.mxu0 0.0
        %1100 = vmatprep.subr.mxu0 0.0
        %1101 = vmatpush1.msra.mxu0 0.0
        %1102 = vmatprep.subr.mxu0 0.0
        %1103 = vmatpush1.msra.mxu0 0.0
        %1104 = vmatprep.subr.mxu0 0.0
        %1105 = vmatpush1.msra.mxu0 0.0
        %1106 = vmatprep.subr.mxu0 0.0
        %1107 = vmatpush1.msra.mxu0 0.0
        %1108 = vmatprep.subr.mxu0 0.0
        %1109 = vmatpush1.msra.mxu0 0.0
        %1110 = vmatprep.subr.mxu0 0.0
        %1111 = vmatpush1.msra.mxu0 0.0
        %1112 = vmatprep.subr.mxu0 0.0
        %1113 = vmatpush1.msra.mxu0 0.0
        %1114 = vmatprep.subr.mxu0 0.0
        %1115 = vmatpush1.msra.mxu0 0.0
        %1116 = vmatprep.subr.mxu0 0.0
        %1117 = vmatpush1.msra.mxu0 0.0
        %1118 = vmatprep.subr.mxu0 0.0
        %1119 = vmatpush1.msra.mxu0 0.0
        %1120 = vmatprep.subr.mxu0 0.0
        %1121 = vmatpush1.msra.mxu0 0.0
        %1122 = vmatprep.subr.mxu0 0.0
        %1123 = vmatpush1.msra.mxu0 0.0
        %1124 = vmatprep.subr.mxu0 0.0
        %1125 = vmatpush1.msra.mxu0 0.0
        %1126 = vmatprep.subr.mxu0 0.0
        %1127 = vmatpush1.msra.mxu0 0.0
        %1128 = vmatprep.subr.mxu0 0.0
        %1129 = vmatpush1.msra.mxu0 0.0
        %1130 = vmatprep.subr.mxu0 0.0
        %1131 = vmatpush1.msra.mxu0 0.0
        %1132 = vmatprep.subr.mxu0 0.0
        %1133 = vmatpush1.msra.mxu0 0.0
        %1134 = vmatprep.subr.mxu0 0.0
        %1135 = vmatpush1.msra.mxu0 0.0
        %1136 = vmatprep.subr.mxu0 0.0
        %1137 = vmatpush1.msra.mxu0 0.0
        %1138 = vmatprep.subr.mxu0 0.0
        %1139 = vmatpush1.msra.mxu0 0.0
        %1140 = vmatprep.subr.mxu0 0.0
        %1141 = vmatpush1.msra.mxu0 0.0
        %1142 = vmatprep.subr.mxu0 0.0
        %1143 = vmatpush1.msra.mxu0 0.0
        %1144 = vmatprep.mubr.f32.mxu0 0.0
        %1145 = vmatmul.mubr.f32.gmra.mrb[0].mxu0 %v1078
        %v1146 = vpop.f32.mrb[0].mxu0
        %v1147 = vadd.f32 0.0, %v1146
        %v1148 = vpop.f32.mrb[0].mxu0
        %1149 = vdwg.mxu0
        %1150 = vrot.lane.b32.xlu0 %v642, 64
        %v1151 = vpop.permute.xlu0 %1150
        %v1154 = vsel %vm647, %v996, 0
        %1156 = vmatprep.subr.mxu0 0.0
        %1157 = vmatpush1.msra.mxu0 %v1151
        %1158 = vmatprep.subr.mxu0 0.0
        %1159 = vmatpush1.msra.mxu0 0.0
        %1160 = vmatprep.subr.mxu0 0.0
        %1161 = vmatpush1.msra.mxu0 0.0
        %1162 = vmatprep.subr.mxu0 0.0
        %1163 = vmatpush1.msra.mxu0 0.0
        %1164 = vmatprep.subr.mxu0 0.0
        %1165 = vmatpush1.msra.mxu0 0.0
        %1166 = vmatprep.subr.mxu0 0.0
        %1167 = vmatpush1.msra.mxu0 0.0
        %1168 = vmatprep.subr.mxu0 0.0
        %1169 = vmatpush1.msra.mxu0 0.0
        %1170 = vmatprep.subr.mxu0 0.0
        %1171 = vmatpush1.msra.mxu0 0.0
        %1172 = vmatprep.subr.mxu0 0.0
        %1173 = vmatpush1.msra.mxu0 0.0
        %1174 = vmatprep.subr.mxu0 0.0
        %1175 = vmatpush1.msra.mxu0 0.0
        %1176 = vmatprep.subr.mxu0 0.0
        %1177 = vmatpush1.msra.mxu0 0.0
        %1178 = vmatprep.subr.mxu0 0.0
        %1179 = vmatpush1.msra.mxu0 0.0
        %1180 = vmatprep.subr.mxu0 0.0
        %1181 = vmatpush1.msra.mxu0 0.0
        %1182 = vmatprep.subr.mxu0 0.0
        %1183 = vmatpush1.msra.mxu0 0.0
        %1184 = vmatprep.subr.mxu0 0.0
        %1185 = vmatpush1.msra.mxu0 0.0
        %1186 = vmatprep.subr.mxu0 0.0
        %1187 = vmatpush1.msra.mxu0 0.0
        %1188 = vmatprep.subr.mxu0 0.0
        %1189 = vmatpush1.msra.mxu0 0.0
        %1190 = vmatprep.subr.mxu0 0.0
        %1191 = vmatpush1.msra.mxu0 0.0
        %1192 = vmatprep.subr.mxu0 0.0
        %1193 = vmatpush1.msra.mxu0 0.0
        %1194 = vmatprep.subr.mxu0 0.0
        %1195 = vmatpush1.msra.mxu0 0.0
        %1196 = vmatprep.subr.mxu0 0.0
        %1197 = vmatpush1.msra.mxu0 0.0
        %1198 = vmatprep.subr.mxu0 0.0
        %1199 = vmatpush1.msra.mxu0 0.0
        %1200 = vmatprep.subr.mxu0 0.0
        %1201 = vmatpush1.msra.mxu0 0.0
        %1202 = vmatprep.subr.mxu0 0.0
        %1203 = vmatpush1.msra.mxu0 0.0
        %1204 = vmatprep.subr.mxu0 0.0
        %1205 = vmatpush1.msra.mxu0 0.0
        %1206 = vmatprep.subr.mxu0 0.0
        %1207 = vmatpush1.msra.mxu0 0.0
        %1208 = vmatprep.subr.mxu0 0.0
        %1209 = vmatpush1.msra.mxu0 0.0
        %1210 = vmatprep.subr.mxu0 0.0
        %1211 = vmatpush1.msra.mxu0 0.0
        %1212 = vmatprep.subr.mxu0 0.0
        %1213 = vmatpush1.msra.mxu0 0.0
        %1214 = vmatprep.subr.mxu0 0.0
        %1215 = vmatpush1.msra.mxu0 0.0
        %1216 = vmatprep.subr.mxu0 0.0
        %1217 = vmatpush1.msra.mxu0 0.0
        %1218 = vmatprep.subr.mxu0 0.0
        %1219 = vmatpush1.msra.mxu0 0.0
        %1220 = vmatprep.mubr.f32.mxu0 0.0
        %1221 = vmatmul.mubr.f32.gmra.mrb[0].mxu0 %v1154
        %v1222 = vpop.f32.mrb[0].mxu0
        %v1223 = vadd.f32 0.0, %v1222
        %v1224 = vpop.f32.mrb[0].mxu0
        %1225 = vdwg.mxu0
        %1226 = vrot.lane.b32.xlu0 %v644, 64
        %v1227 = vpop.permute.xlu0 %1226
        %v1230 = vsel %vm647, %v997, 0
        %1232 = vmatprep.subr.mxu0 0.0
        %1233 = vmatpush1.msra.mxu0 %v1227
        %1234 = vmatprep.subr.mxu0 0.0
        %1235 = vmatpush1.msra.mxu0 0.0
        %1236 = vmatprep.subr.mxu0 0.0
        %1237 = vmatpush1.msra.mxu0 0.0
        %1238 = vmatprep.subr.mxu0 0.0
        %1239 = vmatpush1.msra.mxu0 0.0
        %1240 = vmatprep.subr.mxu0 0.0
        %1241 = vmatpush1.msra.mxu0 0.0
        %1242 = vmatprep.subr.mxu0 0.0
        %1243 = vmatpush1.msra.mxu0 0.0
        %1244 = vmatprep.subr.mxu0 0.0
        %1245 = vmatpush1.msra.mxu0 0.0
        %1246 = vmatprep.subr.mxu0 0.0
        %1247 = vmatpush1.msra.mxu0 0.0
        %1248 = vmatprep.subr.mxu0 0.0
        %1249 = vmatpush1.msra.mxu0 0.0
        %1250 = vmatprep.subr.mxu0 0.0
        %1251 = vmatpush1.msra.mxu0 0.0
        %1252 = vmatprep.subr.mxu0 0.0
        %1253 = vmatpush1.msra.mxu0 0.0
        %1254 = vmatprep.subr.mxu0 0.0
        %1255 = vmatpush1.msra.mxu0 0.0
        %1256 = vmatprep.subr.mxu0 0.0
        %1257 = vmatpush1.msra.mxu0 0.0
        %1258 = vmatprep.subr.mxu0 0.0
        %1259 = vmatpush1.msra.mxu0 0.0
        %1260 = vmatprep.subr.mxu0 0.0
        %1261 = vmatpush1.msra.mxu0 0.0
        %1262 = vmatprep.subr.mxu0 0.0
        %1263 = vmatpush1.msra.mxu0 0.0
        %1264 = vmatprep.subr.mxu0 0.0
        %1265 = vmatpush1.msra.mxu0 0.0
        %1266 = vmatprep.subr.mxu0 0.0
        %1267 = vmatpush1.msra.mxu0 0.0
        %1268 = vmatprep.subr.mxu0 0.0
        %1269 = vmatpush1.msra.mxu0 0.0
        %1270 = vmatprep.subr.mxu0 0.0
        %1271 = vmatpush1.msra.mxu0 0.0
        %1272 = vmatprep.subr.mxu0 0.0
        %1273 = vmatpush1.msra.mxu0 0.0
        %1274 = vmatprep.subr.mxu0 0.0
        %1275 = vmatpush1.msra.mxu0 0.0
        %1276 = vmatprep.subr.mxu0 0.0
        %1277 = vmatpush1.msra.mxu0 0.0
        %1278 = vmatprep.subr.mxu0 0.0
        %1279 = vmatpush1.msra.mxu0 0.0
        %1280 = vmatprep.subr.mxu0 0.0
        %1281 = vmatpush1.msra.mxu0 0.0
        %1282 = vmatprep.subr.mxu0 0.0
        %1283 = vmatpush1.msra.mxu0 0.0
        %1284 = vmatprep.subr.mxu0 0.0
        %1285 = vmatpush1.msra.mxu0 0.0
        %1286 = vmatprep.subr.mxu0 0.0
        %1287 = vmatpush1.msra.mxu0 0.0
        %1288 = vmatprep.subr.mxu0 0.0
        %1289 = vmatpush1.msra.mxu0 0.0
        %1290 = vmatprep.subr.mxu0 0.0
        %1291 = vmatpush1.msra.mxu0 0.0
        %1292 = vmatprep.subr.mxu0 0.0
        %1293 = vmatpush1.msra.mxu0 0.0
        %1294 = vmatprep.subr.mxu0 0.0
        %1295 = vmatpush1.msra.mxu0 0.0
        %1296 = vmatprep.mubr.f32.mxu0 0.0
        %1297 = vmatmul.mubr.f32.gmra.mrb[0].mxu0 %v1230
        %v1298 = vpop.f32.mrb[0].mxu0
        %v1299 = vadd.f32 0.0, %v1298
        %v1300 = vpop.f32.mrb[0].mxu0
        %1301 = vdwg.mxu0
        %1303 = vrot.lane.b32.xlu0 %v1147, 8
        %v1304 = vpop.permute.xlu0 %1303
        %1307 = vrot.lane.b32.xlu0 %v1223, 16
        %v1308 = vpop.permute.xlu0 %1307
        %1311 = vrot.lane.b32.xlu0 %v1299, 24
        %v1312 = vpop.permute.xlu0 %1311
        %v1314 = vsel %vm647, %v1071, %v1304
        %vm1315 = vcmask 130048
        %v1316 = vsel %vm1315, %v1314, %v1308
        %vm1317 = vcmask 195584
        %v1318 = vsel %vm1317, %v1316, %v1312
        %v1319 = vld [vmem:[%s469] sm:$0xff]
        %v1320 = vld [vmem:[%s469 + $0x8] sm:$0xff]
        %v1321 = vld [vmem:[%s469 + $0x10] sm:$0xff]
        %v1322 = vld [vmem:[%s469 + $0x18] sm:$0xff]
        %v1323 = vld [vmem:[%s536] sm:$0x1]
        %v1325 = vlaneseq
        %v1326 = vshrl.u32 %v1325, 7
        %v1327 = vsub.s32 0, %v1326
        %v1328 = vrot.slane %v1323, %v1327
        %v1331 = vsel %vm564, %v1318, 0
        %1333 = vmatprep.subr.mxu0 0.0
        %1334 = vmatpush1.msra.mxu0 %v1319
        %1335 = vmatprep.subr.mxu0 0.0
        %1336 = vmatpush1.msra.mxu0 %v1320
        %1337 = vmatprep.subr.mxu0 0.0
        %1338 = vmatpush1.msra.mxu0 %v1321
        %1339 = vmatprep.subr.mxu0 0.0
        %1340 = vmatpush1.msra.mxu0 %v1322
        %1341 = vmatprep.subr.mxu0 0.0
        %1342 = vmatpush1.msra.mxu0 0.0
        %1343 = vmatprep.subr.mxu0 0.0
        %1344 = vmatpush1.msra.mxu0 0.0
        %1345 = vmatprep.subr.mxu0 0.0
        %1346 = vmatpush1.msra.mxu0 0.0
        %1347 = vmatprep.subr.mxu0 0.0
        %1348 = vmatpush1.msra.mxu0 0.0
        %1349 = vmatprep.subr.mxu0 0.0
        %1350 = vmatpush1.msra.mxu0 0.0
        %1351 = vmatprep.subr.mxu0 0.0
        %1352 = vmatpush1.msra.mxu0 0.0
        %1353 = vmatprep.subr.mxu0 0.0
        %1354 = vmatpush1.msra.mxu0 0.0
        %1355 = vmatprep.subr.mxu0 0.0
        %1356 = vmatpush1.msra.mxu0 0.0
        %1357 = vmatprep.subr.mxu0 0.0
        %1358 = vmatpush1.msra.mxu0 0.0
        %1359 = vmatprep.subr.mxu0 0.0
        %1360 = vmatpush1.msra.mxu0 0.0
        %1361 = vmatprep.subr.mxu0 0.0
        %1362 = vmatpush1.msra.mxu0 0.0
        %1363 = vmatprep.subr.mxu0 0.0
        %1364 = vmatpush1.msra.mxu0 0.0
        %1365 = vmatprep.subr.mxu0 0.0
        %1366 = vmatpush1.msra.mxu0 0.0
        %1367 = vmatprep.subr.mxu0 0.0
        %1368 = vmatpush1.msra.mxu0 0.0
        %1369 = vmatprep.subr.mxu0 0.0
        %1370 = vmatpush1.msra.mxu0 0.0
        %1371 = vmatprep.subr.mxu0 0.0
        %1372 = vmatpush1.msra.mxu0 0.0
        %1373 = vmatprep.subr.mxu0 0.0
        %1374 = vmatpush1.msra.mxu0 0.0
        %1375 = vmatprep.subr.mxu0 0.0
        %1376 = vmatpush1.msra.mxu0 0.0
        %1377 = vmatprep.subr.mxu0 0.0
        %1378 = vmatpush1.msra.mxu0 0.0
        %1379 = vmatprep.subr.mxu0 0.0
        %1380 = vmatpush1.msra.mxu0 0.0
        %1381 = vmatprep.subr.mxu0 0.0
        %1382 = vmatpush1.msra.mxu0 0.0
        %1383 = vmatprep.subr.mxu0 0.0
        %1384 = vmatpush1.msra.mxu0 0.0
        %1385 = vmatprep.subr.mxu0 0.0
        %1386 = vmatpush1.msra.mxu0 0.0
        %1387 = vmatprep.subr.mxu0 0.0
        %1388 = vmatpush1.msra.mxu0 0.0
        %1389 = vmatprep.subr.mxu0 0.0
        %1390 = vmatpush1.msra.mxu0 0.0
        %1391 = vmatprep.subr.mxu0 0.0
        %1392 = vmatpush1.msra.mxu0 0.0
        %1393 = vmatprep.subr.mxu0 0.0
        %1394 = vmatpush1.msra.mxu0 0.0
        %1395 = vmatprep.subr.mxu0 0.0
        %1396 = vmatpush1.msra.mxu0 0.0
        %1397 = vmatprep.mubr.f32.mxu0 0.0
        %1398 = vmatmul.mubr.f32.gmra.mrb[0].mxu0 %v1331
        %v1399 = vpop.f32.mrb[0].mxu0
        %v1400 = vadd.f32 %v1328, %v1399
        %v1401 = vpop.f32.mrb[0].mxu0
        %1402 = vdwg.mxu0
        %v1403 = vadd.f32 %v1400, %v552
        %v1404 = vsel %vm564, %v1403, 0.0
        %1405 = vadd.xlane.f32.xlu0 %v1404
        %v1406 = vpop.xlane.xlu0 %1405
        %v1407 = vrcp.pop 32.0
        %v1408 = vmul.f32 %v1406, %v1407
        %v1409 = vsub.f32 %v1403, %v1408
        %v1410 = vmul.f32 %v1409, %v1409
        %v1411 = vsel %vm564, %v1410, 0.0
        %1412 = vadd.xlane.f32.xlu0 %v1411
        %v1413 = vpop.xlane.xlu0 %1412
        %v1414 = vmul.f32 %v1413, %v1407
        %v1415 = vadd.f32 %v1414, 1e-12
        %v1416 = vrsqrt.pop %v1415
        %v1417 = vmul.f32 %v1409, %v1416
        %v1418 = vld [vmem:[%s539] sm:$0x1]
        %v1420 = vlaneseq
        %v1421 = vshrl.u32 %v1420, 7
        %v1422 = vsub.s32 0, %v1421
        %v1423 = vrot.slane %v1418, %v1422
        %v1425 = vmul.f32 %v1417, %v1423
        %v1426 = vld [vmem:[%s542] sm:$0x1]
        %v1428 = vlaneseq
        %v1429 = vshrl.u32 %v1428, 7
        %v1430 = vsub.s32 0, %v1429
        %v1431 = vrot.slane %v1426, %v1430
        %v1433 = vadd.f32 %v1425, %v1431
        %1434 = vst.msk [vmem:[#allocation2] sm:$0xff] %vm564, %v1433
        %p1435 = scmp.eq.s32.totalorder %s33, 1
        // Predicated region
        $region85: #{tpu_custom_call.1} parent=59 // pred_check
          %p1436 = pneg %p1435
        $region86: #{tpu_custom_call.1} parent=59 // pred_check_branch
          %1438 = sbr.rel (%p1436) target = $region88
        $region87: #{tpu_custom_call.1} parent=59 // pred_region
          %v1439 = vld [vmem:[#allocation10] sm:$0xff]
          %v1440 = vld [vmem:[#allocation10 + $0x8] sm:$0xff]
          %v1441 = vld [vmem:[#allocation10 + $0x10] sm:$0xff]
          %v1442 = vld [vmem:[#allocation10 + $0x18] sm:$0xff]
          %v1443 = vld [vmem:[%s9] sm:$0x1]
          %v1445 = vsel %vm564, %v1433, 0
          %1447 = vmatprep.subr.mxu0 0.0
          %1448 = vmatpush1.msra.mxu0 %v1439
          %1449 = vmatprep.subr.mxu0 0.0
          %1450 = vmatpush1.msra.mxu0 %v1440
          %1451 = vmatprep.subr.mxu0 0.0
          %1452 = vmatpush1.msra.mxu0 %v1441
          %1453 = vmatprep.subr.mxu0 0.0
          %1454 = vmatpush1.msra.mxu0 %v1442
          %1455 = vmatprep.subr.mxu0 0.0
          %1456 = vmatpush1.msra.mxu0 0.0
          %1457 = vmatprep.subr.mxu0 0.0
          %1458 = vmatpush1.msra.mxu0 0.0
          %1459 = vmatprep.subr.mxu0 0.0
          %1460 = vmatpush1.msra.mxu0 0.0
          %1461 = vmatprep.subr.mxu0 0.0
          %1462 = vmatpush1.msra.mxu0 0.0
          %1463 = vmatprep.subr.mxu0 0.0
          %1464 = vmatpush1.msra.mxu0 0.0
          %1465 = vmatprep.subr.mxu0 0.0
          %1466 = vmatpush1.msra.mxu0 0.0
          %1467 = vmatprep.subr.mxu0 0.0
          %1468 = vmatpush1.msra.mxu0 0.0
          %1469 = vmatprep.subr.mxu0 0.0
          %1470 = vmatpush1.msra.mxu0 0.0
          %1471 = vmatprep.subr.mxu0 0.0
          %1472 = vmatpush1.msra.mxu0 0.0
          %1473 = vmatprep.subr.mxu0 0.0
          %1474 = vmatpush1.msra.mxu0 0.0
          %1475 = vmatprep.subr.mxu0 0.0
          %1476 = vmatpush1.msra.mxu0 0.0
          %1477 = vmatprep.subr.mxu0 0.0
          %1478 = vmatpush1.msra.mxu0 0.0
          %1479 = vmatprep.subr.mxu0 0.0
          %1480 = vmatpush1.msra.mxu0 0.0
          %1481 = vmatprep.subr.mxu0 0.0
          %1482 = vmatpush1.msra.mxu0 0.0
          %1483 = vmatprep.subr.mxu0 0.0
          %1484 = vmatpush1.msra.mxu0 0.0
          %1485 = vmatprep.subr.mxu0 0.0
          %1486 = vmatpush1.msra.mxu0 0.0
          %1487 = vmatprep.subr.mxu0 0.0
          %1488 = vmatpush1.msra.mxu0 0.0
          %1489 = vmatprep.subr.mxu0 0.0
          %1490 = vmatpush1.msra.mxu0 0.0
          %1491 = vmatprep.subr.mxu0 0.0
          %1492 = vmatpush1.msra.mxu0 0.0
          %1493 = vmatprep.subr.mxu0 0.0
          %1494 = vmatpush1.msra.mxu0 0.0
          %1495 = vmatprep.subr.mxu0 0.0
          %1496 = vmatpush1.msra.mxu0 0.0
          %1497 = vmatprep.subr.mxu0 0.0
          %1498 = vmatpush1.msra.mxu0 0.0
          %1499 = vmatprep.subr.mxu0 0.0
          %1500 = vmatpush1.msra.mxu0 0.0
          %1501 = vmatprep.subr.mxu0 0.0
          %1502 = vmatpush1.msra.mxu0 0.0
          %1503 = vmatprep.subr.mxu0 0.0
          %1504 = vmatpush1.msra.mxu0 0.0
          %1505 = vmatprep.subr.mxu0 0.0
          %1506 = vmatpush1.msra.mxu0 0.0
          %1507 = vmatprep.subr.mxu0 0.0
          %1508 = vmatpush1.msra.mxu0 0.0
          %1509 = vmatprep.subr.mxu0 0.0
          %1510 = vmatpush1.msra.mxu0 0.0
          %1511 = vmatprep.mubr.f32.mxu0 0.0
          %1512 = vmatmul.mubr.f32.gmra.mrb[0].mxu0 %v1445
          %v1513 = vpop.f32.mrb[0].mxu0
          %v1514 = vadd.f32 %v1443, %v1513
          %v1515 = vpop.f32.mrb[0].mxu0
          %1516 = vdwg.mxu0
          %v1517 = vtanh.pop %v1514
          %vm1518 = vcmask 253952
          %1519 = vst.msk [vmem:[%s530] sm:$0x1] %vm1518, %v1517
        $region88: #{tpu_custom_call.1} parent=59 // pred_fallthru
          _
        %s1520 = sand.u32 %s293, 1
        %s1521 = scalar_lea.sflag [#allocation5], %s1520
        %s1522 = sand.u32 %s293, 1
        %s1523 = scalar_lea.vmem [#allocation11], %s1522
        // Predicated region
        $region89: #{tpu_custom_call.1} parent=59 // pred_check
          %p1524 = pneg %p303
        $region90: #{tpu_custom_call.1} parent=59 // pred_check_branch
          %1526 = sbr.rel (%p1524) target = $region92
        $region91: #{tpu_custom_call.1} parent=59 // pred_region
          %s1528 = ssub.s32 16, 16
          %1529 = vsyncadd %s1521, %s1528
          %s1530 = smul.addr %s32, 16
          %s1531 = scalar_lea.hbm %s10, %s1530
          %s1533 = sshll.u32 %s1523, 4
          %s1534 = int_to_ptr.vmem [resolvable:$true] %s1533
          %1536 = dma.vmem_to_hbm [thread:$0]  %s1534, 16, %s1531, %s1521
        $region92: #{tpu_custom_call.1} parent=59 // pred_fallthru
          _
      $region60: #{tpu_custom_call.1} parent=5 // pred_fallthru
        _
      %p1537 = scmp.le.s32.totalorder 2, %s23
      // Predicated region
      $region93: #{tpu_custom_call.1} parent=5 // pred_check
        %p1538 = pneg %p1537
      $region94: #{tpu_custom_call.1} parent=5 // pred_check_branch
        %1540 = sbr.rel (%p1538) target = $region96
      $region95: #{tpu_custom_call.1} parent=5 // pred_region
        %s1541 = ssub.s32 %s23, 2
        // Predicated region
        $region97: #{tpu_custom_call.1} parent=95 // pred_check
          %p1542 = pneg %p309
        $region98: #{tpu_custom_call.1} parent=95 // pred_check_branch
          %1544 = sbr.rel (%p1542) target = $region100
        $region99: #{tpu_custom_call.1} parent=95 // pred_region
          %s1545 = sand.u32 %s294, 1
          %s1546 = scalar_lea.sflag [#allocation5], %s1545
          %s1547 = sand.u32 %s294, 1
          %s1548 = scalar_lea.vmem [#allocation11], %s1547
          %1549 = dma.done %s1546, 16
        $region100: #{tpu_custom_call.1} parent=95 // pred_fallthru
          _
      $region96: #{tpu_custom_call.1} parent=5 // pred_fallthru
        _
    $region6: #{tpu_custom_call.1} parent=1 // loop_footer
      %s27 = sadd.s32 1, %s23
    $region7: #{tpu_custom_call.1} parent=1 // loop_footer_branch
      %22 = sbr.rel target = $region3
    $region8: #{tpu_custom_call.1} parent=1 // loop_exit
      _
    %1550 = vsyncpa [#allocation4], 1
    %s1551 = scalar_lea.sflag [#allocation4], 1
    %1552 = vsyncpa %s1551, 1
    %1553 = vsyncpa [#allocation7], 1
    %1554 = vsyncpa [#allocation5], 1
    %s1555 = scalar_lea.sflag [#allocation5], 1
    %1556 = vsyncpa %s1555, 1

</llo_original>
